<compile_context>
chip_gen: v7x
topology: tpu7x:2x2x1
jax: 0.10.0
libtpu: 0.0.40
codegen_flags: <defaults>
</compile_context>

<pallas_src>
import functools

import jax
import jax.numpy as jnp
import numpy as np
from jax.experimental import pallas as pl
from jax.experimental.pallas import tpu as pltpu

VOCAB = 32        # vocb_size
IN_SIZE = 16      # in_size (embedding dim E)
HIDDEN = 32       # hidden_size H
OUT_SIZE = 8      # out_size
ATTN_PROJ = 64    # SelfAttention hidden projection


# ----------------------------------------------------------------------------- kernel
def _tree_lstm_kernel(ids_ref, mask_ref, mtr_ref, mtreet_ref, t0_ref, w1_ref,
                      b1_ref, wa1_ref, ba1_ref, wa2_ref, wo_ref, bo_ref, out_ref):
    H = HIDDEN
    rows = ids_ref.shape[0]                       # TB * N * L rows (8-sublane aligned)

    ids = ids_ref[...]                            # (rows, 1) int32
    row_mask = mask_ref[...]                      # (rows, 1) f32 in {0, 1}
    mtr = mtr_ref[...]                            # (rows, NT) one-hot: row -> trace

    # --- fused embedding gather + LSTM-0 input projection + bias ------------------
    # one-hot (rows, VOCAB) @ T0 (VOCAB, 3H) on the MXU, T0 = emb @ W_ih0^T + b0,
    # dead forget-gate columns dropped (gate columns packed [i | g | o]).
    lane_ids = jax.lax.broadcasted_iota(jnp.int32, (rows, VOCAB), 1)
    onehot = (ids == lane_ids).astype(jnp.float32)
    g1 = jnp.dot(onehot, t0_ref[...], preferred_element_type=jnp.float32)

    # --- LSTM layers: single step, zero initial state (W_hh inert) -----------------
    c1 = jax.nn.sigmoid(g1[:, 0:H]) * jnp.tanh(g1[:, H:2 * H])
    h1 = jax.nn.sigmoid(g1[:, 2 * H:3 * H]) * jnp.tanh(c1)

    g2 = jnp.dot(h1, w1_ref[...], preferred_element_type=jnp.float32) + b1_ref[...]
    c2 = jax.nn.sigmoid(g2[:, 0:H]) * jnp.tanh(g2[:, H:2 * H])
    h2 = jax.nn.sigmoid(g2[:, 2 * H:3 * H]) * jnp.tanh(c2)            # (rows, H)

    # --- SelfAttention energy: Linear -> ReLU, then VPU lane-reduce against the
    # (1, 64) wa2 row (no width-1 MXU matmul). ba2 omitted: softmax-invariant. ------
    proj = jnp.maximum(
        jnp.dot(h2, wa1_ref[...], preferred_element_type=jnp.float32) + ba1_ref[...],
        0.0)                                                          # (rows, 64)
    energy = jnp.sum(proj * wa2_ref[...], axis=-1, keepdims=True)     # (rows, 1)

    # --- per-trace masked softmax (membership-based; per-trace max shift) ----------
    big = jnp.float32(1e30)
    e = energy + (row_mask - 1.0) * big                # masked rows -> ~-1e30 (finite)
    spread = e * mtr + (mtr - 1.0) * big               # (rows, NT); off-trace -> -1e30
    m_t = jnp.max(spread, axis=0, keepdims=True)       # (1, NT) per-trace max
    m_row = jnp.sum(mtr * m_t, axis=-1, keepdims=True) # (rows, 1) scatter max to rows
    p = jnp.exp(e - m_row) * row_mask                  # padded rows / traces -> exactly 0
    d_t = jnp.sum(mtr * p, axis=0, keepdims=True)      # (1, NT) per-trace denominator
    d_row = jnp.sum(mtr * d_t, axis=-1, keepdims=True) # (rows, 1)
    w = p * pl.reciprocal(jnp.maximum(d_row, 1e-6), approx=True)   # empty trace -> w=0

    # --- attention pooling + per-tree trace sum collapsed to ONE membership matmul -
    pooled = jnp.dot(mtreet_ref[...], h2 * w,
                     preferred_element_type=jnp.float32)              # (TB, H)
    out_ref[...] = (jnp.dot(pooled, wo_ref[...], preferred_element_type=jnp.float32)
                    + bo_ref[...])                                    # (TB, OUT) store


# ----------------------------------------------------------------------------- wrapper
@functools.partial(jax.jit, static_argnames=("tb",))
def forward_pallas(ids, mask, params, *, tb):
    """ids: (B, N, L) int32 padded token ids; mask: (B, N, L) float32 in {0, 1}."""
    B, N, L = ids.shape
    H = HIDDEN
    assert (tb * N * L) % 8 == 0, "rows per block must be 8-sublane aligned"

    # pad the tree batch up to a multiple of tb with fully-masked trees (their
    # attention weights come out exactly 0 -> out = bo; sliced off at the end).
    num_blocks = -(-B // tb)
    Bp = num_blocks * tb
    ids_p = jnp.pad(ids, ((0, Bp - B), (0, 0), (0, 0)))
    mask_p = jnp.pad(mask, ((0, Bp - B), (0, 0), (0, 0)))

    rows_block = tb * N * L                 # rows processed per grid step
    NT = tb * N                             # traces per grid step

    # one-time parameter folding (weights are static in real use):
    #   T0 = emb @ W_ih0^T + b0 turns the embedding gather + layer-0 projection +
    #   bias into one matmul; dead forget gate dropped, gates packed [i | g | o].
    gate_cols = np.concatenate(
        [np.arange(0, H), np.arange(2 * H, 3 * H), np.arange(3 * H, 4 * H)])
    t0 = (params["emb"] @ params["w_ih0"].T + params["b0"])[:, gate_cols]  # (V, 3H)
    w1 = params["w_ih1"].T[:, gate_cols]                                    # (H, 3H)
    b1 = params["b1"][:, gate_cols]                                         # (1, 3H)

    # static membership one-hots (identical for every block of tb trees):
    r = np.arange(rows_block)
    m_trace = jnp.asarray((r[:, None] // L == np.arange(NT)[None, :])
                          .astype(np.float32))                       # (rows, NT)
    m_treet = jnp.asarray((np.arange(tb)[:, None] == (r[None, :] // (N * L)))
                          .astype(np.float32))                       # (TB, rows)

    def const_spec(shape):
        return pl.BlockSpec(shape, lambda b: (0,) * len(shape))

    out = pl.pallas_call(
        _tree_lstm_kernel,
        out_shape=jax.ShapeDtypeStruct((Bp, OUT_SIZE), jnp.float32),
        grid=(num_blocks,),
        in_specs=[
            pl.BlockSpec((rows_block, 1), lambda b: (b, 0)),          # ids (tb trees)
            pl.BlockSpec((rows_block, 1), lambda b: (b, 0)),          # mask (tb trees)
            const_spec((rows_block, NT)),                             # row -> trace one-hot
            const_spec((tb, rows_block)),                             # tree -> rows one-hot
            const_spec((VOCAB, 3 * HIDDEN)),                          # T0 (repacked)
            const_spec((HIDDEN, 3 * HIDDEN)),                         # W_ih1^T (repacked)
            const_spec((1, 3 * HIDDEN)),                              # b1 (repacked)
            const_spec((HIDDEN, ATTN_PROJ)),                          # wa1^T
            const_spec((1, ATTN_PROJ)),                               # ba1
            const_spec((1, ATTN_PROJ)),                               # wa2 row
            const_spec((HIDDEN, OUT_SIZE)),                           # wo^T
            const_spec((1, OUT_SIZE)),                                # bo
        ],
        out_specs=pl.BlockSpec((tb, OUT_SIZE), lambda b: (b, 0)),     # dense (TB, OUT)
        compiler_params=pltpu.CompilerParams(
            dimension_semantics=("parallel",)),   # v7x: blocks shard across both TCs
    )(
        ids_p.reshape(Bp * N * L, 1).astype(jnp.int32),
        mask_p.reshape(Bp * N * L, 1).astype(jnp.float32),
        m_trace, m_treet, t0, w1, b1,
        params["wa1"].T, params["ba1"], params["wa2"],
        params["wo"].T, params["bo"],
    )
    return out[:B]


# ----------------------------------------------------------------------------- pure-JAX reference
def forward_ref(ids, mask, params):
    B, N, L = ids.shape
    H = HIDDEN
    x = jnp.take(params["emb"], ids.reshape(B * N * L), axis=0)       # (B*N*L, E)
    g1 = x @ params["w_ih0"].T + params["b0"]
    c1 = jax.nn.sigmoid(g1[:, :H]) * jnp.tanh(g1[:, 2 * H:3 * H])
    h1 = jax.nn.sigmoid(g1[:, 3 * H:]) * jnp.tanh(c1)
    g2 = h1 @ params["w_ih1"].T + params["b1"]
    c2 = jax.nn.sigmoid(g2[:, :H]) * jnp.tanh(g2[:, 2 * H:3 * H])
    h2 = jax.nn.sigmoid(g2[:, 3 * H:]) * jnp.tanh(c2)                 # (B*N*L, H)
    proj = jnp.maximum(h2 @ params["wa1"].T + params["ba1"], 0.0)
    e = (proj @ params["wa2"].T + params["ba2"]).reshape(B, N, L)
    e = jnp.where(mask > 0, e, -1e30)
    w = jax.nn.softmax(e, axis=2)
    w = w * jnp.max(mask, axis=2, keepdims=True)      # padded traces contribute nothing
    attn = jnp.sum(h2.reshape(B, N, L, H) * w[..., None], axis=2)     # (B, N, H)
    pooled = jnp.sum(attn, axis=1)                                    # (B, H)
    return pooled @ params["wo"].T + params["bo"]                     # (B, OUT)


# ----------------------------------------------------------------------------- params / tree glue
def init_params(key):
    ks = jax.random.split(key, 11)

    def u(k, shape, scale=0.1):
        return jax.random.uniform(k, shape, jnp.float32, -1.0, 1.0) * scale

    H, E = HIDDEN, IN_SIZE
    return dict(
        emb=u(ks[0], (VOCAB, E), 1.0),
        w_ih0=u(ks[1], (4 * H, E)),
        b0=u(ks[2], (1, 4 * H)),      # folded b_ih_l0 + b_hh_l0 (h_prev = 0 -> W_hh inert)
        w_ih1=u(ks[3], (4 * H, H)),
        b1=u(ks[4], (1, 4 * H)),      # folded b_ih_l1 + b_hh_l1
        wa1=u(ks[5], (ATTN_PROJ, H)),
        ba1=u(ks[6], (1, ATTN_PROJ)),
        wa2=u(ks[7], (1, ATTN_PROJ)),
        ba2=u(ks[8], (1, 1)),
        wo=u(ks[9], (OUT_SIZE, H)),
        bo=u(ks[10], (1, OUT_SIZE)),
    )


class _Node:
    def __init__(self, op, children=()):
        self.op = op
        self.children = list(children)
        self.num_children = len(self.children)


def build_tree(variant=0):
    shift = variant % (VOCAB - 8)
    n = lambda op, ch=(): _Node(op + shift, ch)
    if variant % 2 == 0:
        return n(1, [n(2, [n(3), n(4)]), n(5, [n(6)]), n(7)])
    return n(1, [n(2, [n(3)]), n(5, [n(6), n(7)])])


def split_traces(root):
    # TODO(synk): tree recursion + deepcopy stays host-side Python (no Pallas equivalent)
    traces = []

    def rec(node, recorder):
        recorder = recorder + [node.op]
        if node.num_children == 0:
            traces.append(recorder)
        for child in node.children:
            rec(child, list(recorder))

    rec(root, [])
    return traces


# ----------------------------------------------------------------------------- main
if __name__ == "__main__":
    params = init_params(jax.random.PRNGKey(0))

    # batch many trees; TREES_PER_BLOCK trees are processed per grid step so each
    # step handles rows_block = TB*N*L rows (amortizes per-step overhead, fills MXU).
    B = 128
    TREES_PER_BLOCK = 32      # -> rows_block = 32*4*3 = 384, grid = (4,)

    per_tree_traces = [split_traces(build_tree(b)) for b in range(B)]
    N = max(len(ts) for ts in per_tree_traces)                 # traces per tree (padded)
    L = max(len(t) for ts in per_tree_traces for t in ts)      # trace length (padded)

    ids_np = np.zeros((B, N, L), np.int32)
    mask_np = np.zeros((B, N, L), np.float32)
    for b, ts in enumerate(per_tree_traces):
        for i, t in enumerate(ts):
            ids_np[b, i, :len(t)] = t
            mask_np[b, i, :len(t)] = 1.0
    ids = jnp.asarray(ids_np)
    mask = jnp.asarray(mask_np)

    out = jax.block_until_ready(forward_pallas(ids, mask, params, tb=TREES_PER_BLOCK))
    ref = forward_ref(ids, mask, params)

    assert out.shape == (B, OUT_SIZE)
    assert np.allclose(np.asarray(out), np.asarray(ref), rtol=2e-3, atol=2e-4), (out, ref)
    print("KERNEL_OK")
</pallas_src>

<mosaic_0001>
module attributes {stable_mosaic.version = 11 : i64} {
  func.func @_tree_lstm_kernel(%arg0: i32, %arg1: memref<384x1xi32, #tpu.memory_space<vmem>>, %arg2: memref<384x1xf32, #tpu.memory_space<vmem>>, %arg3: memref<384x128xf32, #tpu.memory_space<vmem>>, %arg4: memref<32x384xf32, #tpu.memory_space<vmem>>, %arg5: memref<32x96xf32, #tpu.memory_space<vmem>>, %arg6: memref<32x96xf32, #tpu.memory_space<vmem>>, %arg7: memref<1x96xf32, #tpu.memory_space<vmem>>, %arg8: memref<32x64xf32, #tpu.memory_space<vmem>>, %arg9: memref<1x64xf32, #tpu.memory_space<vmem>>, %arg10: memref<1x64xf32, #tpu.memory_space<vmem>>, %arg11: memref<32x8xf32, #tpu.memory_space<vmem>>, %arg12: memref<1x8xf32, #tpu.memory_space<vmem>>, %arg13: memref<32x8xf32, #tpu.memory_space<vmem>>) attributes {dimension_semantics = [#tpu.dimension_semantics<parallel>], iteration_bounds = array<i64: 4>, scalar_prefetch = 0 : i64, scratch_operands = 0 : i64, tpu.core_type = #tpu.core_type<tc>, window_params = [{transform_indices = @transform_0, window_bounds = array<i64: 384, 1>}, {transform_indices = @transform_1, window_bounds = array<i64: 384, 1>}, {pipeline_mode = #tpu.pipeline_mode<synchronous>, transform_indices = @transform_2, window_bounds = array<i64: 384, 128>}, {pipeline_mode = #tpu.pipeline_mode<synchronous>, transform_indices = @transform_3, window_bounds = array<i64: 32, 384>}, {pipeline_mode = #tpu.pipeline_mode<synchronous>, transform_indices = @transform_4, window_bounds = array<i64: 32, 96>}, {pipeline_mode = #tpu.pipeline_mode<synchronous>, transform_indices = @transform_5, window_bounds = array<i64: 32, 96>}, {pipeline_mode = #tpu.pipeline_mode<synchronous>, transform_indices = @transform_6, window_bounds = array<i64: 1, 96>}, {pipeline_mode = #tpu.pipeline_mode<synchronous>, transform_indices = @transform_7, window_bounds = array<i64: 32, 64>}, {pipeline_mode = #tpu.pipeline_mode<synchronous>, transform_indices = @transform_8, window_bounds = array<i64: 1, 64>}, {pipeline_mode = #tpu.pipeline_mode<synchronous>, transform_indices = @transform_9, window_bounds = array<i64: 1, 64>}, {pipeline_mode = #tpu.pipeline_mode<synchronous>, transform_indices = @transform_10, window_bounds = array<i64: 32, 8>}, {pipeline_mode = #tpu.pipeline_mode<synchronous>, transform_indices = @transform_11, window_bounds = array<i64: 1, 8>}, {transform_indices = @transform_12, window_bounds = array<i64: 32, 8>}]} {
    %c0 = arith.constant 0 : index
    %c0_0 = arith.constant 0 : index
    %0 = vector.load %arg1[%c0, %c0_0] : memref<384x1xi32, #tpu.memory_space<vmem>>, vector<384x1xi32>
    %c0_1 = arith.constant 0 : index
    %c0_2 = arith.constant 0 : index
    %1 = vector.load %arg2[%c0_1, %c0_2] : memref<384x1xf32, #tpu.memory_space<vmem>>, vector<384x1xf32>
    %c0_3 = arith.constant 0 : index
    %c0_4 = arith.constant 0 : index
    %2 = vector.load %arg3[%c0_3, %c0_4] : memref<384x128xf32, #tpu.memory_space<vmem>>, vector<384x128xf32>
    %3 = tpu.iota {dimensions = array<i32: 1>} : vector<384x32xi32>
    %4 = vector.broadcast %0 : vector<384x1xi32> to vector<384x32xi32>
    %5 = arith.cmpi eq, %4, %3 : vector<384x32xi32>
    %6 = arith.extui %5 : vector<384x32xi1> to vector<384x32xi32>
    %7 = arith.sitofp %6 : vector<384x32xi32> to vector<384x32xf32>
    %c0_5 = arith.constant 0 : index
    %c0_6 = arith.constant 0 : index
    %8 = vector.load %arg5[%c0_5, %c0_6] : memref<32x96xf32, #tpu.memory_space<vmem>>, vector<32x96xf32>
    %cst = arith.constant dense<0.000000e+00> : vector<384x96xf32>
    %9 = tpu.matmul %7, %8, %cst {dimension_numbers = #tpu.dot_dimension_numbers<[1], [0], [0], [1], [0, 0, 1, 1], [], []>} : vector<384x32xf32>, vector<32x96xf32>, vector<384x96xf32> -> vector<384x96xf32>
    %10 = vector.extract_strided_slice %9 {offsets = [0, 0], sizes = [384, 32], strides = [1, 1]} : vector<384x96xf32> to vector<384x32xf32>
    %11 = arith.negf %10 : vector<384x32xf32>
    %12 = math.exp %11 : vector<384x32xf32>
    %cst_7 = arith.constant 1.000000e+00 : f32
    %13 = vector.broadcast %cst_7 : f32 to vector<384x32xf32>
    %14 = arith.addf %13, %12 : vector<384x32xf32>
    %15 = arith.divf %13, %14 : vector<384x32xf32>
    %16 = vector.extract_strided_slice %9 {offsets = [0, 32], sizes = [384, 32], strides = [1, 1]} : vector<384x96xf32> to vector<384x32xf32>
    %17 = math.tanh %16 : vector<384x32xf32>
    %18 = arith.mulf %15, %17 : vector<384x32xf32>
    %19 = vector.extract_strided_slice %9 {offsets = [0, 64], sizes = [384, 32], strides = [1, 1]} : vector<384x96xf32> to vector<384x32xf32>
    %20 = arith.negf %19 : vector<384x32xf32>
    %21 = math.exp %20 : vector<384x32xf32>
    %cst_8 = arith.constant 1.000000e+00 : f32
    %22 = vector.broadcast %cst_8 : f32 to vector<384x32xf32>
    %23 = arith.addf %22, %21 : vector<384x32xf32>
    %24 = arith.divf %22, %23 : vector<384x32xf32>
    %25 = math.tanh %18 : vector<384x32xf32>
    %26 = arith.mulf %24, %25 : vector<384x32xf32>
    %c0_9 = arith.constant 0 : index
    %c0_10 = arith.constant 0 : index
    %27 = vector.load %arg6[%c0_9, %c0_10] : memref<32x96xf32, #tpu.memory_space<vmem>>, vector<32x96xf32>
    %cst_11 = arith.constant dense<0.000000e+00> : vector<384x96xf32>
    %28 = tpu.matmul %26, %27, %cst_11 {dimension_numbers = #tpu.dot_dimension_numbers<[1], [0], [0], [1], [0, 0, 1, 1], [], []>} : vector<384x32xf32>, vector<32x96xf32>, vector<384x96xf32> -> vector<384x96xf32>
    %c0_12 = arith.constant 0 : index
    %c0_13 = arith.constant 0 : index
    %29 = vector.load %arg7[%c0_12, %c0_13] : memref<1x96xf32, #tpu.memory_space<vmem>>, vector<1x96xf32>
    %30 = vector.broadcast %29 : vector<1x96xf32> to vector<384x96xf32>
    %31 = arith.addf %28, %30 : vector<384x96xf32>
    %32 = vector.extract_strided_slice %31 {offsets = [0, 0], sizes = [384, 32], strides = [1, 1]} : vector<384x96xf32> to vector<384x32xf32>
    %33 = arith.negf %32 : vector<384x32xf32>
    %34 = math.exp %33 : vector<384x32xf32>
    %cst_14 = arith.constant 1.000000e+00 : f32
    %35 = vector.broadcast %cst_14 : f32 to vector<384x32xf32>
    %36 = arith.addf %35, %34 : vector<384x32xf32>
    %37 = arith.divf %35, %36 : vector<384x32xf32>
    %38 = vector.extract_strided_slice %31 {offsets = [0, 32], sizes = [384, 32], strides = [1, 1]} : vector<384x96xf32> to vector<384x32xf32>
    %39 = math.tanh %38 : vector<384x32xf32>
    %40 = arith.mulf %37, %39 : vector<384x32xf32>
    %41 = vector.extract_strided_slice %31 {offsets = [0, 64], sizes = [384, 32], strides = [1, 1]} : vector<384x96xf32> to vector<384x32xf32>
    %42 = arith.negf %41 : vector<384x32xf32>
    %43 = math.exp %42 : vector<384x32xf32>
    %cst_15 = arith.constant 1.000000e+00 : f32
    %44 = vector.broadcast %cst_15 : f32 to vector<384x32xf32>
    %45 = arith.addf %44, %43 : vector<384x32xf32>
    %46 = arith.divf %44, %45 : vector<384x32xf32>
    %47 = math.tanh %40 : vector<384x32xf32>
    %48 = arith.mulf %46, %47 : vector<384x32xf32>
    %c0_16 = arith.constant 0 : index
    %c0_17 = arith.constant 0 : index
    %49 = vector.load %arg8[%c0_16, %c0_17] : memref<32x64xf32, #tpu.memory_space<vmem>>, vector<32x64xf32>
    %cst_18 = arith.constant dense<0.000000e+00> : vector<384x64xf32>
    %50 = tpu.matmul %48, %49, %cst_18 {dimension_numbers = #tpu.dot_dimension_numbers<[1], [0], [0], [1], [0, 0, 1, 1], [], []>} : vector<384x32xf32>, vector<32x64xf32>, vector<384x64xf32> -> vector<384x64xf32>
    %c0_19 = arith.constant 0 : index
    %c0_20 = arith.constant 0 : index
    %51 = vector.load %arg9[%c0_19, %c0_20] : memref<1x64xf32, #tpu.memory_space<vmem>>, vector<1x64xf32>
    %52 = vector.broadcast %51 : vector<1x64xf32> to vector<384x64xf32>
    %53 = arith.addf %50, %52 : vector<384x64xf32>
    %cst_21 = arith.constant 0.000000e+00 : f32
    %54 = vector.broadcast %cst_21 : f32 to vector<384x64xf32>
    %55 = arith.maximumf %53, %54 : vector<384x64xf32>
    %c0_22 = arith.constant 0 : index
    %c0_23 = arith.constant 0 : index
    %56 = vector.load %arg10[%c0_22, %c0_23] : memref<1x64xf32, #tpu.memory_space<vmem>>, vector<1x64xf32>
    %57 = vector.broadcast %56 : vector<1x64xf32> to vector<384x64xf32>
    %58 = arith.mulf %55, %57 : vector<384x64xf32>
    %cst_24 = arith.constant dense<0.000000e+00> : vector<384xf32>
    %59 = vector.multi_reduction <add>, %58, %cst_24 [1] : vector<384x64xf32> to vector<384xf32>
    %60 = vector.shape_cast %59 : vector<384xf32> to vector<384x1xf32>
    %cst_25 = arith.constant 1.000000e+00 : f32
    %61 = vector.broadcast %cst_25 : f32 to vector<384x1xf32>
    %62 = arith.subf %1, %61 : vector<384x1xf32>
    %cst_26 = arith.constant 1.000000e+30 : f32
    %63 = vector.broadcast %cst_26 : f32 to vector<384x1xf32>
    %64 = arith.mulf %62, %63 : vector<384x1xf32>
    %65 = arith.addf %60, %64 : vector<384x1xf32>
    %66 = vector.broadcast %65 : vector<384x1xf32> to vector<384x128xf32>
    %67 = arith.mulf %66, %2 : vector<384x128xf32>
    %cst_27 = arith.constant 1.000000e+00 : f32
    %68 = vector.broadcast %cst_27 : f32 to vector<384x128xf32>
    %69 = arith.subf %2, %68 : vector<384x128xf32>
    %cst_28 = arith.constant 1.000000e+30 : f32
    %70 = vector.broadcast %cst_28 : f32 to vector<384x128xf32>
    %71 = arith.mulf %69, %70 : vector<384x128xf32>
    %72 = arith.addf %67, %71 : vector<384x128xf32>
    %cst_29 = arith.constant dense<0xFF800000> : vector<128xf32>
    %73 = vector.multi_reduction <maximumf>, %72, %cst_29 [0] : vector<384x128xf32> to vector<128xf32>
    %74 = vector.shape_cast %73 : vector<128xf32> to vector<1x128xf32>
    %75 = vector.broadcast %74 : vector<1x128xf32> to vector<384x128xf32>
    %76 = arith.mulf %2, %75 : vector<384x128xf32>
    %cst_30 = arith.constant dense<0.000000e+00> : vector<384xf32>
    %77 = vector.multi_reduction <add>, %76, %cst_30 [1] : vector<384x128xf32> to vector<384xf32>
    %78 = vector.shape_cast %77 : vector<384xf32> to vector<384x1xf32>
    %79 = arith.subf %65, %78 : vector<384x1xf32>
    %80 = math.exp %79 : vector<384x1xf32>
    %81 = arith.mulf %80, %1 : vector<384x1xf32>
    %82 = vector.broadcast %81 : vector<384x1xf32> to vector<384x128xf32>
    %83 = arith.mulf %2, %82 : vector<384x128xf32>
    %cst_31 = arith.constant dense<0.000000e+00> : vector<128xf32>
    %84 = vector.multi_reduction <add>, %83, %cst_31 [0] : vector<384x128xf32> to vector<128xf32>
    %85 = vector.shape_cast %84 : vector<128xf32> to vector<1x128xf32>
    %86 = vector.broadcast %85 : vector<1x128xf32> to vector<384x128xf32>
    %87 = arith.mulf %2, %86 : vector<384x128xf32>
    %cst_32 = arith.constant dense<0.000000e+00> : vector<384xf32>
    %88 = vector.multi_reduction <add>, %87, %cst_32 [1] : vector<384x128xf32> to vector<384xf32>
    %89 = vector.shape_cast %88 : vector<384xf32> to vector<384x1xf32>
    %cst_33 = arith.constant 9.99999997E-7 : f32
    %90 = vector.broadcast %cst_33 : f32 to vector<384x1xf32>
    %91 = arith.maximumf %89, %90 : vector<384x1xf32>
    %92 = tpu.reciprocal %91 {approx = true} : vector<384x1xf32> -> vector<384x1xf32>
    %93 = arith.mulf %81, %92 : vector<384x1xf32>
    %c0_34 = arith.constant 0 : index
    %c0_35 = arith.constant 0 : index
    %94 = vector.load %arg4[%c0_34, %c0_35] : memref<32x384xf32, #tpu.memory_space<vmem>>, vector<32x384xf32>
    %95 = vector.broadcast %93 : vector<384x1xf32> to vector<384x32xf32>
    %96 = arith.mulf %48, %95 : vector<384x32xf32>
    %cst_36 = arith.constant dense<0.000000e+00> : vector<32x32xf32>
    %97 = tpu.matmul %94, %96, %cst_36 {dimension_numbers = #tpu.dot_dimension_numbers<[1], [0], [0], [1], [0, 0, 1, 1], [], []>} : vector<32x384xf32>, vector<384x32xf32>, vector<32x32xf32> -> vector<32x32xf32>
    %c0_37 = arith.constant 0 : index
    %c0_38 = arith.constant 0 : index
    %98 = vector.load %arg11[%c0_37, %c0_38] : memref<32x8xf32, #tpu.memory_space<vmem>>, vector<32x8xf32>
    %cst_39 = arith.constant dense<0.000000e+00> : vector<32x8xf32>
    %99 = tpu.matmul %97, %98, %cst_39 {dimension_numbers = #tpu.dot_dimension_numbers<[1], [0], [0], [1], [0, 0, 1, 1], [], []>} : vector<32x32xf32>, vector<32x8xf32>, vector<32x8xf32> -> vector<32x8xf32>
    %c0_40 = arith.constant 0 : index
    %c0_41 = arith.constant 0 : index
    %100 = vector.load %arg12[%c0_40, %c0_41] : memref<1x8xf32, #tpu.memory_space<vmem>>, vector<1x8xf32>
    %101 = vector.broadcast %100 : vector<1x8xf32> to vector<32x8xf32>
    %102 = arith.addf %99, %101 : vector<32x8xf32>
    %c0_42 = arith.constant 0 : index
    %c0_43 = arith.constant 0 : index
    %103 = vector.load %arg13[%c0_42, %c0_43] : memref<32x8xf32, #tpu.memory_space<vmem>>, vector<32x8xf32>
    tpu.vector_store %arg13[%c0_42, %c0_43], %102 {strides = array<i32>} : memref<32x8xf32, #tpu.memory_space<vmem>>, vector<32x8xf32>,
    return
  }
  func.func @transform_0(%arg0: i32) -> (i32, i32) {
    %c0_i32 = arith.constant 0 : i32
    %c0_i32_0 = arith.constant 0 : i32
    return %arg0, %c0_i32 : i32, i32
  }
  func.func @transform_1(%arg0: i32) -> (i32, i32) {
    %c0_i32 = arith.constant 0 : i32
    %c0_i32_0 = arith.constant 0 : i32
    return %arg0, %c0_i32 : i32, i32
  }
  func.func @transform_2(%arg0: i32) -> (i32, i32) {
    %c0_i32 = arith.constant 0 : i32
    %c0_i32_0 = arith.constant 0 : i32
    %c0_i32_1 = arith.constant 0 : i32
    return %c0_i32, %c0_i32_0 : i32, i32
  }
  func.func @transform_3(%arg0: i32) -> (i32, i32) {
    %c0_i32 = arith.constant 0 : i32
    %c0_i32_0 = arith.constant 0 : i32
    %c0_i32_1 = arith.constant 0 : i32
    return %c0_i32, %c0_i32_0 : i32, i32
  }
  func.func @transform_4(%arg0: i32) -> (i32, i32) {
    %c0_i32 = arith.constant 0 : i32
    %c0_i32_0 = arith.constant 0 : i32
    %c0_i32_1 = arith.constant 0 : i32
    return %c0_i32, %c0_i32_0 : i32, i32
  }
  func.func @transform_5(%arg0: i32) -> (i32, i32) {
    %c0_i32 = arith.constant 0 : i32
    %c0_i32_0 = arith.constant 0 : i32
    %c0_i32_1 = arith.constant 0 : i32
    return %c0_i32, %c0_i32_0 : i32, i32
  }
  func.func @transform_6(%arg0: i32) -> (i32, i32) {
    %c0_i32 = arith.constant 0 : i32
    %c0_i32_0 = arith.constant 0 : i32
    %c0_i32_1 = arith.constant 0 : i32
    return %c0_i32, %c0_i32_0 : i32, i32
  }
  func.func @transform_7(%arg0: i32) -> (i32, i32) {
    %c0_i32 = arith.constant 0 : i32
    %c0_i32_0 = arith.constant 0 : i32
    %c0_i32_1 = arith.constant 0 : i32
    return %c0_i32, %c0_i32_0 : i32, i32
  }
  func.func @transform_8(%arg0: i32) -> (i32, i32) {
    %c0_i32 = arith.constant 0 : i32
    %c0_i32_0 = arith.constant 0 : i32
    %c0_i32_1 = arith.constant 0 : i32
    return %c0_i32, %c0_i32_0 : i32, i32
  }
  func.func @transform_9(%arg0: i32) -> (i32, i32) {
    %c0_i32 = arith.constant 0 : i32
    %c0_i32_0 = arith.constant 0 : i32
    %c0_i32_1 = arith.constant 0 : i32
    return %c0_i32, %c0_i32_0 : i32, i32
  }
  func.func @transform_10(%arg0: i32) -> (i32, i32) {
    %c0_i32 = arith.constant 0 : i32
    %c0_i32_0 = arith.constant 0 : i32
    %c0_i32_1 = arith.constant 0 : i32
    return %c0_i32, %c0_i32_0 : i32, i32
  }
  func.func @transform_11(%arg0: i32) -> (i32, i32) {
    %c0_i32 = arith.constant 0 : i32
    %c0_i32_0 = arith.constant 0 : i32
    %c0_i32_1 = arith.constant 0 : i32
    return %c0_i32, %c0_i32_0 : i32, i32
  }
  func.func @transform_12(%arg0: i32) -> (i32, i32) {
    %c0_i32 = arith.constant 0 : i32
    %c0_i32_0 = arith.constant 0 : i32
    return %arg0, %c0_i32 : i32, i32
  }
}

</mosaic_0001>

<llo_original>
// kernel: forward_pallas.1
$region0: #{forward_pallas.1}
  #allocation0 [shape = 'u32[]', space=smem, size = 0x4, offset = 0x4, fixed_abs, tag = 'smem constant byte address 0x4 - core index']
  #allocation1 [shape = 'u32[144,128]{1,0:T(1,128)}', space=vmem, size = 0x12000, scoped, tag = 'internal scratch']
  %s0 = inlined_call_operand.vmem [shape: s32[1536,1], index: 0, kind: input, shape index: {}]
  %s1 = inlined_call_operand.vmem [shape: f32[1536,1], index: 1, kind: input, shape index: {}]
  %s2 = inlined_call_operand.vmem [shape: f32[384,128], index: 2, kind: input, shape index: {}]
  %s3 = inlined_call_operand.vmem [shape: f32[32,384], index: 3, kind: input, shape index: {}]
  %s4 = inlined_call_operand.vmem [shape: f32[32,96], index: 4, kind: input, shape index: {}]
  %s5 = inlined_call_operand.vmem [shape: f32[32,96], index: 5, kind: input, shape index: {}]
  %s6 = inlined_call_operand.vmem [shape: f32[1,96], index: 6, kind: input, shape index: {}]
  %s7 = inlined_call_operand.vmem [shape: f32[32,64], index: 7, kind: input, shape index: {}]
  %s8 = inlined_call_operand.vmem [shape: f32[1,64], index: 8, kind: input, shape index: {}]
  %s9 = inlined_call_operand.vmem [shape: f32[1,64], index: 9, kind: input, shape index: {}]
  %s10 = inlined_call_operand.vmem [shape: f32[32,8], index: 10, kind: input, shape index: {}]
  %s11 = inlined_call_operand.vmem [shape: f32[1,8], index: 11, kind: input, shape index: {}]
  %s12 = inlined_call_operand.vmem [shape: f32[128,8], index: 12, kind: output, shape index: {}]
  %s13 = sld [smem:[#allocation0]]
  $region81: #{forward_pallas.1} parent=0
    _
  %s15 = ssub.s32 1, %s13
  %s16 = scalar_select 0, %s15, %s13
  loop: start=0, step=1, limit=6
  $region2: #{forward_pallas.1} parent=0 // loop_pre_header
    _
  $region3: #{forward_pallas.1} parent=0 // loop_header
    %s18 = sphi 0, %s22
    %p19 = scmp.ge.s32.totalorder %s18, 6
    %s28 = sphi 0, %s30
    %s31 = sphi 0, %s28
    %s32 = sphi 0, %s31
    %s48 = sphi 0, %s32
    %s54 = sphi 0, %s56
    %s57 = sphi 0, %s54
    %s58 = sphi 0, %s57
    %s74 = sphi 0, %s58
    %s78 = sphi 0, %s78
    %s80 = sphi 0, %s78
    %s81 = sphi 0, %s80
    %s95 = sphi 0, %s81
    %s99 = sphi 0, %s99
    %s101 = sphi 0, %s99
    %s102 = sphi 0, %s101
    %s116 = sphi 0, %s102
    %s120 = sphi 0, %s120
    %s122 = sphi 0, %s120
    %s123 = sphi 0, %s122
    %s137 = sphi 0, %s123
    %s141 = sphi 0, %s141
    %s143 = sphi 0, %s141
    %s144 = sphi 0, %s143
    %s158 = sphi 0, %s144
    %s162 = sphi 0, %s162
    %s164 = sphi 0, %s162
    %s165 = sphi 0, %s164
    %s179 = sphi 0, %s165
    %s183 = sphi 0, %s183
    %s185 = sphi 0, %s183
    %s186 = sphi 0, %s185
    %s200 = sphi 0, %s186
    %s204 = sphi 0, %s204
    %s206 = sphi 0, %s204
    %s207 = sphi 0, %s206
    %s221 = sphi 0, %s207
    %s225 = sphi 0, %s225
    %s227 = sphi 0, %s225
    %s228 = sphi 0, %s227
    %s242 = sphi 0, %s228
    %s246 = sphi 0, %s246
    %s248 = sphi 0, %s246
    %s249 = sphi 0, %s248
    %s263 = sphi 0, %s249
    %s267 = sphi 0, %s267
    %s269 = sphi 0, %s267
    %s270 = sphi 0, %s269
    %s284 = sphi 0, %s270
    %s290 = sphi 0, %s292
    %s293 = sphi 0, %s290
    %s294 = sphi 0, %s293
    %s310 = sphi 0, %s294
  $region4: #{forward_pallas.1} parent=0 // loop_header_branch
    %21 = sbr.rel (%p19) target = $region8
  $region5: #{forward_pallas.1} parent=0 // loop_body
    %s23 = ssub.s32 %s18, 1
    %s24 = ssub.s32 %s18, 2
    %s25 = sadd.s32 %s18, 1
    %s26 = ssub.s32 %s18, %s25
    %p27 = scmp.eq.s32.totalorder %s26, 0
    %s29 = sadd.s32 %s28, 1
    %s30 = scalar_select %p27, %s28, %s29
    %p33 = pneg %p27
    %p34 = scmp.eq.s32.totalorder %s18, 3
    %p35 = por %p33, %p34
    %p36 = scmp.ne.s32.totalorder %s28, %s31
    %p37 = scmp.eq.s32.totalorder %s18, 0
    %p38 = por %p36, %p37
    %p39 = scmp.ne.s32.totalorder %s28, %s31
    %p40 = scmp.eq.s32.totalorder %s23, 3
    %p41 = por %p39, %p40
    %p42 = scmp.ne.s32.totalorder %s31, %s32
    %p43 = scmp.eq.s32.totalorder %s23, 0
    %p44 = por %p42, %p43
    %p45 = scmp.ne.s32.totalorder %s31, %s32
    %p46 = scmp.eq.s32.totalorder %s24, 3
    %p47 = por %p45, %p46
    %p49 = scmp.ne.s32.totalorder %s32, %s48
    %p50 = scmp.eq.s32.totalorder %s24, 0
    %p51 = por %p49, %p50
    %s52 = ssub.s32 %s18, %s25
    %p53 = scmp.eq.s32.totalorder %s52, 0
    %s55 = sadd.s32 %s54, 1
    %s56 = scalar_select %p53, %s54, %s55
    %p59 = pneg %p53
    %p60 = scmp.eq.s32.totalorder %s18, 3
    %p61 = por %p59, %p60
    %p62 = scmp.ne.s32.totalorder %s54, %s57
    %p63 = scmp.eq.s32.totalorder %s18, 0
    %p64 = por %p62, %p63
    %p65 = scmp.ne.s32.totalorder %s54, %s57
    %p66 = scmp.eq.s32.totalorder %s23, 3
    %p67 = por %p65, %p66
    %p68 = scmp.ne.s32.totalorder %s57, %s58
    %p69 = scmp.eq.s32.totalorder %s23, 0
    %p70 = por %p68, %p69
    %p71 = scmp.ne.s32.totalorder %s57, %s58
    %p72 = scmp.eq.s32.totalorder %s24, 3
    %p73 = por %p71, %p72
    %p75 = scmp.ne.s32.totalorder %s58, %s74
    %p76 = scmp.eq.s32.totalorder %s24, 0
    %p77 = por %p75, %p76
    %s79 = sadd.s32 %s78, 1
    %p82 = scmp.eq.s32.totalorder %s18, 3
    %p83 = scmp.ne.s32.totalorder %s78, %s80
    %p84 = scmp.eq.s32.totalorder %s18, 0
    %p85 = por %p83, %p84
    %p86 = scmp.ne.s32.totalorder %s78, %s80
    %p87 = scmp.eq.s32.totalorder %s23, 3
    %p88 = por %p86, %p87
    %p89 = scmp.ne.s32.totalorder %s80, %s81
    %p90 = scmp.eq.s32.totalorder %s23, 0
    %p91 = por %p89, %p90
    %p92 = scmp.ne.s32.totalorder %s80, %s81
    %p93 = scmp.eq.s32.totalorder %s24, 3
    %p94 = por %p92, %p93
    %p96 = scmp.ne.s32.totalorder %s81, %s95
    %p97 = scmp.eq.s32.totalorder %s24, 0
    %p98 = por %p96, %p97
    %s100 = sadd.s32 %s99, 1
    %p103 = scmp.eq.s32.totalorder %s18, 3
    %p104 = scmp.ne.s32.totalorder %s99, %s101
    %p105 = scmp.eq.s32.totalorder %s18, 0
    %p106 = por %p104, %p105
    %p107 = scmp.ne.s32.totalorder %s99, %s101
    %p108 = scmp.eq.s32.totalorder %s23, 3
    %p109 = por %p107, %p108
    %p110 = scmp.ne.s32.totalorder %s101, %s102
    %p111 = scmp.eq.s32.totalorder %s23, 0
    %p112 = por %p110, %p111
    %p113 = scmp.ne.s32.totalorder %s101, %s102
    %p114 = scmp.eq.s32.totalorder %s24, 3
    %p115 = por %p113, %p114
    %p117 = scmp.ne.s32.totalorder %s102, %s116
    %p118 = scmp.eq.s32.totalorder %s24, 0
    %p119 = por %p117, %p118
    %s121 = sadd.s32 %s120, 1
    %p124 = scmp.eq.s32.totalorder %s18, 3
    %p125 = scmp.ne.s32.totalorder %s120, %s122
    %p126 = scmp.eq.s32.totalorder %s18, 0
    %p127 = por %p125, %p126
    %p128 = scmp.ne.s32.totalorder %s120, %s122
    %p129 = scmp.eq.s32.totalorder %s23, 3
    %p130 = por %p128, %p129
    %p131 = scmp.ne.s32.totalorder %s122, %s123
    %p132 = scmp.eq.s32.totalorder %s23, 0
    %p133 = por %p131, %p132
    %p134 = scmp.ne.s32.totalorder %s122, %s123
    %p135 = scmp.eq.s32.totalorder %s24, 3
    %p136 = por %p134, %p135
    %p138 = scmp.ne.s32.totalorder %s123, %s137
    %p139 = scmp.eq.s32.totalorder %s24, 0
    %p140 = por %p138, %p139
    %s142 = sadd.s32 %s141, 1
    %p145 = scmp.eq.s32.totalorder %s18, 3
    %p146 = scmp.ne.s32.totalorder %s141, %s143
    %p147 = scmp.eq.s32.totalorder %s18, 0
    %p148 = por %p146, %p147
    %p149 = scmp.ne.s32.totalorder %s141, %s143
    %p150 = scmp.eq.s32.totalorder %s23, 3
    %p151 = por %p149, %p150
    %p152 = scmp.ne.s32.totalorder %s143, %s144
    %p153 = scmp.eq.s32.totalorder %s23, 0
    %p154 = por %p152, %p153
    %p155 = scmp.ne.s32.totalorder %s143, %s144
    %p156 = scmp.eq.s32.totalorder %s24, 3
    %p157 = por %p155, %p156
    %p159 = scmp.ne.s32.totalorder %s144, %s158
    %p160 = scmp.eq.s32.totalorder %s24, 0
    %p161 = por %p159, %p160
    %s163 = sadd.s32 %s162, 1
    %p166 = scmp.eq.s32.totalorder %s18, 3
    %p167 = scmp.ne.s32.totalorder %s162, %s164
    %p168 = scmp.eq.s32.totalorder %s18, 0
    %p169 = por %p167, %p168
    %p170 = scmp.ne.s32.totalorder %s162, %s164
    %p171 = scmp.eq.s32.totalorder %s23, 3
    %p172 = por %p170, %p171
    %p173 = scmp.ne.s32.totalorder %s164, %s165
    %p174 = scmp.eq.s32.totalorder %s23, 0
    %p175 = por %p173, %p174
    %p176 = scmp.ne.s32.totalorder %s164, %s165
    %p177 = scmp.eq.s32.totalorder %s24, 3
    %p178 = por %p176, %p177
    %p180 = scmp.ne.s32.totalorder %s165, %s179
    %p181 = scmp.eq.s32.totalorder %s24, 0
    %p182 = por %p180, %p181
    %s184 = sadd.s32 %s183, 1
    %p187 = scmp.eq.s32.totalorder %s18, 3
    %p188 = scmp.ne.s32.totalorder %s183, %s185
    %p189 = scmp.eq.s32.totalorder %s18, 0
    %p190 = por %p188, %p189
    %p191 = scmp.ne.s32.totalorder %s183, %s185
    %p192 = scmp.eq.s32.totalorder %s23, 3
    %p193 = por %p191, %p192
    %p194 = scmp.ne.s32.totalorder %s185, %s186
    %p195 = scmp.eq.s32.totalorder %s23, 0
    %p196 = por %p194, %p195
    %p197 = scmp.ne.s32.totalorder %s185, %s186
    %p198 = scmp.eq.s32.totalorder %s24, 3
    %p199 = por %p197, %p198
    %p201 = scmp.ne.s32.totalorder %s186, %s200
    %p202 = scmp.eq.s32.totalorder %s24, 0
    %p203 = por %p201, %p202
    %s205 = sadd.s32 %s204, 1
    %p208 = scmp.eq.s32.totalorder %s18, 3
    %p209 = scmp.ne.s32.totalorder %s204, %s206
    %p210 = scmp.eq.s32.totalorder %s18, 0
    %p211 = por %p209, %p210
    %p212 = scmp.ne.s32.totalorder %s204, %s206
    %p213 = scmp.eq.s32.totalorder %s23, 3
    %p214 = por %p212, %p213
    %p215 = scmp.ne.s32.totalorder %s206, %s207
    %p216 = scmp.eq.s32.totalorder %s23, 0
    %p217 = por %p215, %p216
    %p218 = scmp.ne.s32.totalorder %s206, %s207
    %p219 = scmp.eq.s32.totalorder %s24, 3
    %p220 = por %p218, %p219
    %p222 = scmp.ne.s32.totalorder %s207, %s221
    %p223 = scmp.eq.s32.totalorder %s24, 0
    %p224 = por %p222, %p223
    %s226 = sadd.s32 %s225, 1
    %p229 = scmp.eq.s32.totalorder %s18, 3
    %p230 = scmp.ne.s32.totalorder %s225, %s227
    %p231 = scmp.eq.s32.totalorder %s18, 0
    %p232 = por %p230, %p231
    %p233 = scmp.ne.s32.totalorder %s225, %s227
    %p234 = scmp.eq.s32.totalorder %s23, 3
    %p235 = por %p233, %p234
    %p236 = scmp.ne.s32.totalorder %s227, %s228
    %p237 = scmp.eq.s32.totalorder %s23, 0
    %p238 = por %p236, %p237
    %p239 = scmp.ne.s32.totalorder %s227, %s228
    %p240 = scmp.eq.s32.totalorder %s24, 3
    %p241 = por %p239, %p240
    %p243 = scmp.ne.s32.totalorder %s228, %s242
    %p244 = scmp.eq.s32.totalorder %s24, 0
    %p245 = por %p243, %p244
    %s247 = sadd.s32 %s246, 1
    %p250 = scmp.eq.s32.totalorder %s18, 3
    %p251 = scmp.ne.s32.totalorder %s246, %s248
    %p252 = scmp.eq.s32.totalorder %s18, 0
    %p253 = por %p251, %p252
    %p254 = scmp.ne.s32.totalorder %s246, %s248
    %p255 = scmp.eq.s32.totalorder %s23, 3
    %p256 = por %p254, %p255
    %p257 = scmp.ne.s32.totalorder %s248, %s249
    %p258 = scmp.eq.s32.totalorder %s23, 0
    %p259 = por %p257, %p258
    %p260 = scmp.ne.s32.totalorder %s248, %s249
    %p261 = scmp.eq.s32.totalorder %s24, 3
    %p262 = por %p260, %p261
    %p264 = scmp.ne.s32.totalorder %s249, %s263
    %p265 = scmp.eq.s32.totalorder %s24, 0
    %p266 = por %p264, %p265
    %s268 = sadd.s32 %s267, 1
    %p271 = scmp.eq.s32.totalorder %s18, 3
    %p272 = scmp.ne.s32.totalorder %s267, %s269
    %p273 = scmp.eq.s32.totalorder %s18, 0
    %p274 = por %p272, %p273
    %p275 = scmp.ne.s32.totalorder %s267, %s269
    %p276 = scmp.eq.s32.totalorder %s23, 3
    %p277 = por %p275, %p276
    %p278 = scmp.ne.s32.totalorder %s269, %s270
    %p279 = scmp.eq.s32.totalorder %s23, 0
    %p280 = por %p278, %p279
    %p281 = scmp.ne.s32.totalorder %s269, %s270
    %p282 = scmp.eq.s32.totalorder %s24, 3
    %p283 = por %p281, %p282
    %p285 = scmp.ne.s32.totalorder %s270, %s284
    %p286 = scmp.eq.s32.totalorder %s24, 0
    %p287 = por %p285, %p286
    %s288 = ssub.s32 %s18, %s25
    %p289 = scmp.eq.s32.totalorder %s288, 0
    %s291 = sadd.s32 %s290, 1
    %s292 = scalar_select %p289, %s290, %s291
    %p295 = pneg %p289
    %p296 = scmp.eq.s32.totalorder %s18, 3
    %p297 = por %p295, %p296
    %p298 = scmp.ne.s32.totalorder %s290, %s293
    %p299 = scmp.eq.s32.totalorder %s18, 0
    %p300 = por %p298, %p299
    %p301 = scmp.ne.s32.totalorder %s290, %s293
    %p302 = scmp.eq.s32.totalorder %s23, 3
    %p303 = por %p301, %p302
    %p304 = scmp.ne.s32.totalorder %s293, %s294
    %p305 = scmp.eq.s32.totalorder %s23, 0
    %p306 = por %p304, %p305
    %p307 = scmp.ne.s32.totalorder %s293, %s294
    %p308 = scmp.eq.s32.totalorder %s24, 3
    %p309 = por %p307, %p308
    %p311 = scmp.ne.s32.totalorder %s294, %s310
    %p312 = scmp.eq.s32.totalorder %s24, 0
    %p313 = por %p311, %p312
    %p314 = scmp.le.s32.totalorder 1, %s18
    %p315 = scmp.lt.s32.totalorder %s18, 5
    %p316 = pnand %p314, %p315
    %p317 = pneg %p316
    // Predicated region
    $region9: #{forward_pallas.1} parent=5 // pred_check
      _
    $region10: #{forward_pallas.1} parent=5 // pred_check_branch
      %319 = sbr.rel (%p316) target = $region12
    $region11: #{forward_pallas.1} parent=5 // pred_region
      %s320 = ssub.s32 %s18, 1
      // Predicated region
      $region13: #{forward_pallas.1} parent=11 // pred_check
        %p321 = pneg %p91
      $region14: #{forward_pallas.1} parent=11 // pred_check_branch
        %323 = sbr.rel (%p321) target = $region16
      $region15: #{forward_pallas.1} parent=11 // pred_region
        _
      $region16: #{forward_pallas.1} parent=11 // pred_fallthru
        _
      // Predicated region
      $region17: #{forward_pallas.1} parent=11 // pred_check
        %p324 = pneg %p112
      $region18: #{forward_pallas.1} parent=11 // pred_check_branch
        %326 = sbr.rel (%p324) target = $region20
      $region19: #{forward_pallas.1} parent=11 // pred_region
        _
      $region20: #{forward_pallas.1} parent=11 // pred_fallthru
        _
      // Predicated region
      $region21: #{forward_pallas.1} parent=11 // pred_check
        %p327 = pneg %p133
      $region22: #{forward_pallas.1} parent=11 // pred_check_branch
        %329 = sbr.rel (%p327) target = $region24
      $region23: #{forward_pallas.1} parent=11 // pred_region
        _
      $region24: #{forward_pallas.1} parent=11 // pred_fallthru
        _
      // Predicated region
      $region25: #{forward_pallas.1} parent=11 // pred_check
        %p330 = pneg %p154
      $region26: #{forward_pallas.1} parent=11 // pred_check_branch
        %332 = sbr.rel (%p330) target = $region28
      $region27: #{forward_pallas.1} parent=11 // pred_region
        _
      $region28: #{forward_pallas.1} parent=11 // pred_fallthru
        _
      // Predicated region
      $region29: #{forward_pallas.1} parent=11 // pred_check
        %p333 = pneg %p175
      $region30: #{forward_pallas.1} parent=11 // pred_check_branch
        %335 = sbr.rel (%p333) target = $region32
      $region31: #{forward_pallas.1} parent=11 // pred_region
        _
      $region32: #{forward_pallas.1} parent=11 // pred_fallthru
        _
      // Predicated region
      $region33: #{forward_pallas.1} parent=11 // pred_check
        %p336 = pneg %p196
      $region34: #{forward_pallas.1} parent=11 // pred_check_branch
        %338 = sbr.rel (%p336) target = $region36
      $region35: #{forward_pallas.1} parent=11 // pred_region
        _
      $region36: #{forward_pallas.1} parent=11 // pred_fallthru
        _
      // Predicated region
      $region37: #{forward_pallas.1} parent=11 // pred_check
        %p339 = pneg %p217
      $region38: #{forward_pallas.1} parent=11 // pred_check_branch
        %341 = sbr.rel (%p339) target = $region40
      $region39: #{forward_pallas.1} parent=11 // pred_region
        _
      $region40: #{forward_pallas.1} parent=11 // pred_fallthru
        _
      // Predicated region
      $region41: #{forward_pallas.1} parent=11 // pred_check
        %p342 = pneg %p238
      $region42: #{forward_pallas.1} parent=11 // pred_check_branch
        %344 = sbr.rel (%p342) target = $region44
      $region43: #{forward_pallas.1} parent=11 // pred_region
        _
      $region44: #{forward_pallas.1} parent=11 // pred_fallthru
        _
      // Predicated region
      $region45: #{forward_pallas.1} parent=11 // pred_check
        %p345 = pneg %p259
      $region46: #{forward_pallas.1} parent=11 // pred_check_branch
        %347 = sbr.rel (%p345) target = $region48
      $region47: #{forward_pallas.1} parent=11 // pred_region
        _
      $region48: #{forward_pallas.1} parent=11 // pred_fallthru
        _
      // Predicated region
      $region49: #{forward_pallas.1} parent=11 // pred_check
        %p348 = pneg %p280
      $region50: #{forward_pallas.1} parent=11 // pred_check_branch
        %350 = sbr.rel (%p348) target = $region52
      $region51: #{forward_pallas.1} parent=11 // pred_region
        _
      $region52: #{forward_pallas.1} parent=11 // pred_fallthru
        _
    $region12: #{forward_pallas.1} parent=5 // pred_fallthru
      _
    %p351 = scmp.lt.s32.totalorder %s18, 4
    // Predicated region
    $region53: #{forward_pallas.1} parent=5 // pred_check
      %p352 = pneg %p351
    $region54: #{forward_pallas.1} parent=5 // pred_check_branch
      %354 = sbr.rel (%p352) target = $region56
    $region55: #{forward_pallas.1} parent=5 // pred_region
      // Predicated region
      $region57: #{forward_pallas.1} parent=55 // pred_check
        %p355 = pneg %p38
      $region58: #{forward_pallas.1} parent=55 // pred_check_branch
        %357 = sbr.rel (%p355) target = $region60
      $region59: #{forward_pallas.1} parent=55 // pred_region
        %s358 = smul.u32 48, %s18
        %p359 = scmp.lt.s32.totalorder %s358, 191
        %s360 = scalar_select %p359, %s358, 191
        %s361 = smul.addr %s360, 8
        %s362 = scalar_lea.vmem %s0, %s361
        %s363 = smul.u32 48, %s18
      $region60: #{forward_pallas.1} parent=55 // pred_fallthru
        _
      // Predicated region
      $region61: #{forward_pallas.1} parent=55 // pred_check
        %p364 = pneg %p64
      $region62: #{forward_pallas.1} parent=55 // pred_check_branch
        %366 = sbr.rel (%p364) target = $region64
      $region63: #{forward_pallas.1} parent=55 // pred_region
        %s367 = smul.u32 48, %s18
        %p368 = scmp.lt.s32.totalorder %s367, 191
        %s369 = scalar_select %p368, %s367, 191
        %s370 = smul.addr %s369, 8
        %s371 = scalar_lea.vmem %s1, %s370
        %s372 = smul.u32 48, %s18
      $region64: #{forward_pallas.1} parent=55 // pred_fallthru
        _
    $region56: #{forward_pallas.1} parent=5 // pred_fallthru
      _
    %p373 = scmp.le.s32.totalorder 1, %s18
    %p374 = scmp.lt.s32.totalorder %s18, 5
    %p375 = pnand %p373, %p374
    %p376 = pneg %p375
    // Predicated region
    $region65: #{forward_pallas.1} parent=5 // pred_check
      _
    $region66: #{forward_pallas.1} parent=5 // pred_check_branch
      %378 = sbr.rel (%p375) target = $region68
    $region67: #{forward_pallas.1} parent=5 // pred_region
      %s379 = ssub.s32 %s18, 1
      %s380 = smul.u32 48, %s23
      %p381 = scmp.lt.s32.totalorder %s380, 191
      %s382 = scalar_select %p381, %s380, 191
      %s383 = smul.addr %s382, 8
      %s384 = scalar_lea.vmem %s0, %s383
      %p385 = pneg %p44
      %p386 = pneg %p41
      %s387 = smul.u32 48, %s23
      %p388 = scmp.lt.s32.totalorder %s387, 191
      %s389 = scalar_select %p388, %s387, 191
      %s390 = smul.addr %s389, 8
      %s391 = scalar_lea.vmem %s1, %s390
      %p392 = pneg %p70
      %p393 = pneg %p67
      %p394 = pneg %p91
      %p395 = pneg %p88
      %p396 = pneg %p112
      %p397 = pneg %p109
      %p398 = pneg %p133
      %p399 = pneg %p130
      %p400 = pneg %p154
      %p401 = pneg %p151
      %p402 = pneg %p175
      %p403 = pneg %p172
      %p404 = pneg %p196
      %p405 = pneg %p193
      %p406 = pneg %p217
      %p407 = pneg %p214
      %p408 = pneg %p238
      %p409 = pneg %p235
      %p410 = pneg %p259
      %p411 = pneg %p256
      %p412 = pneg %p280
      %p413 = pneg %p277
      %p414 = pneg %p306
      %p415 = pneg %p303
      %s416 = smul.u32 4, %s23
      %p417 = scmp.lt.s32.totalorder %s416, 15
      %s418 = scalar_select %p417, %s416, 15
      %s419 = smul.addr %s418, 8
      %s420 = scalar_lea.vmem %s12, %s419
      %s421 = smul.u32 48, %s23
      %p422 = scmp.lt.s32.totalorder %s421, 191
      %s423 = scalar_select %p422, %s421, 191
      %s424 = smul.addr %s423, 8
      %s425 = scalar_lea.vmem %s0, %s424
      %s426 = smul.u32 48, %s23
      %s427 = smul.u32 48, %s23
      %p428 = scmp.lt.s32.totalorder %s427, 191
      %s429 = scalar_select %p428, %s427, 191
      %s430 = smul.addr %s429, 8
      %s431 = scalar_lea.vmem %s1, %s430
      %s432 = smul.u32 48, %s23
      %s433 = smul.u32 4, %s23
      %p434 = scmp.lt.s32.totalorder %s433, 15
      %s435 = scalar_select %p434, %s433, 15
      %s436 = smul.addr %s435, 8
      %s437 = scalar_lea.vmem %s12, %s436
      %s438 = smul.u32 4, %s23
      %v439 = vld [vmem:[%s425] sm:$0xff]
      %v440 = vld [vmem:[%s425 + $0x8] sm:$0xff]
      %v441 = vld [vmem:[%s425 + $0x10] sm:$0xff]
      %v442 = vld [vmem:[%s425 + $0x18] sm:$0xff]
      %v443 = vld [vmem:[%s425 + $0x20] sm:$0xff]
      %v444 = vld [vmem:[%s425 + $0x28] sm:$0xff]
      %v445 = vld [vmem:[%s425 + $0x30] sm:$0xff]
      %v446 = vld [vmem:[%s425 + $0x38] sm:$0xff]
      %v447 = vld [vmem:[%s425 + $0x40] sm:$0xff]
      %v448 = vld [vmem:[%s425 + $0x48] sm:$0xff]
      %v449 = vld [vmem:[%s425 + $0x50] sm:$0xff]
      %v450 = vld [vmem:[%s425 + $0x58] sm:$0xff]
      %v451 = vld [vmem:[%s425 + $0x60] sm:$0xff]
      %v452 = vld [vmem:[%s425 + $0x68] sm:$0xff]
      %v453 = vld [vmem:[%s425 + $0x70] sm:$0xff]
      %v454 = vld [vmem:[%s425 + $0x78] sm:$0xff]
      %v455 = vld [vmem:[%s425 + $0x80] sm:$0xff]
      %v456 = vld [vmem:[%s425 + $0x88] sm:$0xff]
      %v457 = vld [vmem:[%s425 + $0x90] sm:$0xff]
      %v458 = vld [vmem:[%s425 + $0x98] sm:$0xff]
      %v459 = vld [vmem:[%s425 + $0xa0] sm:$0xff]
      %v460 = vld [vmem:[%s425 + $0xa8] sm:$0xff]
      %v461 = vld [vmem:[%s425 + $0xb0] sm:$0xff]
      %v462 = vld [vmem:[%s425 + $0xb8] sm:$0xff]
      %v463 = vld [vmem:[%s425 + $0xc0] sm:$0xff]
      %v464 = vld [vmem:[%s425 + $0xc8] sm:$0xff]
      %v465 = vld [vmem:[%s425 + $0xd0] sm:$0xff]
      %v466 = vld [vmem:[%s425 + $0xd8] sm:$0xff]
      %v467 = vld [vmem:[%s425 + $0xe0] sm:$0xff]
      %v468 = vld [vmem:[%s425 + $0xe8] sm:$0xff]
      %v469 = vld [vmem:[%s425 + $0xf0] sm:$0xff]
      %v470 = vld [vmem:[%s425 + $0xf8] sm:$0xff]
      %v471 = vld [vmem:[%s425 + $0x100] sm:$0xff]
      %v472 = vld [vmem:[%s425 + $0x108] sm:$0xff]
      %v473 = vld [vmem:[%s425 + $0x110] sm:$0xff]
      %v474 = vld [vmem:[%s425 + $0x118] sm:$0xff]
      %v475 = vld [vmem:[%s425 + $0x120] sm:$0xff]
      %v476 = vld [vmem:[%s425 + $0x128] sm:$0xff]
      %v477 = vld [vmem:[%s425 + $0x130] sm:$0xff]
      %v478 = vld [vmem:[%s425 + $0x138] sm:$0xff]
      %v479 = vld [vmem:[%s425 + $0x140] sm:$0xff]
      %v480 = vld [vmem:[%s425 + $0x148] sm:$0xff]
      %v481 = vld [vmem:[%s425 + $0x150] sm:$0xff]
      %v482 = vld [vmem:[%s425 + $0x158] sm:$0xff]
      %v483 = vld [vmem:[%s425 + $0x160] sm:$0xff]
      %v484 = vld [vmem:[%s425 + $0x168] sm:$0xff]
      %v485 = vld [vmem:[%s425 + $0x170] sm:$0xff]
      %v486 = vld [vmem:[%s425 + $0x178] sm:$0xff]
      %v487 = vld [vmem:[%s431] sm:$0xff]
      %v488 = vld [vmem:[%s431 + $0x8] sm:$0xff]
      %v489 = vld [vmem:[%s431 + $0x10] sm:$0xff]
      %v490 = vld [vmem:[%s431 + $0x18] sm:$0xff]
      %v491 = vld [vmem:[%s431 + $0x20] sm:$0xff]
      %v492 = vld [vmem:[%s431 + $0x28] sm:$0xff]
      %v493 = vld [vmem:[%s431 + $0x30] sm:$0xff]
      %v494 = vld [vmem:[%s431 + $0x38] sm:$0xff]
      %v495 = vld [vmem:[%s431 + $0x40] sm:$0xff]
      %v496 = vld [vmem:[%s431 + $0x48] sm:$0xff]
      %v497 = vld [vmem:[%s431 + $0x50] sm:$0xff]
      %v498 = vld [vmem:[%s431 + $0x58] sm:$0xff]
      %v499 = vld [vmem:[%s431 + $0x60] sm:$0xff]
      %v500 = vld [vmem:[%s431 + $0x68] sm:$0xff]
      %v501 = vld [vmem:[%s431 + $0x70] sm:$0xff]
      %v502 = vld [vmem:[%s431 + $0x78] sm:$0xff]
      %v503 = vld [vmem:[%s431 + $0x80] sm:$0xff]
      %v504 = vld [vmem:[%s431 + $0x88] sm:$0xff]
      %v505 = vld [vmem:[%s431 + $0x90] sm:$0xff]
      %v506 = vld [vmem:[%s431 + $0x98] sm:$0xff]
      %v507 = vld [vmem:[%s431 + $0xa0] sm:$0xff]
      %v508 = vld [vmem:[%s431 + $0xa8] sm:$0xff]
      %v509 = vld [vmem:[%s431 + $0xb0] sm:$0xff]
      %v510 = vld [vmem:[%s431 + $0xb8] sm:$0xff]
      %v511 = vld [vmem:[%s431 + $0xc0] sm:$0xff]
      %v512 = vld [vmem:[%s431 + $0xc8] sm:$0xff]
      %v513 = vld [vmem:[%s431 + $0xd0] sm:$0xff]
      %v514 = vld [vmem:[%s431 + $0xd8] sm:$0xff]
      %v515 = vld [vmem:[%s431 + $0xe0] sm:$0xff]
      %v516 = vld [vmem:[%s431 + $0xe8] sm:$0xff]
      %v517 = vld [vmem:[%s431 + $0xf0] sm:$0xff]
      %v518 = vld [vmem:[%s431 + $0xf8] sm:$0xff]
      %v519 = vld [vmem:[%s431 + $0x100] sm:$0xff]
      %v520 = vld [vmem:[%s431 + $0x108] sm:$0xff]
      %v521 = vld [vmem:[%s431 + $0x110] sm:$0xff]
      %v522 = vld [vmem:[%s431 + $0x118] sm:$0xff]
      %v523 = vld [vmem:[%s431 + $0x120] sm:$0xff]
      %v524 = vld [vmem:[%s431 + $0x128] sm:$0xff]
      %v525 = vld [vmem:[%s431 + $0x130] sm:$0xff]
      %v526 = vld [vmem:[%s431 + $0x138] sm:$0xff]
      %v527 = vld [vmem:[%s431 + $0x140] sm:$0xff]
      %v528 = vld [vmem:[%s431 + $0x148] sm:$0xff]
      %v529 = vld [vmem:[%s431 + $0x150] sm:$0xff]
      %v530 = vld [vmem:[%s431 + $0x158] sm:$0xff]
      %v531 = vld [vmem:[%s431 + $0x160] sm:$0xff]
      %v532 = vld [vmem:[%s431 + $0x168] sm:$0xff]
      %v533 = vld [vmem:[%s431 + $0x170] sm:$0xff]
      %v534 = vld [vmem:[%s431 + $0x178] sm:$0xff]
      %v535 = vld [vmem:[%s2] sm:$0xff]
      %v536 = vld [vmem:[%s2 + $0x8] sm:$0xff]
      %v537 = vld [vmem:[%s2 + $0x10] sm:$0xff]
      %v538 = vld [vmem:[%s2 + $0x18] sm:$0xff]
      %v539 = vld [vmem:[%s2 + $0x20] sm:$0xff]
      %v540 = vld [vmem:[%s2 + $0x28] sm:$0xff]
      %v541 = vld [vmem:[%s2 + $0x30] sm:$0xff]
      %v542 = vld [vmem:[%s2 + $0x38] sm:$0xff]
      %v543 = vld [vmem:[%s2 + $0x40] sm:$0xff]
      %v544 = vld [vmem:[%s2 + $0x48] sm:$0xff]
      %v545 = vld [vmem:[%s2 + $0x50] sm:$0xff]
      %v546 = vld [vmem:[%s2 + $0x58] sm:$0xff]
      %v547 = vld [vmem:[%s2 + $0x60] sm:$0xff]
      %v548 = vld [vmem:[%s2 + $0x68] sm:$0xff]
      %v549 = vld [vmem:[%s2 + $0x70] sm:$0xff]
      %v550 = vld [vmem:[%s2 + $0x78] sm:$0xff]
      %v551 = vld [vmem:[%s2 + $0x80] sm:$0xff]
      %v552 = vld [vmem:[%s2 + $0x88] sm:$0xff]
      %v553 = vld [vmem:[%s2 + $0x90] sm:$0xff]
      %v554 = vld [vmem:[%s2 + $0x98] sm:$0xff]
      %v555 = vld [vmem:[%s2 + $0xa0] sm:$0xff]
      %v556 = vld [vmem:[%s2 + $0xa8] sm:$0xff]
      %v557 = vld [vmem:[%s2 + $0xb0] sm:$0xff]
      %v558 = vld [vmem:[%s2 + $0xb8] sm:$0xff]
      %v559 = vld [vmem:[%s2 + $0xc0] sm:$0xff]
      %v560 = vld [vmem:[%s2 + $0xc8] sm:$0xff]
      %v561 = vld [vmem:[%s2 + $0xd0] sm:$0xff]
      %v562 = vld [vmem:[%s2 + $0xd8] sm:$0xff]
      %v563 = vld [vmem:[%s2 + $0xe0] sm:$0xff]
      %v564 = vld [vmem:[%s2 + $0xe8] sm:$0xff]
      %v565 = vld [vmem:[%s2 + $0xf0] sm:$0xff]
      %v566 = vld [vmem:[%s2 + $0xf8] sm:$0xff]
      %v567 = vld [vmem:[%s2 + $0x100] sm:$0xff]
      %v568 = vld [vmem:[%s2 + $0x108] sm:$0xff]
      %v569 = vld [vmem:[%s2 + $0x110] sm:$0xff]
      %v570 = vld [vmem:[%s2 + $0x118] sm:$0xff]
      %v571 = vld [vmem:[%s2 + $0x120] sm:$0xff]
      %v572 = vld [vmem:[%s2 + $0x128] sm:$0xff]
      %v573 = vld [vmem:[%s2 + $0x130] sm:$0xff]
      %v574 = vld [vmem:[%s2 + $0x138] sm:$0xff]
      %v575 = vld [vmem:[%s2 + $0x140] sm:$0xff]
      %v576 = vld [vmem:[%s2 + $0x148] sm:$0xff]
      %v577 = vld [vmem:[%s2 + $0x150] sm:$0xff]
      %v578 = vld [vmem:[%s2 + $0x158] sm:$0xff]
      %v579 = vld [vmem:[%s2 + $0x160] sm:$0xff]
      %v580 = vld [vmem:[%s2 + $0x168] sm:$0xff]
      %v581 = vld [vmem:[%s2 + $0x170] sm:$0xff]
      %v582 = vld [vmem:[%s2 + $0x178] sm:$0xff]
      %v583 = vlaneseq
      %v584 = vand.u32 %v583, 127
      %585 = vset.pattern.permute.xlu0 0
      %586 = vperm.xlu0 %585, %v439
      %v587 = vpop.permute.xlu0 %586
      %588 = vset.pattern.permute.xlu0 0
      %589 = vperm.xlu0 %588, %v440
      %v590 = vpop.permute.xlu0 %589
      %591 = vset.pattern.permute.xlu0 0
      %592 = vperm.xlu0 %591, %v441
      %v593 = vpop.permute.xlu0 %592
      %594 = vset.pattern.permute.xlu0 0
      %595 = vperm.xlu0 %594, %v442
      %v596 = vpop.permute.xlu0 %595
      %597 = vset.pattern.permute.xlu0 0
      %598 = vperm.xlu0 %597, %v443
      %v599 = vpop.permute.xlu0 %598
      %600 = vset.pattern.permute.xlu0 0
      %601 = vperm.xlu0 %600, %v444
      %v602 = vpop.permute.xlu0 %601
      %603 = vset.pattern.permute.xlu0 0
      %604 = vperm.xlu0 %603, %v445
      %v605 = vpop.permute.xlu0 %604
      %606 = vset.pattern.permute.xlu0 0
      %607 = vperm.xlu0 %606, %v446
      %v608 = vpop.permute.xlu0 %607
      %609 = vset.pattern.permute.xlu0 0
      %610 = vperm.xlu0 %609, %v447
      %v611 = vpop.permute.xlu0 %610
      %612 = vset.pattern.permute.xlu0 0
      %613 = vperm.xlu0 %612, %v448
      %v614 = vpop.permute.xlu0 %613
      %615 = vset.pattern.permute.xlu0 0
      %616 = vperm.xlu0 %615, %v449
      %v617 = vpop.permute.xlu0 %616
      %618 = vset.pattern.permute.xlu0 0
      %619 = vperm.xlu0 %618, %v450
      %v620 = vpop.permute.xlu0 %619
      %621 = vset.pattern.permute.xlu0 0
      %622 = vperm.xlu0 %621, %v451
      %v623 = vpop.permute.xlu0 %622
      %624 = vset.pattern.permute.xlu0 0
      %625 = vperm.xlu0 %624, %v452
      %v626 = vpop.permute.xlu0 %625
      %627 = vset.pattern.permute.xlu0 0
      %628 = vperm.xlu0 %627, %v453
      %v629 = vpop.permute.xlu0 %628
      %630 = vset.pattern.permute.xlu0 0
      %631 = vperm.xlu0 %630, %v454
      %v632 = vpop.permute.xlu0 %631
      %633 = vset.pattern.permute.xlu0 0
      %634 = vperm.xlu0 %633, %v455
      %v635 = vpop.permute.xlu0 %634
      %636 = vset.pattern.permute.xlu0 0
      %637 = vperm.xlu0 %636, %v456
      %v638 = vpop.permute.xlu0 %637
      %639 = vset.pattern.permute.xlu0 0
      %640 = vperm.xlu0 %639, %v457
      %v641 = vpop.permute.xlu0 %640
      %642 = vset.pattern.permute.xlu0 0
      %643 = vperm.xlu0 %642, %v458
      %v644 = vpop.permute.xlu0 %643
      %645 = vset.pattern.permute.xlu0 0
      %646 = vperm.xlu0 %645, %v459
      %v647 = vpop.permute.xlu0 %646
      %648 = vset.pattern.permute.xlu0 0
      %649 = vperm.xlu0 %648, %v460
      %v650 = vpop.permute.xlu0 %649
      %651 = vset.pattern.permute.xlu0 0
      %652 = vperm.xlu0 %651, %v461
      %v653 = vpop.permute.xlu0 %652
      %654 = vset.pattern.permute.xlu0 0
      %655 = vperm.xlu0 %654, %v462
      %v656 = vpop.permute.xlu0 %655
      %657 = vset.pattern.permute.xlu0 0
      %658 = vperm.xlu0 %657, %v463
      %v659 = vpop.permute.xlu0 %658
      %660 = vset.pattern.permute.xlu0 0
      %661 = vperm.xlu0 %660, %v464
      %v662 = vpop.permute.xlu0 %661
      %663 = vset.pattern.permute.xlu0 0
      %664 = vperm.xlu0 %663, %v465
      %v665 = vpop.permute.xlu0 %664
      %666 = vset.pattern.permute.xlu0 0
      %667 = vperm.xlu0 %666, %v466
      %v668 = vpop.permute.xlu0 %667
      %669 = vset.pattern.permute.xlu0 0
      %670 = vperm.xlu0 %669, %v467
      %v671 = vpop.permute.xlu0 %670
      %672 = vset.pattern.permute.xlu0 0
      %673 = vperm.xlu0 %672, %v468
      %v674 = vpop.permute.xlu0 %673
      %675 = vset.pattern.permute.xlu0 0
      %676 = vperm.xlu0 %675, %v469
      %v677 = vpop.permute.xlu0 %676
      %678 = vset.pattern.permute.xlu0 0
      %679 = vperm.xlu0 %678, %v470
      %v680 = vpop.permute.xlu0 %679
      %681 = vset.pattern.permute.xlu0 0
      %682 = vperm.xlu0 %681, %v471
      %v683 = vpop.permute.xlu0 %682
      %684 = vset.pattern.permute.xlu0 0
      %685 = vperm.xlu0 %684, %v472
      %v686 = vpop.permute.xlu0 %685
      %687 = vset.pattern.permute.xlu0 0
      %688 = vperm.xlu0 %687, %v473
      %v689 = vpop.permute.xlu0 %688
      %690 = vset.pattern.permute.xlu0 0
      %691 = vperm.xlu0 %690, %v474
      %v692 = vpop.permute.xlu0 %691
      %693 = vset.pattern.permute.xlu0 0
      %694 = vperm.xlu0 %693, %v475
      %v695 = vpop.permute.xlu0 %694
      %696 = vset.pattern.permute.xlu0 0
      %697 = vperm.xlu0 %696, %v476
      %v698 = vpop.permute.xlu0 %697
      %699 = vset.pattern.permute.xlu0 0
      %700 = vperm.xlu0 %699, %v477
      %v701 = vpop.permute.xlu0 %700
      %702 = vset.pattern.permute.xlu0 0
      %703 = vperm.xlu0 %702, %v478
      %v704 = vpop.permute.xlu0 %703
      %705 = vset.pattern.permute.xlu0 0
      %706 = vperm.xlu0 %705, %v479
      %v707 = vpop.permute.xlu0 %706
      %708 = vset.pattern.permute.xlu0 0
      %709 = vperm.xlu0 %708, %v480
      %v710 = vpop.permute.xlu0 %709
      %711 = vset.pattern.permute.xlu0 0
      %712 = vperm.xlu0 %711, %v481
      %v713 = vpop.permute.xlu0 %712
      %714 = vset.pattern.permute.xlu0 0
      %715 = vperm.xlu0 %714, %v482
      %v716 = vpop.permute.xlu0 %715
      %717 = vset.pattern.permute.xlu0 0
      %718 = vperm.xlu0 %717, %v483
      %v719 = vpop.permute.xlu0 %718
      %720 = vset.pattern.permute.xlu0 0
      %721 = vperm.xlu0 %720, %v484
      %v722 = vpop.permute.xlu0 %721
      %723 = vset.pattern.permute.xlu0 0
      %724 = vperm.xlu0 %723, %v485
      %v725 = vpop.permute.xlu0 %724
      %726 = vset.pattern.permute.xlu0 0
      %727 = vperm.xlu0 %726, %v486
      %v728 = vpop.permute.xlu0 %727
      %vm729 = vcmp.eq.s32.totalorder %v587, %v584
      %vm730 = vcmp.eq.s32.totalorder %v590, %v584
      %vm731 = vcmp.eq.s32.totalorder %v593, %v584
      %vm732 = vcmp.eq.s32.totalorder %v596, %v584
      %vm733 = vcmp.eq.s32.totalorder %v599, %v584
      %vm734 = vcmp.eq.s32.totalorder %v602, %v584
      %vm735 = vcmp.eq.s32.totalorder %v605, %v584
      %vm736 = vcmp.eq.s32.totalorder %v608, %v584
      %vm737 = vcmp.eq.s32.totalorder %v611, %v584
      %vm738 = vcmp.eq.s32.totalorder %v614, %v584
      %vm739 = vcmp.eq.s32.totalorder %v617, %v584
      %vm740 = vcmp.eq.s32.totalorder %v620, %v584
      %vm741 = vcmp.eq.s32.totalorder %v623, %v584
      %vm742 = vcmp.eq.s32.totalorder %v626, %v584
      %vm743 = vcmp.eq.s32.totalorder %v629, %v584
      %vm744 = vcmp.eq.s32.totalorder %v632, %v584
      %vm745 = vcmp.eq.s32.totalorder %v635, %v584
      %vm746 = vcmp.eq.s32.totalorder %v638, %v584
      %vm747 = vcmp.eq.s32.totalorder %v641, %v584
      %vm748 = vcmp.eq.s32.totalorder %v644, %v584
      %vm749 = vcmp.eq.s32.totalorder %v647, %v584
      %vm750 = vcmp.eq.s32.totalorder %v650, %v584
      %vm751 = vcmp.eq.s32.totalorder %v653, %v584
      %vm752 = vcmp.eq.s32.totalorder %v656, %v584
      %vm753 = vcmp.eq.s32.totalorder %v659, %v584
      %vm754 = vcmp.eq.s32.totalorder %v662, %v584
      %vm755 = vcmp.eq.s32.totalorder %v665, %v584
      %vm756 = vcmp.eq.s32.totalorder %v668, %v584
      %vm757 = vcmp.eq.s32.totalorder %v671, %v584
      %vm758 = vcmp.eq.s32.totalorder %v674, %v584
      %vm759 = vcmp.eq.s32.totalorder %v677, %v584
      %vm760 = vcmp.eq.s32.totalorder %v680, %v584
      %vm761 = vcmp.eq.s32.totalorder %v683, %v584
      %vm762 = vcmp.eq.s32.totalorder %v686, %v584
      %vm763 = vcmp.eq.s32.totalorder %v689, %v584
      %vm764 = vcmp.eq.s32.totalorder %v692, %v584
      %vm765 = vcmp.eq.s32.totalorder %v695, %v584
      %vm766 = vcmp.eq.s32.totalorder %v698, %v584
      %vm767 = vcmp.eq.s32.totalorder %v701, %v584
      %vm768 = vcmp.eq.s32.totalorder %v704, %v584
      %vm769 = vcmp.eq.s32.totalorder %v707, %v584
      %vm770 = vcmp.eq.s32.totalorder %v710, %v584
      %vm771 = vcmp.eq.s32.totalorder %v713, %v584
      %vm772 = vcmp.eq.s32.totalorder %v716, %v584
      %vm773 = vcmp.eq.s32.totalorder %v719, %v584
      %vm774 = vcmp.eq.s32.totalorder %v722, %v584
      %vm775 = vcmp.eq.s32.totalorder %v725, %v584
      %vm776 = vcmp.eq.s32.totalorder %v728, %v584
      %v777 = vsel %vm729, 1, 0
      %v778 = vsel %vm730, 1, 0
      %v779 = vsel %vm731, 1, 0
      %v780 = vsel %vm732, 1, 0
      %v781 = vsel %vm733, 1, 0
      %v782 = vsel %vm734, 1, 0
      %v783 = vsel %vm735, 1, 0
      %v784 = vsel %vm736, 1, 0
      %v785 = vsel %vm737, 1, 0
      %v786 = vsel %vm738, 1, 0
      %v787 = vsel %vm739, 1, 0
      %v788 = vsel %vm740, 1, 0
      %v789 = vsel %vm741, 1, 0
      %v790 = vsel %vm742, 1, 0
      %v791 = vsel %vm743, 1, 0
      %v792 = vsel %vm744, 1, 0
      %v793 = vsel %vm745, 1, 0
      %v794 = vsel %vm746, 1, 0
      %v795 = vsel %vm747, 1, 0
      %v796 = vsel %vm748, 1, 0
      %v797 = vsel %vm749, 1, 0
      %v798 = vsel %vm750, 1, 0
      %v799 = vsel %vm751, 1, 0
      %v800 = vsel %vm752, 1, 0
      %v801 = vsel %vm753, 1, 0
      %v802 = vsel %vm754, 1, 0
      %v803 = vsel %vm755, 1, 0
      %v804 = vsel %vm756, 1, 0
      %v805 = vsel %vm757, 1, 0
      %v806 = vsel %vm758, 1, 0
      %v807 = vsel %vm759, 1, 0
      %v808 = vsel %vm760, 1, 0
      %v809 = vsel %vm761, 1, 0
      %v810 = vsel %vm762, 1, 0
      %v811 = vsel %vm763, 1, 0
      %v812 = vsel %vm764, 1, 0
      %v813 = vsel %vm765, 1, 0
      %v814 = vsel %vm766, 1, 0
      %v815 = vsel %vm767, 1, 0
      %v816 = vsel %vm768, 1, 0
      %v817 = vsel %vm769, 1, 0
      %v818 = vsel %vm770, 1, 0
      %v819 = vsel %vm771, 1, 0
      %v820 = vsel %vm772, 1, 0
      %v821 = vsel %vm773, 1, 0
      %v822 = vsel %vm774, 1, 0
      %v823 = vsel %vm775, 1, 0
      %v824 = vsel %vm776, 1, 0
      %v825 = vcvt.s32.f32 %v777
      %v826 = vcvt.s32.f32 %v778
      %v827 = vcvt.s32.f32 %v779
      %v828 = vcvt.s32.f32 %v780
      %v829 = vcvt.s32.f32 %v781
      %v830 = vcvt.s32.f32 %v782
      %v831 = vcvt.s32.f32 %v783
      %v832 = vcvt.s32.f32 %v784
      %v833 = vcvt.s32.f32 %v785
      %v834 = vcvt.s32.f32 %v786
      %v835 = vcvt.s32.f32 %v787
      %v836 = vcvt.s32.f32 %v788
      %v837 = vcvt.s32.f32 %v789
      %v838 = vcvt.s32.f32 %v790
      %v839 = vcvt.s32.f32 %v791
      %v840 = vcvt.s32.f32 %v792
      %v841 = vcvt.s32.f32 %v793
      %v842 = vcvt.s32.f32 %v794
      %v843 = vcvt.s32.f32 %v795
      %v844 = vcvt.s32.f32 %v796
      %v845 = vcvt.s32.f32 %v797
      %v846 = vcvt.s32.f32 %v798
      %v847 = vcvt.s32.f32 %v799
      %v848 = vcvt.s32.f32 %v800
      %v849 = vcvt.s32.f32 %v801
      %v850 = vcvt.s32.f32 %v802
      %v851 = vcvt.s32.f32 %v803
      %v852 = vcvt.s32.f32 %v804
      %v853 = vcvt.s32.f32 %v805
      %v854 = vcvt.s32.f32 %v806
      %v855 = vcvt.s32.f32 %v807
      %v856 = vcvt.s32.f32 %v808
      %v857 = vcvt.s32.f32 %v809
      %v858 = vcvt.s32.f32 %v810
      %v859 = vcvt.s32.f32 %v811
      %v860 = vcvt.s32.f32 %v812
      %v861 = vcvt.s32.f32 %v813
      %v862 = vcvt.s32.f32 %v814
      %v863 = vcvt.s32.f32 %v815
      %v864 = vcvt.s32.f32 %v816
      %v865 = vcvt.s32.f32 %v817
      %v866 = vcvt.s32.f32 %v818
      %v867 = vcvt.s32.f32 %v819
      %v868 = vcvt.s32.f32 %v820
      %v869 = vcvt.s32.f32 %v821
      %v870 = vcvt.s32.f32 %v822
      %v871 = vcvt.s32.f32 %v823
      %v872 = vcvt.s32.f32 %v824
      %v873 = vld [vmem:[%s4] sm:$0xff]
      %v874 = vld [vmem:[%s4 + $0x8] sm:$0xff]
      %v875 = vld [vmem:[%s4 + $0x10] sm:$0xff]
      %v876 = vld [vmem:[%s4 + $0x18] sm:$0xff]
      %vm877 = vcmask 261120
      %v879 = vsel %vm877, %v825, 0
      %v882 = vsel %vm877, %v826, 0
      %v885 = vsel %vm877, %v827, 0
      %v888 = vsel %vm877, %v828, 0
      %v891 = vsel %vm877, %v829, 0
      %v894 = vsel %vm877, %v830, 0
      %v897 = vsel %vm877, %v831, 0
      %v900 = vsel %vm877, %v832, 0
      %v903 = vsel %vm877, %v833, 0
      %v906 = vsel %vm877, %v834, 0
      %v909 = vsel %vm877, %v835, 0
      %v912 = vsel %vm877, %v836, 0
      %v915 = vsel %vm877, %v837, 0
      %v918 = vsel %vm877, %v838, 0
      %v921 = vsel %vm877, %v839, 0
      %v924 = vsel %vm877, %v840, 0
      %v927 = vsel %vm877, %v841, 0
      %v930 = vsel %vm877, %v842, 0
      %v933 = vsel %vm877, %v843, 0
      %v936 = vsel %vm877, %v844, 0
      %v939 = vsel %vm877, %v845, 0
      %v942 = vsel %vm877, %v846, 0
      %v945 = vsel %vm877, %v847, 0
      %v948 = vsel %vm877, %v848, 0
      %v951 = vsel %vm877, %v849, 0
      %v954 = vsel %vm877, %v850, 0
      %v957 = vsel %vm877, %v851, 0
      %v960 = vsel %vm877, %v852, 0
      %v963 = vsel %vm877, %v853, 0
      %v966 = vsel %vm877, %v854, 0
      %v969 = vsel %vm877, %v855, 0
      %v972 = vsel %vm877, %v856, 0
      %v975 = vsel %vm877, %v857, 0
      %v978 = vsel %vm877, %v858, 0
      %v981 = vsel %vm877, %v859, 0
      %v984 = vsel %vm877, %v860, 0
      %v987 = vsel %vm877, %v861, 0
      %v990 = vsel %vm877, %v862, 0
      %v993 = vsel %vm877, %v863, 0
      %v996 = vsel %vm877, %v864, 0
      %v999 = vsel %vm877, %v865, 0
      %v1002 = vsel %vm877, %v866, 0
      %v1005 = vsel %vm877, %v867, 0
      %v1008 = vsel %vm877, %v868, 0
      %v1011 = vsel %vm877, %v869, 0
      %v1014 = vsel %vm877, %v870, 0
      %v1017 = vsel %vm877, %v871, 0
      %v1020 = vsel %vm877, %v872, 0
      %1022 = vmatprep.subr.mxu0 0.0
      %1023 = vmatpush1.msra.mxu0 %v873
      %1024 = vmatprep.subr.mxu0 0.0
      %1025 = vmatpush1.msra.mxu0 %v874
      %1026 = vmatprep.subr.mxu0 0.0
      %1027 = vmatpush1.msra.mxu0 %v875
      %1028 = vmatprep.subr.mxu0 0.0
      %1029 = vmatpush1.msra.mxu0 %v876
      %1030 = vmatprep.subr.mxu0 0.0
      %1031 = vmatpush1.msra.mxu0 0.0
      %1032 = vmatprep.subr.mxu0 0.0
      %1033 = vmatpush1.msra.mxu0 0.0
      %1034 = vmatprep.subr.mxu0 0.0
      %1035 = vmatpush1.msra.mxu0 0.0
      %1036 = vmatprep.subr.mxu0 0.0
      %1037 = vmatpush1.msra.mxu0 0.0
      %1038 = vmatprep.subr.mxu0 0.0
      %1039 = vmatpush1.msra.mxu0 0.0
      %1040 = vmatprep.subr.mxu0 0.0
      %1041 = vmatpush1.msra.mxu0 0.0
      %1042 = vmatprep.subr.mxu0 0.0
      %1043 = vmatpush1.msra.mxu0 0.0
      %1044 = vmatprep.subr.mxu0 0.0
      %1045 = vmatpush1.msra.mxu0 0.0
      %1046 = vmatprep.subr.mxu0 0.0
      %1047 = vmatpush1.msra.mxu0 0.0
      %1048 = vmatprep.subr.mxu0 0.0
      %1049 = vmatpush1.msra.mxu0 0.0
      %1050 = vmatprep.subr.mxu0 0.0
      %1051 = vmatpush1.msra.mxu0 0.0
      %1052 = vmatprep.subr.mxu0 0.0
      %1053 = vmatpush1.msra.mxu0 0.0
      %1054 = vmatprep.subr.mxu0 0.0
      %1055 = vmatpush1.msra.mxu0 0.0
      %1056 = vmatprep.subr.mxu0 0.0
      %1057 = vmatpush1.msra.mxu0 0.0
      %1058 = vmatprep.subr.mxu0 0.0
      %1059 = vmatpush1.msra.mxu0 0.0
      %1060 = vmatprep.subr.mxu0 0.0
      %1061 = vmatpush1.msra.mxu0 0.0
      %1062 = vmatprep.subr.mxu0 0.0
      %1063 = vmatpush1.msra.mxu0 0.0
      %1064 = vmatprep.subr.mxu0 0.0
      %1065 = vmatpush1.msra.mxu0 0.0
      %1066 = vmatprep.subr.mxu0 0.0
      %1067 = vmatpush1.msra.mxu0 0.0
      %1068 = vmatprep.subr.mxu0 0.0
      %1069 = vmatpush1.msra.mxu0 0.0
      %1070 = vmatprep.subr.mxu0 0.0
      %1071 = vmatpush1.msra.mxu0 0.0
      %1072 = vmatprep.subr.mxu0 0.0
      %1073 = vmatpush1.msra.mxu0 0.0
      %1074 = vmatprep.subr.mxu0 0.0
      %1075 = vmatpush1.msra.mxu0 0.0
      %1076 = vmatprep.subr.mxu0 0.0
      %1077 = vmatpush1.msra.mxu0 0.0
      %1078 = vmatprep.subr.mxu0 0.0
      %1079 = vmatpush1.msra.mxu0 0.0
      %1080 = vmatprep.subr.mxu0 0.0
      %1081 = vmatpush1.msra.mxu0 0.0
      %1082 = vmatprep.subr.mxu0 0.0
      %1083 = vmatpush1.msra.mxu0 0.0
      %1084 = vmatprep.subr.mxu0 0.0
      %1085 = vmatpush1.msra.mxu0 0.0
      %1086 = vmatprep.mubr.f32.mxu0 0.0
      %1087 = vmatmul.mubr.f32.gmra.mrb[0].mxu0 %v879
      %v1088 = vpop.f32.mrb[0].mxu0
      %v1089 = vadd.f32 0.0, %v1088
      %v1090 = vpop.f32.mrb[0].mxu0
      %1091 = vmatprep.mubr.f32.mxu0 0.0
      %1092 = vmatmul.mubr.f32.gmra.mrb[0].mxu0 %v882
      %v1093 = vpop.f32.mrb[0].mxu0
      %v1094 = vadd.f32 0.0, %v1093
      %v1095 = vpop.f32.mrb[0].mxu0
      %1096 = vmatprep.mubr.f32.mxu0 0.0
      %1097 = vmatmul.mubr.f32.gmra.mrb[0].mxu0 %v885
      %v1098 = vpop.f32.mrb[0].mxu0
      %v1099 = vadd.f32 0.0, %v1098
      %v1100 = vpop.f32.mrb[0].mxu0
      %1101 = vmatprep.mubr.f32.mxu0 0.0
      %1102 = vmatmul.mubr.f32.gmra.mrb[0].mxu0 %v888
      %v1103 = vpop.f32.mrb[0].mxu0
      %v1104 = vadd.f32 0.0, %v1103
      %v1105 = vpop.f32.mrb[0].mxu0
      %1106 = vmatprep.mubr.f32.mxu0 0.0
      %1107 = vmatmul.mubr.f32.gmra.mrb[0].mxu0 %v891
      %v1108 = vpop.f32.mrb[0].mxu0
      %v1109 = vadd.f32 0.0, %v1108
      %v1110 = vpop.f32.mrb[0].mxu0
      %1111 = vmatprep.mubr.f32.mxu0 0.0
      %1112 = vmatmul.mubr.f32.gmra.mrb[0].mxu0 %v894
      %v1113 = vpop.f32.mrb[0].mxu0
      %v1114 = vadd.f32 0.0, %v1113
      %v1115 = vpop.f32.mrb[0].mxu0
      %1116 = vmatprep.mubr.f32.mxu0 0.0
      %1117 = vmatmul.mubr.f32.gmra.mrb[0].mxu0 %v897
      %v1118 = vpop.f32.mrb[0].mxu0
      %v1119 = vadd.f32 0.0, %v1118
      %v1120 = vpop.f32.mrb[0].mxu0
      %1121 = vmatprep.mubr.f32.mxu0 0.0
      %1122 = vmatmul.mubr.f32.gmra.mrb[0].mxu0 %v900
      %v1123 = vpop.f32.mrb[0].mxu0
      %v1124 = vadd.f32 0.0, %v1123
      %v1125 = vpop.f32.mrb[0].mxu0
      %1126 = vmatprep.mubr.f32.mxu0 0.0
      %1127 = vmatmul.mubr.f32.gmra.mrb[0].mxu0 %v903
      %v1128 = vpop.f32.mrb[0].mxu0
      %v1129 = vadd.f32 0.0, %v1128
      %v1130 = vpop.f32.mrb[0].mxu0
      %1131 = vmatprep.mubr.f32.mxu0 0.0
      %1132 = vmatmul.mubr.f32.gmra.mrb[0].mxu0 %v906
      %v1133 = vpop.f32.mrb[0].mxu0
      %v1134 = vadd.f32 0.0, %v1133
      %v1135 = vpop.f32.mrb[0].mxu0
      %1136 = vmatprep.mubr.f32.mxu0 0.0
      %1137 = vmatmul.mubr.f32.gmra.mrb[0].mxu0 %v909
      %v1138 = vpop.f32.mrb[0].mxu0
      %v1139 = vadd.f32 0.0, %v1138
      %v1140 = vpop.f32.mrb[0].mxu0
      %1141 = vmatprep.mubr.f32.mxu0 0.0
      %1142 = vmatmul.mubr.f32.gmra.mrb[0].mxu0 %v912
      %v1143 = vpop.f32.mrb[0].mxu0
      %v1144 = vadd.f32 0.0, %v1143
      %v1145 = vpop.f32.mrb[0].mxu0
      %1146 = vmatprep.mubr.f32.mxu0 0.0
      %1147 = vmatmul.mubr.f32.gmra.mrb[0].mxu0 %v915
      %v1148 = vpop.f32.mrb[0].mxu0
      %v1149 = vadd.f32 0.0, %v1148
      %v1150 = vpop.f32.mrb[0].mxu0
      %1151 = vmatprep.mubr.f32.mxu0 0.0
      %1152 = vmatmul.mubr.f32.gmra.mrb[0].mxu0 %v918
      %v1153 = vpop.f32.mrb[0].mxu0
      %v1154 = vadd.f32 0.0, %v1153
      %v1155 = vpop.f32.mrb[0].mxu0
      %1156 = vmatprep.mubr.f32.mxu0 0.0
      %1157 = vmatmul.mubr.f32.gmra.mrb[0].mxu0 %v921
      %v1158 = vpop.f32.mrb[0].mxu0
      %v1159 = vadd.f32 0.0, %v1158
      %v1160 = vpop.f32.mrb[0].mxu0
      %1161 = vmatprep.mubr.f32.mxu0 0.0
      %1162 = vmatmul.mubr.f32.gmra.mrb[0].mxu0 %v924
      %v1163 = vpop.f32.mrb[0].mxu0
      %v1164 = vadd.f32 0.0, %v1163
      %v1165 = vpop.f32.mrb[0].mxu0
      %1166 = vmatprep.mubr.f32.mxu0 0.0
      %1167 = vmatmul.mubr.f32.gmra.mrb[0].mxu0 %v927
      %v1168 = vpop.f32.mrb[0].mxu0
      %v1169 = vadd.f32 0.0, %v1168
      %v1170 = vpop.f32.mrb[0].mxu0
      %1171 = vmatprep.mubr.f32.mxu0 0.0
      %1172 = vmatmul.mubr.f32.gmra.mrb[0].mxu0 %v930
      %v1173 = vpop.f32.mrb[0].mxu0
      %v1174 = vadd.f32 0.0, %v1173
      %v1175 = vpop.f32.mrb[0].mxu0
      %1176 = vmatprep.mubr.f32.mxu0 0.0
      %1177 = vmatmul.mubr.f32.gmra.mrb[0].mxu0 %v933
      %v1178 = vpop.f32.mrb[0].mxu0
      %v1179 = vadd.f32 0.0, %v1178
      %v1180 = vpop.f32.mrb[0].mxu0
      %1181 = vmatprep.mubr.f32.mxu0 0.0
      %1182 = vmatmul.mubr.f32.gmra.mrb[0].mxu0 %v936
      %v1183 = vpop.f32.mrb[0].mxu0
      %v1184 = vadd.f32 0.0, %v1183
      %v1185 = vpop.f32.mrb[0].mxu0
      %1186 = vmatprep.mubr.f32.mxu0 0.0
      %1187 = vmatmul.mubr.f32.gmra.mrb[0].mxu0 %v939
      %v1188 = vpop.f32.mrb[0].mxu0
      %v1189 = vadd.f32 0.0, %v1188
      %v1190 = vpop.f32.mrb[0].mxu0
      %1191 = vmatprep.mubr.f32.mxu0 0.0
      %1192 = vmatmul.mubr.f32.gmra.mrb[0].mxu0 %v942
      %v1193 = vpop.f32.mrb[0].mxu0
      %v1194 = vadd.f32 0.0, %v1193
      %v1195 = vpop.f32.mrb[0].mxu0
      %1196 = vmatprep.mubr.f32.mxu0 0.0
      %1197 = vmatmul.mubr.f32.gmra.mrb[0].mxu0 %v945
      %v1198 = vpop.f32.mrb[0].mxu0
      %v1199 = vadd.f32 0.0, %v1198
      %v1200 = vpop.f32.mrb[0].mxu0
      %1201 = vmatprep.mubr.f32.mxu0 0.0
      %1202 = vmatmul.mubr.f32.gmra.mrb[0].mxu0 %v948
      %v1203 = vpop.f32.mrb[0].mxu0
      %v1204 = vadd.f32 0.0, %v1203
      %v1205 = vpop.f32.mrb[0].mxu0
      %1206 = vmatprep.mubr.f32.mxu0 0.0
      %1207 = vmatmul.mubr.f32.gmra.mrb[0].mxu0 %v951
      %v1208 = vpop.f32.mrb[0].mxu0
      %v1209 = vadd.f32 0.0, %v1208
      %v1210 = vpop.f32.mrb[0].mxu0
      %1211 = vmatprep.mubr.f32.mxu0 0.0
      %1212 = vmatmul.mubr.f32.gmra.mrb[0].mxu0 %v954
      %v1213 = vpop.f32.mrb[0].mxu0
      %v1214 = vadd.f32 0.0, %v1213
      %v1215 = vpop.f32.mrb[0].mxu0
      %1216 = vmatprep.mubr.f32.mxu0 0.0
      %1217 = vmatmul.mubr.f32.gmra.mrb[0].mxu0 %v957
      %v1218 = vpop.f32.mrb[0].mxu0
      %v1219 = vadd.f32 0.0, %v1218
      %v1220 = vpop.f32.mrb[0].mxu0
      %1221 = vmatprep.mubr.f32.mxu0 0.0
      %1222 = vmatmul.mubr.f32.gmra.mrb[0].mxu0 %v960
      %v1223 = vpop.f32.mrb[0].mxu0
      %v1224 = vadd.f32 0.0, %v1223
      %v1225 = vpop.f32.mrb[0].mxu0
      %1226 = vmatprep.mubr.f32.mxu0 0.0
      %1227 = vmatmul.mubr.f32.gmra.mrb[0].mxu0 %v963
      %v1228 = vpop.f32.mrb[0].mxu0
      %v1229 = vadd.f32 0.0, %v1228
      %v1230 = vpop.f32.mrb[0].mxu0
      %1231 = vmatprep.mubr.f32.mxu0 0.0
      %1232 = vmatmul.mubr.f32.gmra.mrb[0].mxu0 %v966
      %v1233 = vpop.f32.mrb[0].mxu0
      %v1234 = vadd.f32 0.0, %v1233
      %v1235 = vpop.f32.mrb[0].mxu0
      %1236 = vmatprep.mubr.f32.mxu0 0.0
      %1237 = vmatmul.mubr.f32.gmra.mrb[0].mxu0 %v969
      %v1238 = vpop.f32.mrb[0].mxu0
      %v1239 = vadd.f32 0.0, %v1238
      %v1240 = vpop.f32.mrb[0].mxu0
      %1241 = vmatprep.mubr.f32.mxu0 0.0
      %1242 = vmatmul.mubr.f32.gmra.mrb[0].mxu0 %v972
      %v1243 = vpop.f32.mrb[0].mxu0
      %v1244 = vadd.f32 0.0, %v1243
      %v1245 = vpop.f32.mrb[0].mxu0
      %1246 = vmatprep.mubr.f32.mxu0 0.0
      %1247 = vmatmul.mubr.f32.gmra.mrb[0].mxu0 %v975
      %v1248 = vpop.f32.mrb[0].mxu0
      %v1249 = vadd.f32 0.0, %v1248
      %v1250 = vpop.f32.mrb[0].mxu0
      %1251 = vmatprep.mubr.f32.mxu0 0.0
      %1252 = vmatmul.mubr.f32.gmra.mrb[0].mxu0 %v978
      %v1253 = vpop.f32.mrb[0].mxu0
      %v1254 = vadd.f32 0.0, %v1253
      %v1255 = vpop.f32.mrb[0].mxu0
      %1256 = vmatprep.mubr.f32.mxu0 0.0
      %1257 = vmatmul.mubr.f32.gmra.mrb[0].mxu0 %v981
      %v1258 = vpop.f32.mrb[0].mxu0
      %v1259 = vadd.f32 0.0, %v1258
      %v1260 = vpop.f32.mrb[0].mxu0
      %1261 = vmatprep.mubr.f32.mxu0 0.0
      %1262 = vmatmul.mubr.f32.gmra.mrb[0].mxu0 %v984
      %v1263 = vpop.f32.mrb[0].mxu0
      %v1264 = vadd.f32 0.0, %v1263
      %v1265 = vpop.f32.mrb[0].mxu0
      %1266 = vmatprep.mubr.f32.mxu0 0.0
      %1267 = vmatmul.mubr.f32.gmra.mrb[0].mxu0 %v987
      %v1268 = vpop.f32.mrb[0].mxu0
      %v1269 = vadd.f32 0.0, %v1268
      %v1270 = vpop.f32.mrb[0].mxu0
      %1271 = vmatprep.mubr.f32.mxu0 0.0
      %1272 = vmatmul.mubr.f32.gmra.mrb[0].mxu0 %v990
      %v1273 = vpop.f32.mrb[0].mxu0
      %v1274 = vadd.f32 0.0, %v1273
      %v1275 = vpop.f32.mrb[0].mxu0
      %1276 = vmatprep.mubr.f32.mxu0 0.0
      %1277 = vmatmul.mubr.f32.gmra.mrb[0].mxu0 %v993
      %v1278 = vpop.f32.mrb[0].mxu0
      %v1279 = vadd.f32 0.0, %v1278
      %v1280 = vpop.f32.mrb[0].mxu0
      %1281 = vmatprep.mubr.f32.mxu0 0.0
      %1282 = vmatmul.mubr.f32.gmra.mrb[0].mxu0 %v996
      %v1283 = vpop.f32.mrb[0].mxu0
      %v1284 = vadd.f32 0.0, %v1283
      %v1285 = vpop.f32.mrb[0].mxu0
      %1286 = vmatprep.mubr.f32.mxu0 0.0
      %1287 = vmatmul.mubr.f32.gmra.mrb[0].mxu0 %v999
      %v1288 = vpop.f32.mrb[0].mxu0
      %v1289 = vadd.f32 0.0, %v1288
      %v1290 = vpop.f32.mrb[0].mxu0
      %1291 = vmatprep.mubr.f32.mxu0 0.0
      %1292 = vmatmul.mubr.f32.gmra.mrb[0].mxu0 %v1002
      %v1293 = vpop.f32.mrb[0].mxu0
      %v1294 = vadd.f32 0.0, %v1293
      %v1295 = vpop.f32.mrb[0].mxu0
      %1296 = vmatprep.mubr.f32.mxu0 0.0
      %1297 = vmatmul.mubr.f32.gmra.mrb[0].mxu0 %v1005
      %v1298 = vpop.f32.mrb[0].mxu0
      %v1299 = vadd.f32 0.0, %v1298
      %v1300 = vpop.f32.mrb[0].mxu0
      %1301 = vmatprep.mubr.f32.mxu0 0.0
      %1302 = vmatmul.mubr.f32.gmra.mrb[0].mxu0 %v1008
      %v1303 = vpop.f32.mrb[0].mxu0
      %v1304 = vadd.f32 0.0, %v1303
      %v1305 = vpop.f32.mrb[0].mxu0
      %1306 = vmatprep.mubr.f32.mxu0 0.0
      %1307 = vmatmul.mubr.f32.gmra.mrb[0].mxu0 %v1011
      %v1308 = vpop.f32.mrb[0].mxu0
      %v1309 = vadd.f32 0.0, %v1308
      %v1310 = vpop.f32.mrb[0].mxu0
      %1311 = vmatprep.mubr.f32.mxu0 0.0
      %1312 = vmatmul.mubr.f32.gmra.mrb[0].mxu0 %v1014
      %v1313 = vpop.f32.mrb[0].mxu0
      %v1314 = vadd.f32 0.0, %v1313
      %v1315 = vpop.f32.mrb[0].mxu0
      %1316 = vmatprep.mubr.f32.mxu0 0.0
      %1317 = vmatmul.mubr.f32.gmra.mrb[0].mxu0 %v1017
      %v1318 = vpop.f32.mrb[0].mxu0
      %v1319 = vadd.f32 0.0, %v1318
      %v1320 = vpop.f32.mrb[0].mxu0
      %1321 = vmatprep.mubr.f32.mxu0 0.0
      %1322 = vmatmul.mubr.f32.gmra.mrb[0].mxu0 %v1020
      %v1323 = vpop.f32.mrb[0].mxu0
      %v1324 = vadd.f32 0.0, %v1323
      %v1325 = vpop.f32.mrb[0].mxu0
      %1326 = vdwg.mxu0
      %v1327 = vxor.u32 %v1089, 2147483648
      %v1328 = vxor.u32 %v1094, 2147483648
      %v1329 = vxor.u32 %v1099, 2147483648
      %v1330 = vxor.u32 %v1104, 2147483648
      %v1331 = vxor.u32 %v1109, 2147483648
      %v1332 = vxor.u32 %v1114, 2147483648
      %v1333 = vxor.u32 %v1119, 2147483648
      %v1334 = vxor.u32 %v1124, 2147483648
      %v1335 = vxor.u32 %v1129, 2147483648
      %v1336 = vxor.u32 %v1134, 2147483648
      %v1337 = vxor.u32 %v1139, 2147483648
      %v1338 = vxor.u32 %v1144, 2147483648
      %v1339 = vxor.u32 %v1149, 2147483648
      %v1340 = vxor.u32 %v1154, 2147483648
      %v1341 = vxor.u32 %v1159, 2147483648
      %v1342 = vxor.u32 %v1164, 2147483648
      %v1343 = vxor.u32 %v1169, 2147483648
      %v1344 = vxor.u32 %v1174, 2147483648
      %v1345 = vxor.u32 %v1179, 2147483648
      %v1346 = vxor.u32 %v1184, 2147483648
      %v1347 = vxor.u32 %v1189, 2147483648
      %v1348 = vxor.u32 %v1194, 2147483648
      %v1349 = vxor.u32 %v1199, 2147483648
      %v1350 = vxor.u32 %v1204, 2147483648
      %v1351 = vxor.u32 %v1209, 2147483648
      %v1352 = vxor.u32 %v1214, 2147483648
      %v1353 = vxor.u32 %v1219, 2147483648
      %v1354 = vxor.u32 %v1224, 2147483648
      %v1355 = vxor.u32 %v1229, 2147483648
      %v1356 = vxor.u32 %v1234, 2147483648
      %v1357 = vxor.u32 %v1239, 2147483648
      %v1358 = vxor.u32 %v1244, 2147483648
      %v1359 = vxor.u32 %v1249, 2147483648
      %v1360 = vxor.u32 %v1254, 2147483648
      %v1361 = vxor.u32 %v1259, 2147483648
      %v1362 = vxor.u32 %v1264, 2147483648
      %v1363 = vxor.u32 %v1269, 2147483648
      %v1364 = vxor.u32 %v1274, 2147483648
      %v1365 = vxor.u32 %v1279, 2147483648
      %v1366 = vxor.u32 %v1284, 2147483648
      %v1367 = vxor.u32 %v1289, 2147483648
      %v1368 = vxor.u32 %v1294, 2147483648
      %v1369 = vxor.u32 %v1299, 2147483648
      %v1370 = vxor.u32 %v1304, 2147483648
      %v1371 = vxor.u32 %v1309, 2147483648
      %v1372 = vxor.u32 %v1314, 2147483648
      %v1373 = vxor.u32 %v1319, 2147483648
      %v1374 = vxor.u32 %v1324, 2147483648
      %v1375 = vmul.f32 %v1327, 1.442695
      %v1376 = vpow.pop %v1375
      %v1377 = vmul.f32 %v1328, 1.442695
      %v1378 = vpow.pop %v1377
      %v1379 = vmul.f32 %v1329, 1.442695
      %v1380 = vpow.pop %v1379
      %v1381 = vmul.f32 %v1330, 1.442695
      %v1382 = vpow.pop %v1381
      %v1383 = vmul.f32 %v1331, 1.442695
      %v1384 = vpow.pop %v1383
      %v1385 = vmul.f32 %v1332, 1.442695
      %v1386 = vpow.pop %v1385
      %v1387 = vmul.f32 %v1333, 1.442695
      %v1388 = vpow.pop %v1387
      %v1389 = vmul.f32 %v1334, 1.442695
      %v1390 = vpow.pop %v1389
      %v1391 = vmul.f32 %v1335, 1.442695
      %v1392 = vpow.pop %v1391
      %v1393 = vmul.f32 %v1336, 1.442695
      %v1394 = vpow.pop %v1393
      %v1395 = vmul.f32 %v1337, 1.442695
      %v1396 = vpow.pop %v1395
      %v1397 = vmul.f32 %v1338, 1.442695
      %v1398 = vpow.pop %v1397
      %v1399 = vmul.f32 %v1339, 1.442695
      %v1400 = vpow.pop %v1399
      %v1401 = vmul.f32 %v1340, 1.442695
      %v1402 = vpow.pop %v1401
      %v1403 = vmul.f32 %v1341, 1.442695
      %v1404 = vpow.pop %v1403
      %v1405 = vmul.f32 %v1342, 1.442695
      %v1406 = vpow.pop %v1405
      %v1407 = vmul.f32 %v1343, 1.442695
      %v1408 = vpow.pop %v1407
      %v1409 = vmul.f32 %v1344, 1.442695
      %v1410 = vpow.pop %v1409
      %v1411 = vmul.f32 %v1345, 1.442695
      %v1412 = vpow.pop %v1411
      %v1413 = vmul.f32 %v1346, 1.442695
      %v1414 = vpow.pop %v1413
      %v1415 = vmul.f32 %v1347, 1.442695
      %v1416 = vpow.pop %v1415
      %v1417 = vmul.f32 %v1348, 1.442695
      %v1418 = vpow.pop %v1417
      %v1419 = vmul.f32 %v1349, 1.442695
      %v1420 = vpow.pop %v1419
      %v1421 = vmul.f32 %v1350, 1.442695
      %v1422 = vpow.pop %v1421
      %v1423 = vmul.f32 %v1351, 1.442695
      %v1424 = vpow.pop %v1423
      %v1425 = vmul.f32 %v1352, 1.442695
      %v1426 = vpow.pop %v1425
      %v1427 = vmul.f32 %v1353, 1.442695
      %v1428 = vpow.pop %v1427
      %v1429 = vmul.f32 %v1354, 1.442695
      %v1430 = vpow.pop %v1429
      %v1431 = vmul.f32 %v1355, 1.442695
      %v1432 = vpow.pop %v1431
      %v1433 = vmul.f32 %v1356, 1.442695
      %v1434 = vpow.pop %v1433
      %v1435 = vmul.f32 %v1357, 1.442695
      %v1436 = vpow.pop %v1435
      %v1437 = vmul.f32 %v1358, 1.442695
      %v1438 = vpow.pop %v1437
      %v1439 = vmul.f32 %v1359, 1.442695
      %v1440 = vpow.pop %v1439
      %v1441 = vmul.f32 %v1360, 1.442695
      %v1442 = vpow.pop %v1441
      %v1443 = vmul.f32 %v1361, 1.442695
      %v1444 = vpow.pop %v1443
      %v1445 = vmul.f32 %v1362, 1.442695
      %v1446 = vpow.pop %v1445
      %v1447 = vmul.f32 %v1363, 1.442695
      %v1448 = vpow.pop %v1447
      %v1449 = vmul.f32 %v1364, 1.442695
      %v1450 = vpow.pop %v1449
      %v1451 = vmul.f32 %v1365, 1.442695
      %v1452 = vpow.pop %v1451
      %v1453 = vmul.f32 %v1366, 1.442695
      %v1454 = vpow.pop %v1453
      %v1455 = vmul.f32 %v1367, 1.442695
      %v1456 = vpow.pop %v1455
      %v1457 = vmul.f32 %v1368, 1.442695
      %v1458 = vpow.pop %v1457
      %v1459 = vmul.f32 %v1369, 1.442695
      %v1460 = vpow.pop %v1459
      %v1461 = vmul.f32 %v1370, 1.442695
      %v1462 = vpow.pop %v1461
      %v1463 = vmul.f32 %v1371, 1.442695
      %v1464 = vpow.pop %v1463
      %v1465 = vmul.f32 %v1372, 1.442695
      %v1466 = vpow.pop %v1465
      %v1467 = vmul.f32 %v1373, 1.442695
      %v1468 = vpow.pop %v1467
      %v1469 = vmul.f32 %v1374, 1.442695
      %v1470 = vpow.pop %v1469
      %v1471 = vadd.f32 %v1376, 1.0
      %v1472 = vadd.f32 %v1378, 1.0
      %v1473 = vadd.f32 %v1380, 1.0
      %v1474 = vadd.f32 %v1382, 1.0
      %v1475 = vadd.f32 %v1384, 1.0
      %v1476 = vadd.f32 %v1386, 1.0
      %v1477 = vadd.f32 %v1388, 1.0
      %v1478 = vadd.f32 %v1390, 1.0
      %v1479 = vadd.f32 %v1392, 1.0
      %v1480 = vadd.f32 %v1394, 1.0
      %v1481 = vadd.f32 %v1396, 1.0
      %v1482 = vadd.f32 %v1398, 1.0
      %v1483 = vadd.f32 %v1400, 1.0
      %v1484 = vadd.f32 %v1402, 1.0
      %v1485 = vadd.f32 %v1404, 1.0
      %v1486 = vadd.f32 %v1406, 1.0
      %v1487 = vadd.f32 %v1408, 1.0
      %v1488 = vadd.f32 %v1410, 1.0
      %v1489 = vadd.f32 %v1412, 1.0
      %v1490 = vadd.f32 %v1414, 1.0
      %v1491 = vadd.f32 %v1416, 1.0
      %v1492 = vadd.f32 %v1418, 1.0
      %v1493 = vadd.f32 %v1420, 1.0
      %v1494 = vadd.f32 %v1422, 1.0
      %v1495 = vadd.f32 %v1424, 1.0
      %v1496 = vadd.f32 %v1426, 1.0
      %v1497 = vadd.f32 %v1428, 1.0
      %v1498 = vadd.f32 %v1430, 1.0
      %v1499 = vadd.f32 %v1432, 1.0
      %v1500 = vadd.f32 %v1434, 1.0
      %v1501 = vadd.f32 %v1436, 1.0
      %v1502 = vadd.f32 %v1438, 1.0
      %v1503 = vadd.f32 %v1440, 1.0
      %v1504 = vadd.f32 %v1442, 1.0
      %v1505 = vadd.f32 %v1444, 1.0
      %v1506 = vadd.f32 %v1446, 1.0
      %v1507 = vadd.f32 %v1448, 1.0
      %v1508 = vadd.f32 %v1450, 1.0
      %v1509 = vadd.f32 %v1452, 1.0
      %v1510 = vadd.f32 %v1454, 1.0
      %v1511 = vadd.f32 %v1456, 1.0
      %v1512 = vadd.f32 %v1458, 1.0
      %v1513 = vadd.f32 %v1460, 1.0
      %v1514 = vadd.f32 %v1462, 1.0
      %v1515 = vadd.f32 %v1464, 1.0
      %v1516 = vadd.f32 %v1466, 1.0
      %v1517 = vadd.f32 %v1468, 1.0
      %v1518 = vadd.f32 %v1470, 1.0
      %v1519 = vrcp.pop %v1471
      %v1520 = vmul.f32 1.0, %v1519
      %v1521 = vrcp.pop %v1472
      %v1522 = vmul.f32 1.0, %v1521
      %v1523 = vrcp.pop %v1473
      %v1524 = vmul.f32 1.0, %v1523
      %v1525 = vrcp.pop %v1474
      %v1526 = vmul.f32 1.0, %v1525
      %v1527 = vrcp.pop %v1475
      %v1528 = vmul.f32 1.0, %v1527
      %v1529 = vrcp.pop %v1476
      %v1530 = vmul.f32 1.0, %v1529
      %v1531 = vrcp.pop %v1477
      %v1532 = vmul.f32 1.0, %v1531
      %v1533 = vrcp.pop %v1478
      %v1534 = vmul.f32 1.0, %v1533
      %v1535 = vrcp.pop %v1479
      %v1536 = vmul.f32 1.0, %v1535
      %v1537 = vrcp.pop %v1480
      %v1538 = vmul.f32 1.0, %v1537
      %v1539 = vrcp.pop %v1481
      %v1540 = vmul.f32 1.0, %v1539
      %v1541 = vrcp.pop %v1482
      %v1542 = vmul.f32 1.0, %v1541
      %v1543 = vrcp.pop %v1483
      %v1544 = vmul.f32 1.0, %v1543
      %v1545 = vrcp.pop %v1484
      %v1546 = vmul.f32 1.0, %v1545
      %v1547 = vrcp.pop %v1485
      %v1548 = vmul.f32 1.0, %v1547
      %v1549 = vrcp.pop %v1486
      %v1550 = vmul.f32 1.0, %v1549
      %v1551 = vrcp.pop %v1487
      %v1552 = vmul.f32 1.0, %v1551
      %v1553 = vrcp.pop %v1488
      %v1554 = vmul.f32 1.0, %v1553
      %v1555 = vrcp.pop %v1489
      %v1556 = vmul.f32 1.0, %v1555
      %v1557 = vrcp.pop %v1490
      %v1558 = vmul.f32 1.0, %v1557
      %v1559 = vrcp.pop %v1491
      %v1560 = vmul.f32 1.0, %v1559
      %v1561 = vrcp.pop %v1492
      %v1562 = vmul.f32 1.0, %v1561
      %v1563 = vrcp.pop %v1493
      %v1564 = vmul.f32 1.0, %v1563
      %v1565 = vrcp.pop %v1494
      %v1566 = vmul.f32 1.0, %v1565
      %v1567 = vrcp.pop %v1495
      %v1568 = vmul.f32 1.0, %v1567
      %v1569 = vrcp.pop %v1496
      %v1570 = vmul.f32 1.0, %v1569
      %v1571 = vrcp.pop %v1497
      %v1572 = vmul.f32 1.0, %v1571
      %v1573 = vrcp.pop %v1498
      %v1574 = vmul.f32 1.0, %v1573
      %v1575 = vrcp.pop %v1499
      %v1576 = vmul.f32 1.0, %v1575
      %v1577 = vrcp.pop %v1500
      %v1578 = vmul.f32 1.0, %v1577
      %v1579 = vrcp.pop %v1501
      %v1580 = vmul.f32 1.0, %v1579
      %v1581 = vrcp.pop %v1502
      %v1582 = vmul.f32 1.0, %v1581
      %v1583 = vrcp.pop %v1503
      %v1584 = vmul.f32 1.0, %v1583
      %v1585 = vrcp.pop %v1504
      %v1586 = vmul.f32 1.0, %v1585
      %v1587 = vrcp.pop %v1505
      %v1588 = vmul.f32 1.0, %v1587
      %v1589 = vrcp.pop %v1506
      %v1590 = vmul.f32 1.0, %v1589
      %v1591 = vrcp.pop %v1507
      %v1592 = vmul.f32 1.0, %v1591
      %v1593 = vrcp.pop %v1508
      %v1594 = vmul.f32 1.0, %v1593
      %v1595 = vrcp.pop %v1509
      %v1596 = vmul.f32 1.0, %v1595
      %v1597 = vrcp.pop %v1510
      %v1598 = vmul.f32 1.0, %v1597
      %v1599 = vrcp.pop %v1511
      %v1600 = vmul.f32 1.0, %v1599
      %v1601 = vrcp.pop %v1512
      %v1602 = vmul.f32 1.0, %v1601
      %v1603 = vrcp.pop %v1513
      %v1604 = vmul.f32 1.0, %v1603
      %v1605 = vrcp.pop %v1514
      %v1606 = vmul.f32 1.0, %v1605
      %v1607 = vrcp.pop %v1515
      %v1608 = vmul.f32 1.0, %v1607
      %v1609 = vrcp.pop %v1516
      %v1610 = vmul.f32 1.0, %v1609
      %v1611 = vrcp.pop %v1517
      %v1612 = vmul.f32 1.0, %v1611
      %v1613 = vrcp.pop %v1518
      %v1614 = vmul.f32 1.0, %v1613
      %v1615 = vtanh.pop %v1089
      %v1616 = vtanh.pop %v1094
      %v1617 = vtanh.pop %v1099
      %v1618 = vtanh.pop %v1104
      %v1619 = vtanh.pop %v1109
      %v1620 = vtanh.pop %v1114
      %v1621 = vtanh.pop %v1119
      %v1622 = vtanh.pop %v1124
      %v1623 = vtanh.pop %v1129
      %v1624 = vtanh.pop %v1134
      %v1625 = vtanh.pop %v1139
      %v1626 = vtanh.pop %v1144
      %v1627 = vtanh.pop %v1149
      %v1628 = vtanh.pop %v1154
      %v1629 = vtanh.pop %v1159
      %v1630 = vtanh.pop %v1164
      %v1631 = vtanh.pop %v1169
      %v1632 = vtanh.pop %v1174
      %v1633 = vtanh.pop %v1179
      %v1634 = vtanh.pop %v1184
      %v1635 = vtanh.pop %v1189
      %v1636 = vtanh.pop %v1194
      %v1637 = vtanh.pop %v1199
      %v1638 = vtanh.pop %v1204
      %v1639 = vtanh.pop %v1209
      %v1640 = vtanh.pop %v1214
      %v1641 = vtanh.pop %v1219
      %v1642 = vtanh.pop %v1224
      %v1643 = vtanh.pop %v1229
      %v1644 = vtanh.pop %v1234
      %v1645 = vtanh.pop %v1239
      %v1646 = vtanh.pop %v1244
      %v1647 = vtanh.pop %v1249
      %v1648 = vtanh.pop %v1254
      %v1649 = vtanh.pop %v1259
      %v1650 = vtanh.pop %v1264
      %v1651 = vtanh.pop %v1269
      %v1652 = vtanh.pop %v1274
      %v1653 = vtanh.pop %v1279
      %v1654 = vtanh.pop %v1284
      %v1655 = vtanh.pop %v1289
      %v1656 = vtanh.pop %v1294
      %v1657 = vtanh.pop %v1299
      %v1658 = vtanh.pop %v1304
      %v1659 = vtanh.pop %v1309
      %v1660 = vtanh.pop %v1314
      %v1661 = vtanh.pop %v1319
      %v1662 = vtanh.pop %v1324
      %1711 = vrot.lane.b32.xlu0 %v1615, 96
      %v1712 = vpop.permute.xlu0 %1711
      %1713 = vrot.lane.b32.xlu0 %v1616, 96
      %v1714 = vpop.permute.xlu0 %1713
      %1715 = vrot.lane.b32.xlu0 %v1617, 96
      %v1716 = vpop.permute.xlu0 %1715
      %1717 = vrot.lane.b32.xlu0 %v1618, 96
      %v1718 = vpop.permute.xlu0 %1717
      %1719 = vrot.lane.b32.xlu0 %v1619, 96
      %v1720 = vpop.permute.xlu0 %1719
      %1721 = vrot.lane.b32.xlu0 %v1620, 96
      %v1722 = vpop.permute.xlu0 %1721
      %1723 = vrot.lane.b32.xlu0 %v1621, 96
      %v1724 = vpop.permute.xlu0 %1723
      %1725 = vrot.lane.b32.xlu0 %v1622, 96
      %v1726 = vpop.permute.xlu0 %1725
      %1727 = vrot.lane.b32.xlu0 %v1623, 96
      %v1728 = vpop.permute.xlu0 %1727
      %1729 = vrot.lane.b32.xlu0 %v1624, 96
      %v1730 = vpop.permute.xlu0 %1729
      %1731 = vrot.lane.b32.xlu0 %v1625, 96
      %v1732 = vpop.permute.xlu0 %1731
      %1733 = vrot.lane.b32.xlu0 %v1626, 96
      %v1734 = vpop.permute.xlu0 %1733
      %1735 = vrot.lane.b32.xlu0 %v1627, 96
      %v1736 = vpop.permute.xlu0 %1735
      %1737 = vrot.lane.b32.xlu0 %v1628, 96
      %v1738 = vpop.permute.xlu0 %1737
      %1739 = vrot.lane.b32.xlu0 %v1629, 96
      %v1740 = vpop.permute.xlu0 %1739
      %1741 = vrot.lane.b32.xlu0 %v1630, 96
      %v1742 = vpop.permute.xlu0 %1741
      %1743 = vrot.lane.b32.xlu0 %v1631, 96
      %v1744 = vpop.permute.xlu0 %1743
      %1745 = vrot.lane.b32.xlu0 %v1632, 96
      %v1746 = vpop.permute.xlu0 %1745
      %1747 = vrot.lane.b32.xlu0 %v1633, 96
      %v1748 = vpop.permute.xlu0 %1747
      %1749 = vrot.lane.b32.xlu0 %v1634, 96
      %v1750 = vpop.permute.xlu0 %1749
      %1751 = vrot.lane.b32.xlu0 %v1635, 96
      %v1752 = vpop.permute.xlu0 %1751
      %1753 = vrot.lane.b32.xlu0 %v1636, 96
      %v1754 = vpop.permute.xlu0 %1753
      %1755 = vrot.lane.b32.xlu0 %v1637, 96
      %v1756 = vpop.permute.xlu0 %1755
      %1757 = vrot.lane.b32.xlu0 %v1638, 96
      %v1758 = vpop.permute.xlu0 %1757
      %1759 = vrot.lane.b32.xlu0 %v1639, 96
      %v1760 = vpop.permute.xlu0 %1759
      %1761 = vrot.lane.b32.xlu0 %v1640, 96
      %v1762 = vpop.permute.xlu0 %1761
      %1763 = vrot.lane.b32.xlu0 %v1641, 96
      %v1764 = vpop.permute.xlu0 %1763
      %1765 = vrot.lane.b32.xlu0 %v1642, 96
      %v1766 = vpop.permute.xlu0 %1765
      %1767 = vrot.lane.b32.xlu0 %v1643, 96
      %v1768 = vpop.permute.xlu0 %1767
      %1769 = vrot.lane.b32.xlu0 %v1644, 96
      %v1770 = vpop.permute.xlu0 %1769
      %1771 = vrot.lane.b32.xlu0 %v1645, 96
      %v1772 = vpop.permute.xlu0 %1771
      %1773 = vrot.lane.b32.xlu0 %v1646, 96
      %v1774 = vpop.permute.xlu0 %1773
      %1775 = vrot.lane.b32.xlu0 %v1647, 96
      %v1776 = vpop.permute.xlu0 %1775
      %1777 = vrot.lane.b32.xlu0 %v1648, 96
      %v1778 = vpop.permute.xlu0 %1777
      %1779 = vrot.lane.b32.xlu0 %v1649, 96
      %v1780 = vpop.permute.xlu0 %1779
      %1781 = vrot.lane.b32.xlu0 %v1650, 96
      %v1782 = vpop.permute.xlu0 %1781
      %1783 = vrot.lane.b32.xlu0 %v1651, 96
      %v1784 = vpop.permute.xlu0 %1783
      %1785 = vrot.lane.b32.xlu0 %v1652, 96
      %v1786 = vpop.permute.xlu0 %1785
      %1787 = vrot.lane.b32.xlu0 %v1653, 96
      %v1788 = vpop.permute.xlu0 %1787
      %1789 = vrot.lane.b32.xlu0 %v1654, 96
      %v1790 = vpop.permute.xlu0 %1789
      %1791 = vrot.lane.b32.xlu0 %v1655, 96
      %v1792 = vpop.permute.xlu0 %1791
      %1793 = vrot.lane.b32.xlu0 %v1656, 96
      %v1794 = vpop.permute.xlu0 %1793
      %1795 = vrot.lane.b32.xlu0 %v1657, 96
      %v1796 = vpop.permute.xlu0 %1795
      %1797 = vrot.lane.b32.xlu0 %v1658, 96
      %v1798 = vpop.permute.xlu0 %1797
      %1799 = vrot.lane.b32.xlu0 %v1659, 96
      %v1800 = vpop.permute.xlu0 %1799
      %1801 = vrot.lane.b32.xlu0 %v1660, 96
      %v1802 = vpop.permute.xlu0 %1801
      %1803 = vrot.lane.b32.xlu0 %v1661, 96
      %v1804 = vpop.permute.xlu0 %1803
      %1805 = vrot.lane.b32.xlu0 %v1662, 96
      %v1806 = vpop.permute.xlu0 %1805
      %v1855 = vmul.f32 %v1520, %v1712
      %v1856 = vmul.f32 %v1522, %v1714
      %v1857 = vmul.f32 %v1524, %v1716
      %v1858 = vmul.f32 %v1526, %v1718
      %v1859 = vmul.f32 %v1528, %v1720
      %v1860 = vmul.f32 %v1530, %v1722
      %v1861 = vmul.f32 %v1532, %v1724
      %v1862 = vmul.f32 %v1534, %v1726
      %v1863 = vmul.f32 %v1536, %v1728
      %v1864 = vmul.f32 %v1538, %v1730
      %v1865 = vmul.f32 %v1540, %v1732
      %v1866 = vmul.f32 %v1542, %v1734
      %v1867 = vmul.f32 %v1544, %v1736
      %v1868 = vmul.f32 %v1546, %v1738
      %v1869 = vmul.f32 %v1548, %v1740
      %v1870 = vmul.f32 %v1550, %v1742
      %v1871 = vmul.f32 %v1552, %v1744
      %v1872 = vmul.f32 %v1554, %v1746
      %v1873 = vmul.f32 %v1556, %v1748
      %v1874 = vmul.f32 %v1558, %v1750
      %v1875 = vmul.f32 %v1560, %v1752
      %v1876 = vmul.f32 %v1562, %v1754
      %v1877 = vmul.f32 %v1564, %v1756
      %v1878 = vmul.f32 %v1566, %v1758
      %v1879 = vmul.f32 %v1568, %v1760
      %v1880 = vmul.f32 %v1570, %v1762
      %v1881 = vmul.f32 %v1572, %v1764
      %v1882 = vmul.f32 %v1574, %v1766
      %v1883 = vmul.f32 %v1576, %v1768
      %v1884 = vmul.f32 %v1578, %v1770
      %v1885 = vmul.f32 %v1580, %v1772
      %v1886 = vmul.f32 %v1582, %v1774
      %v1887 = vmul.f32 %v1584, %v1776
      %v1888 = vmul.f32 %v1586, %v1778
      %v1889 = vmul.f32 %v1588, %v1780
      %v1890 = vmul.f32 %v1590, %v1782
      %v1891 = vmul.f32 %v1592, %v1784
      %v1892 = vmul.f32 %v1594, %v1786
      %v1893 = vmul.f32 %v1596, %v1788
      %v1894 = vmul.f32 %v1598, %v1790
      %v1895 = vmul.f32 %v1600, %v1792
      %v1896 = vmul.f32 %v1602, %v1794
      %v1897 = vmul.f32 %v1604, %v1796
      %v1898 = vmul.f32 %v1606, %v1798
      %v1899 = vmul.f32 %v1608, %v1800
      %v1900 = vmul.f32 %v1610, %v1802
      %v1901 = vmul.f32 %v1612, %v1804
      %v1902 = vmul.f32 %v1614, %v1806
      %v1903 = vtanh.pop %v1855
      %v1904 = vtanh.pop %v1856
      %v1905 = vtanh.pop %v1857
      %v1906 = vtanh.pop %v1858
      %v1907 = vtanh.pop %v1859
      %v1908 = vtanh.pop %v1860
      %v1909 = vtanh.pop %v1861
      %v1910 = vtanh.pop %v1862
      %v1911 = vtanh.pop %v1863
      %v1912 = vtanh.pop %v1864
      %v1913 = vtanh.pop %v1865
      %v1914 = vtanh.pop %v1866
      %v1915 = vtanh.pop %v1867
      %v1916 = vtanh.pop %v1868
      %v1917 = vtanh.pop %v1869
      %v1918 = vtanh.pop %v1870
      %v1919 = vtanh.pop %v1871
      %v1920 = vtanh.pop %v1872
      %v1921 = vtanh.pop %v1873
      %v1922 = vtanh.pop %v1874
      %v1923 = vtanh.pop %v1875
      %v1924 = vtanh.pop %v1876
      %v1925 = vtanh.pop %v1877
      %v1926 = vtanh.pop %v1878
      %v1927 = vtanh.pop %v1879
      %v1928 = vtanh.pop %v1880
      %v1929 = vtanh.pop %v1881
      %v1930 = vtanh.pop %v1882
      %v1931 = vtanh.pop %v1883
      %v1932 = vtanh.pop %v1884
      %v1933 = vtanh.pop %v1885
      %v1934 = vtanh.pop %v1886
      %v1935 = vtanh.pop %v1887
      %v1936 = vtanh.pop %v1888
      %v1937 = vtanh.pop %v1889
      %v1938 = vtanh.pop %v1890
      %v1939 = vtanh.pop %v1891
      %v1940 = vtanh.pop %v1892
      %v1941 = vtanh.pop %v1893
      %v1942 = vtanh.pop %v1894
      %v1943 = vtanh.pop %v1895
      %v1944 = vtanh.pop %v1896
      %v1945 = vtanh.pop %v1897
      %v1946 = vtanh.pop %v1898
      %v1947 = vtanh.pop %v1899
      %v1948 = vtanh.pop %v1900
      %v1949 = vtanh.pop %v1901
      %v1950 = vtanh.pop %v1902
      %1999 = vrot.lane.b32.xlu0 %v1903, 64
      %v2000 = vpop.permute.xlu0 %1999
      %2001 = vrot.lane.b32.xlu0 %v1904, 64
      %v2002 = vpop.permute.xlu0 %2001
      %2003 = vrot.lane.b32.xlu0 %v1905, 64
      %v2004 = vpop.permute.xlu0 %2003
      %2005 = vrot.lane.b32.xlu0 %v1906, 64
      %v2006 = vpop.permute.xlu0 %2005
      %2007 = vrot.lane.b32.xlu0 %v1907, 64
      %v2008 = vpop.permute.xlu0 %2007
      %2009 = vrot.lane.b32.xlu0 %v1908, 64
      %v2010 = vpop.permute.xlu0 %2009
      %2011 = vrot.lane.b32.xlu0 %v1909, 64
      %v2012 = vpop.permute.xlu0 %2011
      %2013 = vrot.lane.b32.xlu0 %v1910, 64
      %v2014 = vpop.permute.xlu0 %2013
      %2015 = vrot.lane.b32.xlu0 %v1911, 64
      %v2016 = vpop.permute.xlu0 %2015
      %2017 = vrot.lane.b32.xlu0 %v1912, 64
      %v2018 = vpop.permute.xlu0 %2017
      %2019 = vrot.lane.b32.xlu0 %v1913, 64
      %v2020 = vpop.permute.xlu0 %2019
      %2021 = vrot.lane.b32.xlu0 %v1914, 64
      %v2022 = vpop.permute.xlu0 %2021
      %2023 = vrot.lane.b32.xlu0 %v1915, 64
      %v2024 = vpop.permute.xlu0 %2023
      %2025 = vrot.lane.b32.xlu0 %v1916, 64
      %v2026 = vpop.permute.xlu0 %2025
      %2027 = vrot.lane.b32.xlu0 %v1917, 64
      %v2028 = vpop.permute.xlu0 %2027
      %2029 = vrot.lane.b32.xlu0 %v1918, 64
      %v2030 = vpop.permute.xlu0 %2029
      %2031 = vrot.lane.b32.xlu0 %v1919, 64
      %v2032 = vpop.permute.xlu0 %2031
      %2033 = vrot.lane.b32.xlu0 %v1920, 64
      %v2034 = vpop.permute.xlu0 %2033
      %2035 = vrot.lane.b32.xlu0 %v1921, 64
      %v2036 = vpop.permute.xlu0 %2035
      %2037 = vrot.lane.b32.xlu0 %v1922, 64
      %v2038 = vpop.permute.xlu0 %2037
      %2039 = vrot.lane.b32.xlu0 %v1923, 64
      %v2040 = vpop.permute.xlu0 %2039
      %2041 = vrot.lane.b32.xlu0 %v1924, 64
      %v2042 = vpop.permute.xlu0 %2041
      %2043 = vrot.lane.b32.xlu0 %v1925, 64
      %v2044 = vpop.permute.xlu0 %2043
      %2045 = vrot.lane.b32.xlu0 %v1926, 64
      %v2046 = vpop.permute.xlu0 %2045
      %2047 = vrot.lane.b32.xlu0 %v1927, 64
      %v2048 = vpop.permute.xlu0 %2047
      %2049 = vrot.lane.b32.xlu0 %v1928, 64
      %v2050 = vpop.permute.xlu0 %2049
      %2051 = vrot.lane.b32.xlu0 %v1929, 64
      %v2052 = vpop.permute.xlu0 %2051
      %2053 = vrot.lane.b32.xlu0 %v1930, 64
      %v2054 = vpop.permute.xlu0 %2053
      %2055 = vrot.lane.b32.xlu0 %v1931, 64
      %v2056 = vpop.permute.xlu0 %2055
      %2057 = vrot.lane.b32.xlu0 %v1932, 64
      %v2058 = vpop.permute.xlu0 %2057
      %2059 = vrot.lane.b32.xlu0 %v1933, 64
      %v2060 = vpop.permute.xlu0 %2059
      %2061 = vrot.lane.b32.xlu0 %v1934, 64
      %v2062 = vpop.permute.xlu0 %2061
      %2063 = vrot.lane.b32.xlu0 %v1935, 64
      %v2064 = vpop.permute.xlu0 %2063
      %2065 = vrot.lane.b32.xlu0 %v1936, 64
      %v2066 = vpop.permute.xlu0 %2065
      %2067 = vrot.lane.b32.xlu0 %v1937, 64
      %v2068 = vpop.permute.xlu0 %2067
      %2069 = vrot.lane.b32.xlu0 %v1938, 64
      %v2070 = vpop.permute.xlu0 %2069
      %2071 = vrot.lane.b32.xlu0 %v1939, 64
      %v2072 = vpop.permute.xlu0 %2071
      %2073 = vrot.lane.b32.xlu0 %v1940, 64
      %v2074 = vpop.permute.xlu0 %2073
      %2075 = vrot.lane.b32.xlu0 %v1941, 64
      %v2076 = vpop.permute.xlu0 %2075
      %2077 = vrot.lane.b32.xlu0 %v1942, 64
      %v2078 = vpop.permute.xlu0 %2077
      %2079 = vrot.lane.b32.xlu0 %v1943, 64
      %v2080 = vpop.permute.xlu0 %2079
      %2081 = vrot.lane.b32.xlu0 %v1944, 64
      %v2082 = vpop.permute.xlu0 %2081
      %2083 = vrot.lane.b32.xlu0 %v1945, 64
      %v2084 = vpop.permute.xlu0 %2083
      %2085 = vrot.lane.b32.xlu0 %v1946, 64
      %v2086 = vpop.permute.xlu0 %2085
      %2087 = vrot.lane.b32.xlu0 %v1947, 64
      %v2088 = vpop.permute.xlu0 %2087
      %2089 = vrot.lane.b32.xlu0 %v1948, 64
      %v2090 = vpop.permute.xlu0 %2089
      %2091 = vrot.lane.b32.xlu0 %v1949, 64
      %v2092 = vpop.permute.xlu0 %2091
      %2093 = vrot.lane.b32.xlu0 %v1950, 64
      %v2094 = vpop.permute.xlu0 %2093
      %v2143 = vmul.f32 %v1520, %v2000
      %v2144 = vmul.f32 %v1522, %v2002
      %v2145 = vmul.f32 %v1524, %v2004
      %v2146 = vmul.f32 %v1526, %v2006
      %v2147 = vmul.f32 %v1528, %v2008
      %v2148 = vmul.f32 %v1530, %v2010
      %v2149 = vmul.f32 %v1532, %v2012
      %v2150 = vmul.f32 %v1534, %v2014
      %v2151 = vmul.f32 %v1536, %v2016
      %v2152 = vmul.f32 %v1538, %v2018
      %v2153 = vmul.f32 %v1540, %v2020
      %v2154 = vmul.f32 %v1542, %v2022
      %v2155 = vmul.f32 %v1544, %v2024
      %v2156 = vmul.f32 %v1546, %v2026
      %v2157 = vmul.f32 %v1548, %v2028
      %v2158 = vmul.f32 %v1550, %v2030
      %v2159 = vmul.f32 %v1552, %v2032
      %v2160 = vmul.f32 %v1554, %v2034
      %v2161 = vmul.f32 %v1556, %v2036
      %v2162 = vmul.f32 %v1558, %v2038
      %v2163 = vmul.f32 %v1560, %v2040
      %v2164 = vmul.f32 %v1562, %v2042
      %v2165 = vmul.f32 %v1564, %v2044
      %v2166 = vmul.f32 %v1566, %v2046
      %v2167 = vmul.f32 %v1568, %v2048
      %v2168 = vmul.f32 %v1570, %v2050
      %v2169 = vmul.f32 %v1572, %v2052
      %v2170 = vmul.f32 %v1574, %v2054
      %v2171 = vmul.f32 %v1576, %v2056
      %v2172 = vmul.f32 %v1578, %v2058
      %v2173 = vmul.f32 %v1580, %v2060
      %v2174 = vmul.f32 %v1582, %v2062
      %v2175 = vmul.f32 %v1584, %v2064
      %v2176 = vmul.f32 %v1586, %v2066
      %v2177 = vmul.f32 %v1588, %v2068
      %v2178 = vmul.f32 %v1590, %v2070
      %v2179 = vmul.f32 %v1592, %v2072
      %v2180 = vmul.f32 %v1594, %v2074
      %v2181 = vmul.f32 %v1596, %v2076
      %v2182 = vmul.f32 %v1598, %v2078
      %v2183 = vmul.f32 %v1600, %v2080
      %v2184 = vmul.f32 %v1602, %v2082
      %v2185 = vmul.f32 %v1604, %v2084
      %v2186 = vmul.f32 %v1606, %v2086
      %v2187 = vmul.f32 %v1608, %v2088
      %v2188 = vmul.f32 %v1610, %v2090
      %v2189 = vmul.f32 %v1612, %v2092
      %v2190 = vmul.f32 %v1614, %v2094
      %v2191 = vld [vmem:[%s5] sm:$0xff]
      %v2192 = vld [vmem:[%s5 + $0x8] sm:$0xff]
      %v2193 = vld [vmem:[%s5 + $0x10] sm:$0xff]
      %v2194 = vld [vmem:[%s5 + $0x18] sm:$0xff]
      %v2195 = vld [vmem:[%s6] sm:$0x1]
      %v2197 = vlaneseq
      %v2198 = vshrl.u32 %v2197, 7
      %v2199 = vsub.s32 0, %v2198
      %v2200 = vrot.slane %v2195, %v2199
      %2250 = vrot.lane.b32.xlu0 %v2143, 64
      %v2251 = vpop.permute.xlu0 %2250
      %2252 = vrot.lane.b32.xlu0 %v2144, 64
      %v2253 = vpop.permute.xlu0 %2252
      %2254 = vrot.lane.b32.xlu0 %v2145, 64
      %v2255 = vpop.permute.xlu0 %2254
      %2256 = vrot.lane.b32.xlu0 %v2146, 64
      %v2257 = vpop.permute.xlu0 %2256
      %2258 = vrot.lane.b32.xlu0 %v2147, 64
      %v2259 = vpop.permute.xlu0 %2258
      %2260 = vrot.lane.b32.xlu0 %v2148, 64
      %v2261 = vpop.permute.xlu0 %2260
      %2262 = vrot.lane.b32.xlu0 %v2149, 64
      %v2263 = vpop.permute.xlu0 %2262
      %2264 = vrot.lane.b32.xlu0 %v2150, 64
      %v2265 = vpop.permute.xlu0 %2264
      %2266 = vrot.lane.b32.xlu0 %v2151, 64
      %v2267 = vpop.permute.xlu0 %2266
      %2268 = vrot.lane.b32.xlu0 %v2152, 64
      %v2269 = vpop.permute.xlu0 %2268
      %2270 = vrot.lane.b32.xlu0 %v2153, 64
      %v2271 = vpop.permute.xlu0 %2270
      %2272 = vrot.lane.b32.xlu0 %v2154, 64
      %v2273 = vpop.permute.xlu0 %2272
      %2274 = vrot.lane.b32.xlu0 %v2155, 64
      %v2275 = vpop.permute.xlu0 %2274
      %2276 = vrot.lane.b32.xlu0 %v2156, 64
      %v2277 = vpop.permute.xlu0 %2276
      %2278 = vrot.lane.b32.xlu0 %v2157, 64
      %v2279 = vpop.permute.xlu0 %2278
      %2280 = vrot.lane.b32.xlu0 %v2158, 64
      %v2281 = vpop.permute.xlu0 %2280
      %2282 = vrot.lane.b32.xlu0 %v2159, 64
      %v2283 = vpop.permute.xlu0 %2282
      %2284 = vrot.lane.b32.xlu0 %v2160, 64
      %v2285 = vpop.permute.xlu0 %2284
      %2286 = vrot.lane.b32.xlu0 %v2161, 64
      %v2287 = vpop.permute.xlu0 %2286
      %2288 = vrot.lane.b32.xlu0 %v2162, 64
      %v2289 = vpop.permute.xlu0 %2288
      %2290 = vrot.lane.b32.xlu0 %v2163, 64
      %v2291 = vpop.permute.xlu0 %2290
      %2292 = vrot.lane.b32.xlu0 %v2164, 64
      %v2293 = vpop.permute.xlu0 %2292
      %2294 = vrot.lane.b32.xlu0 %v2165, 64
      %v2295 = vpop.permute.xlu0 %2294
      %2296 = vrot.lane.b32.xlu0 %v2166, 64
      %v2297 = vpop.permute.xlu0 %2296
      %2298 = vrot.lane.b32.xlu0 %v2167, 64
      %v2299 = vpop.permute.xlu0 %2298
      %2300 = vrot.lane.b32.xlu0 %v2168, 64
      %v2301 = vpop.permute.xlu0 %2300
      %2302 = vrot.lane.b32.xlu0 %v2169, 64
      %v2303 = vpop.permute.xlu0 %2302
      %2304 = vrot.lane.b32.xlu0 %v2170, 64
      %v2305 = vpop.permute.xlu0 %2304
      %2306 = vrot.lane.b32.xlu0 %v2171, 64
      %v2307 = vpop.permute.xlu0 %2306
      %2308 = vrot.lane.b32.xlu0 %v2172, 64
      %v2309 = vpop.permute.xlu0 %2308
      %2310 = vrot.lane.b32.xlu0 %v2173, 64
      %v2311 = vpop.permute.xlu0 %2310
      %2312 = vrot.lane.b32.xlu0 %v2174, 64
      %v2313 = vpop.permute.xlu0 %2312
      %2314 = vrot.lane.b32.xlu0 %v2175, 64
      %v2315 = vpop.permute.xlu0 %2314
      %2316 = vrot.lane.b32.xlu0 %v2176, 64
      %v2317 = vpop.permute.xlu0 %2316
      %2318 = vrot.lane.b32.xlu0 %v2177, 64
      %v2319 = vpop.permute.xlu0 %2318
      %2320 = vrot.lane.b32.xlu0 %v2178, 64
      %v2321 = vpop.permute.xlu0 %2320
      %2322 = vrot.lane.b32.xlu0 %v2179, 64
      %v2323 = vpop.permute.xlu0 %2322
      %2324 = vrot.lane.b32.xlu0 %v2180, 64
      %v2325 = vpop.permute.xlu0 %2324
      %2326 = vrot.lane.b32.xlu0 %v2181, 64
      %v2327 = vpop.permute.xlu0 %2326
      %2328 = vrot.lane.b32.xlu0 %v2182, 64
      %v2329 = vpop.permute.xlu0 %2328
      %2330 = vrot.lane.b32.xlu0 %v2183, 64
      %v2331 = vpop.permute.xlu0 %2330
      %2332 = vrot.lane.b32.xlu0 %v2184, 64
      %v2333 = vpop.permute.xlu0 %2332
      %2334 = vrot.lane.b32.xlu0 %v2185, 64
      %v2335 = vpop.permute.xlu0 %2334
      %2336 = vrot.lane.b32.xlu0 %v2186, 64
      %v2337 = vpop.permute.xlu0 %2336
      %2338 = vrot.lane.b32.xlu0 %v2187, 64
      %v2339 = vpop.permute.xlu0 %2338
      %2340 = vrot.lane.b32.xlu0 %v2188, 64
      %v2341 = vpop.permute.xlu0 %2340
      %2342 = vrot.lane.b32.xlu0 %v2189, 64
      %v2343 = vpop.permute.xlu0 %2342
      %2344 = vrot.lane.b32.xlu0 %v2190, 64
      %v2345 = vpop.permute.xlu0 %2344
      %v2346 = vsel %vm877, %v2251, 0
      %v2348 = vsel %vm877, %v2253, 0
      %v2350 = vsel %vm877, %v2255, 0
      %v2352 = vsel %vm877, %v2257, 0
      %v2354 = vsel %vm877, %v2259, 0
      %v2356 = vsel %vm877, %v2261, 0
      %v2358 = vsel %vm877, %v2263, 0
      %v2360 = vsel %vm877, %v2265, 0
      %v2362 = vsel %vm877, %v2267, 0
      %v2364 = vsel %vm877, %v2269, 0
      %v2366 = vsel %vm877, %v2271, 0
      %v2368 = vsel %vm877, %v2273, 0
      %v2370 = vsel %vm877, %v2275, 0
      %v2372 = vsel %vm877, %v2277, 0
      %v2374 = vsel %vm877, %v2279, 0
      %v2376 = vsel %vm877, %v2281, 0
      %v2378 = vsel %vm877, %v2283, 0
      %v2380 = vsel %vm877, %v2285, 0
      %v2382 = vsel %vm877, %v2287, 0
      %v2384 = vsel %vm877, %v2289, 0
      %v2386 = vsel %vm877, %v2291, 0
      %v2388 = vsel %vm877, %v2293, 0
      %v2390 = vsel %vm877, %v2295, 0
      %v2392 = vsel %vm877, %v2297, 0
      %v2394 = vsel %vm877, %v2299, 0
      %v2396 = vsel %vm877, %v2301, 0
      %v2398 = vsel %vm877, %v2303, 0
      %v2400 = vsel %vm877, %v2305, 0
      %v2402 = vsel %vm877, %v2307, 0
      %v2404 = vsel %vm877, %v2309, 0
      %v2406 = vsel %vm877, %v2311, 0
      %v2408 = vsel %vm877, %v2313, 0
      %v2410 = vsel %vm877, %v2315, 0
      %v2412 = vsel %vm877, %v2317, 0
      %v2414 = vsel %vm877, %v2319, 0
      %v2416 = vsel %vm877, %v2321, 0
      %v2418 = vsel %vm877, %v2323, 0
      %v2420 = vsel %vm877, %v2325, 0
      %v2422 = vsel %vm877, %v2327, 0
      %v2424 = vsel %vm877, %v2329, 0
      %v2426 = vsel %vm877, %v2331, 0
      %v2428 = vsel %vm877, %v2333, 0
      %v2430 = vsel %vm877, %v2335, 0
      %v2432 = vsel %vm877, %v2337, 0
      %v2434 = vsel %vm877, %v2339, 0
      %v2436 = vsel %vm877, %v2341, 0
      %v2438 = vsel %vm877, %v2343, 0
      %v2440 = vsel %vm877, %v2345, 0
      %2442 = vmatprep.subr.mxu0 0.0
      %2443 = vmatpush1.msra.mxu0 %v2191
      %2444 = vmatprep.subr.mxu0 0.0
      %2445 = vmatpush1.msra.mxu0 %v2192
      %2446 = vmatprep.subr.mxu0 0.0
      %2447 = vmatpush1.msra.mxu0 %v2193
      %2448 = vmatprep.subr.mxu0 0.0
      %2449 = vmatpush1.msra.mxu0 %v2194
      %2450 = vmatprep.subr.mxu0 0.0
      %2451 = vmatpush1.msra.mxu0 0.0
      %2452 = vmatprep.subr.mxu0 0.0
      %2453 = vmatpush1.msra.mxu0 0.0
      %2454 = vmatprep.subr.mxu0 0.0
      %2455 = vmatpush1.msra.mxu0 0.0
      %2456 = vmatprep.subr.mxu0 0.0
      %2457 = vmatpush1.msra.mxu0 0.0
      %2458 = vmatprep.subr.mxu0 0.0
      %2459 = vmatpush1.msra.mxu0 0.0
      %2460 = vmatprep.subr.mxu0 0.0
      %2461 = vmatpush1.msra.mxu0 0.0
      %2462 = vmatprep.subr.mxu0 0.0
      %2463 = vmatpush1.msra.mxu0 0.0
      %2464 = vmatprep.subr.mxu0 0.0
      %2465 = vmatpush1.msra.mxu0 0.0
      %2466 = vmatprep.subr.mxu0 0.0
      %2467 = vmatpush1.msra.mxu0 0.0
      %2468 = vmatprep.subr.mxu0 0.0
      %2469 = vmatpush1.msra.mxu0 0.0
      %2470 = vmatprep.subr.mxu0 0.0
      %2471 = vmatpush1.msra.mxu0 0.0
      %2472 = vmatprep.subr.mxu0 0.0
      %2473 = vmatpush1.msra.mxu0 0.0
      %2474 = vmatprep.subr.mxu0 0.0
      %2475 = vmatpush1.msra.mxu0 0.0
      %2476 = vmatprep.subr.mxu0 0.0
      %2477 = vmatpush1.msra.mxu0 0.0
      %2478 = vmatprep.subr.mxu0 0.0
      %2479 = vmatpush1.msra.mxu0 0.0
      %2480 = vmatprep.subr.mxu0 0.0
      %2481 = vmatpush1.msra.mxu0 0.0
      %2482 = vmatprep.subr.mxu0 0.0
      %2483 = vmatpush1.msra.mxu0 0.0
      %2484 = vmatprep.subr.mxu0 0.0
      %2485 = vmatpush1.msra.mxu0 0.0
      %2486 = vmatprep.subr.mxu0 0.0
      %2487 = vmatpush1.msra.mxu0 0.0
      %2488 = vmatprep.subr.mxu0 0.0
      %2489 = vmatpush1.msra.mxu0 0.0
      %2490 = vmatprep.subr.mxu0 0.0
      %2491 = vmatpush1.msra.mxu0 0.0
      %2492 = vmatprep.subr.mxu0 0.0
      %2493 = vmatpush1.msra.mxu0 0.0
      %2494 = vmatprep.subr.mxu0 0.0
      %2495 = vmatpush1.msra.mxu0 0.0
      %2496 = vmatprep.subr.mxu0 0.0
      %2497 = vmatpush1.msra.mxu0 0.0
      %2498 = vmatprep.subr.mxu0 0.0
      %2499 = vmatpush1.msra.mxu0 0.0
      %2500 = vmatprep.subr.mxu0 0.0
      %2501 = vmatpush1.msra.mxu0 0.0
      %2502 = vmatprep.subr.mxu0 0.0
      %2503 = vmatpush1.msra.mxu0 0.0
      %2504 = vmatprep.subr.mxu0 0.0
      %2505 = vmatpush1.msra.mxu0 0.0
      %2506 = vmatprep.mubr.f32.mxu0 0.0
      %2507 = vmatmul.mubr.f32.gmra.mrb[0].mxu0 %v2346
      %v2508 = vpop.f32.mrb[0].mxu0
      %v2509 = vadd.f32 %v2200, %v2508
      %v2510 = vpop.f32.mrb[0].mxu0
      %2511 = vmatprep.mubr.f32.mxu0 0.0
      %2512 = vmatmul.mubr.f32.gmra.mrb[0].mxu0 %v2348
      %v2513 = vpop.f32.mrb[0].mxu0
      %v2514 = vadd.f32 %v2200, %v2513
      %v2515 = vpop.f32.mrb[0].mxu0
      %2516 = vmatprep.mubr.f32.mxu0 0.0
      %2517 = vmatmul.mubr.f32.gmra.mrb[0].mxu0 %v2350
      %v2518 = vpop.f32.mrb[0].mxu0
      %v2519 = vadd.f32 %v2200, %v2518
      %v2520 = vpop.f32.mrb[0].mxu0
      %2521 = vmatprep.mubr.f32.mxu0 0.0
      %2522 = vmatmul.mubr.f32.gmra.mrb[0].mxu0 %v2352
      %v2523 = vpop.f32.mrb[0].mxu0
      %v2524 = vadd.f32 %v2200, %v2523
      %v2525 = vpop.f32.mrb[0].mxu0
      %2526 = vmatprep.mubr.f32.mxu0 0.0
      %2527 = vmatmul.mubr.f32.gmra.mrb[0].mxu0 %v2354
      %v2528 = vpop.f32.mrb[0].mxu0
      %v2529 = vadd.f32 %v2200, %v2528
      %v2530 = vpop.f32.mrb[0].mxu0
      %2531 = vmatprep.mubr.f32.mxu0 0.0
      %2532 = vmatmul.mubr.f32.gmra.mrb[0].mxu0 %v2356
      %v2533 = vpop.f32.mrb[0].mxu0
      %v2534 = vadd.f32 %v2200, %v2533
      %v2535 = vpop.f32.mrb[0].mxu0
      %2536 = vmatprep.mubr.f32.mxu0 0.0
      %2537 = vmatmul.mubr.f32.gmra.mrb[0].mxu0 %v2358
      %v2538 = vpop.f32.mrb[0].mxu0
      %v2539 = vadd.f32 %v2200, %v2538
      %v2540 = vpop.f32.mrb[0].mxu0
      %2541 = vmatprep.mubr.f32.mxu0 0.0
      %2542 = vmatmul.mubr.f32.gmra.mrb[0].mxu0 %v2360
      %v2543 = vpop.f32.mrb[0].mxu0
      %v2544 = vadd.f32 %v2200, %v2543
      %v2545 = vpop.f32.mrb[0].mxu0
      %2546 = vmatprep.mubr.f32.mxu0 0.0
      %2547 = vmatmul.mubr.f32.gmra.mrb[0].mxu0 %v2362
      %v2548 = vpop.f32.mrb[0].mxu0
      %v2549 = vadd.f32 %v2200, %v2548
      %v2550 = vpop.f32.mrb[0].mxu0
      %2551 = vmatprep.mubr.f32.mxu0 0.0
      %2552 = vmatmul.mubr.f32.gmra.mrb[0].mxu0 %v2364
      %v2553 = vpop.f32.mrb[0].mxu0
      %v2554 = vadd.f32 %v2200, %v2553
      %v2555 = vpop.f32.mrb[0].mxu0
      %2556 = vmatprep.mubr.f32.mxu0 0.0
      %2557 = vmatmul.mubr.f32.gmra.mrb[0].mxu0 %v2366
      %v2558 = vpop.f32.mrb[0].mxu0
      %v2559 = vadd.f32 %v2200, %v2558
      %v2560 = vpop.f32.mrb[0].mxu0
      %2561 = vmatprep.mubr.f32.mxu0 0.0
      %2562 = vmatmul.mubr.f32.gmra.mrb[0].mxu0 %v2368
      %v2563 = vpop.f32.mrb[0].mxu0
      %v2564 = vadd.f32 %v2200, %v2563
      %v2565 = vpop.f32.mrb[0].mxu0
      %2566 = vmatprep.mubr.f32.mxu0 0.0
      %2567 = vmatmul.mubr.f32.gmra.mrb[0].mxu0 %v2370
      %v2568 = vpop.f32.mrb[0].mxu0
      %v2569 = vadd.f32 %v2200, %v2568
      %v2570 = vpop.f32.mrb[0].mxu0
      %2571 = vmatprep.mubr.f32.mxu0 0.0
      %2572 = vmatmul.mubr.f32.gmra.mrb[0].mxu0 %v2372
      %v2573 = vpop.f32.mrb[0].mxu0
      %v2574 = vadd.f32 %v2200, %v2573
      %v2575 = vpop.f32.mrb[0].mxu0
      %2576 = vmatprep.mubr.f32.mxu0 0.0
      %2577 = vmatmul.mubr.f32.gmra.mrb[0].mxu0 %v2374
      %v2578 = vpop.f32.mrb[0].mxu0
      %v2579 = vadd.f32 %v2200, %v2578
      %v2580 = vpop.f32.mrb[0].mxu0
      %2581 = vmatprep.mubr.f32.mxu0 0.0
      %2582 = vmatmul.mubr.f32.gmra.mrb[0].mxu0 %v2376
      %v2583 = vpop.f32.mrb[0].mxu0
      %v2584 = vadd.f32 %v2200, %v2583
      %v2585 = vpop.f32.mrb[0].mxu0
      %2586 = vmatprep.mubr.f32.mxu0 0.0
      %2587 = vmatmul.mubr.f32.gmra.mrb[0].mxu0 %v2378
      %v2588 = vpop.f32.mrb[0].mxu0
      %v2589 = vadd.f32 %v2200, %v2588
      %v2590 = vpop.f32.mrb[0].mxu0
      %2591 = vmatprep.mubr.f32.mxu0 0.0
      %2592 = vmatmul.mubr.f32.gmra.mrb[0].mxu0 %v2380
      %v2593 = vpop.f32.mrb[0].mxu0
      %v2594 = vadd.f32 %v2200, %v2593
      %v2595 = vpop.f32.mrb[0].mxu0
      %2596 = vmatprep.mubr.f32.mxu0 0.0
      %2597 = vmatmul.mubr.f32.gmra.mrb[0].mxu0 %v2382
      %v2598 = vpop.f32.mrb[0].mxu0
      %v2599 = vadd.f32 %v2200, %v2598
      %v2600 = vpop.f32.mrb[0].mxu0
      %2601 = vmatprep.mubr.f32.mxu0 0.0
      %2602 = vmatmul.mubr.f32.gmra.mrb[0].mxu0 %v2384
      %v2603 = vpop.f32.mrb[0].mxu0
      %v2604 = vadd.f32 %v2200, %v2603
      %v2605 = vpop.f32.mrb[0].mxu0
      %2606 = vmatprep.mubr.f32.mxu0 0.0
      %2607 = vmatmul.mubr.f32.gmra.mrb[0].mxu0 %v2386
      %v2608 = vpop.f32.mrb[0].mxu0
      %v2609 = vadd.f32 %v2200, %v2608
      %v2610 = vpop.f32.mrb[0].mxu0
      %2611 = vmatprep.mubr.f32.mxu0 0.0
      %2612 = vmatmul.mubr.f32.gmra.mrb[0].mxu0 %v2388
      %v2613 = vpop.f32.mrb[0].mxu0
      %v2614 = vadd.f32 %v2200, %v2613
      %v2615 = vpop.f32.mrb[0].mxu0
      %2616 = vmatprep.mubr.f32.mxu0 0.0
      %2617 = vmatmul.mubr.f32.gmra.mrb[0].mxu0 %v2390
      %v2618 = vpop.f32.mrb[0].mxu0
      %v2619 = vadd.f32 %v2200, %v2618
      %v2620 = vpop.f32.mrb[0].mxu0
      %2621 = vmatprep.mubr.f32.mxu0 0.0
      %2622 = vmatmul.mubr.f32.gmra.mrb[0].mxu0 %v2392
      %v2623 = vpop.f32.mrb[0].mxu0
      %v2624 = vadd.f32 %v2200, %v2623
      %v2625 = vpop.f32.mrb[0].mxu0
      %2626 = vmatprep.mubr.f32.mxu0 0.0
      %2627 = vmatmul.mubr.f32.gmra.mrb[0].mxu0 %v2394
      %v2628 = vpop.f32.mrb[0].mxu0
      %v2629 = vadd.f32 %v2200, %v2628
      %v2630 = vpop.f32.mrb[0].mxu0
      %2631 = vmatprep.mubr.f32.mxu0 0.0
      %2632 = vmatmul.mubr.f32.gmra.mrb[0].mxu0 %v2396
      %v2633 = vpop.f32.mrb[0].mxu0
      %v2634 = vadd.f32 %v2200, %v2633
      %v2635 = vpop.f32.mrb[0].mxu0
      %2636 = vmatprep.mubr.f32.mxu0 0.0
      %2637 = vmatmul.mubr.f32.gmra.mrb[0].mxu0 %v2398
      %v2638 = vpop.f32.mrb[0].mxu0
      %v2639 = vadd.f32 %v2200, %v2638
      %v2640 = vpop.f32.mrb[0].mxu0
      %2641 = vmatprep.mubr.f32.mxu0 0.0
      %2642 = vmatmul.mubr.f32.gmra.mrb[0].mxu0 %v2400
      %v2643 = vpop.f32.mrb[0].mxu0
      %v2644 = vadd.f32 %v2200, %v2643
      %v2645 = vpop.f32.mrb[0].mxu0
      %2646 = vmatprep.mubr.f32.mxu0 0.0
      %2647 = vmatmul.mubr.f32.gmra.mrb[0].mxu0 %v2402
      %v2648 = vpop.f32.mrb[0].mxu0
      %v2649 = vadd.f32 %v2200, %v2648
      %v2650 = vpop.f32.mrb[0].mxu0
      %2651 = vmatprep.mubr.f32.mxu0 0.0
      %2652 = vmatmul.mubr.f32.gmra.mrb[0].mxu0 %v2404
      %v2653 = vpop.f32.mrb[0].mxu0
      %v2654 = vadd.f32 %v2200, %v2653
      %v2655 = vpop.f32.mrb[0].mxu0
      %2656 = vmatprep.mubr.f32.mxu0 0.0
      %2657 = vmatmul.mubr.f32.gmra.mrb[0].mxu0 %v2406
      %v2658 = vpop.f32.mrb[0].mxu0
      %v2659 = vadd.f32 %v2200, %v2658
      %v2660 = vpop.f32.mrb[0].mxu0
      %2661 = vmatprep.mubr.f32.mxu0 0.0
      %2662 = vmatmul.mubr.f32.gmra.mrb[0].mxu0 %v2408
      %v2663 = vpop.f32.mrb[0].mxu0
      %v2664 = vadd.f32 %v2200, %v2663
      %v2665 = vpop.f32.mrb[0].mxu0
      %2666 = vmatprep.mubr.f32.mxu0 0.0
      %2667 = vmatmul.mubr.f32.gmra.mrb[0].mxu0 %v2410
      %v2668 = vpop.f32.mrb[0].mxu0
      %v2669 = vadd.f32 %v2200, %v2668
      %v2670 = vpop.f32.mrb[0].mxu0
      %2671 = vmatprep.mubr.f32.mxu0 0.0
      %2672 = vmatmul.mubr.f32.gmra.mrb[0].mxu0 %v2412
      %v2673 = vpop.f32.mrb[0].mxu0
      %v2674 = vadd.f32 %v2200, %v2673
      %v2675 = vpop.f32.mrb[0].mxu0
      %2676 = vmatprep.mubr.f32.mxu0 0.0
      %2677 = vmatmul.mubr.f32.gmra.mrb[0].mxu0 %v2414
      %v2678 = vpop.f32.mrb[0].mxu0
      %v2679 = vadd.f32 %v2200, %v2678
      %v2680 = vpop.f32.mrb[0].mxu0
      %2681 = vmatprep.mubr.f32.mxu0 0.0
      %2682 = vmatmul.mubr.f32.gmra.mrb[0].mxu0 %v2416
      %v2683 = vpop.f32.mrb[0].mxu0
      %v2684 = vadd.f32 %v2200, %v2683
      %v2685 = vpop.f32.mrb[0].mxu0
      %2686 = vmatprep.mubr.f32.mxu0 0.0
      %2687 = vmatmul.mubr.f32.gmra.mrb[0].mxu0 %v2418
      %v2688 = vpop.f32.mrb[0].mxu0
      %v2689 = vadd.f32 %v2200, %v2688
      %v2690 = vpop.f32.mrb[0].mxu0
      %2691 = vmatprep.mubr.f32.mxu0 0.0
      %2692 = vmatmul.mubr.f32.gmra.mrb[0].mxu0 %v2420
      %v2693 = vpop.f32.mrb[0].mxu0
      %v2694 = vadd.f32 %v2200, %v2693
      %v2695 = vpop.f32.mrb[0].mxu0
      %2696 = vmatprep.mubr.f32.mxu0 0.0
      %2697 = vmatmul.mubr.f32.gmra.mrb[0].mxu0 %v2422
      %v2698 = vpop.f32.mrb[0].mxu0
      %v2699 = vadd.f32 %v2200, %v2698
      %v2700 = vpop.f32.mrb[0].mxu0
      %2701 = vmatprep.mubr.f32.mxu0 0.0
      %2702 = vmatmul.mubr.f32.gmra.mrb[0].mxu0 %v2424
      %v2703 = vpop.f32.mrb[0].mxu0
      %v2704 = vadd.f32 %v2200, %v2703
      %v2705 = vpop.f32.mrb[0].mxu0
      %2706 = vmatprep.mubr.f32.mxu0 0.0
      %2707 = vmatmul.mubr.f32.gmra.mrb[0].mxu0 %v2426
      %v2708 = vpop.f32.mrb[0].mxu0
      %v2709 = vadd.f32 %v2200, %v2708
      %v2710 = vpop.f32.mrb[0].mxu0
      %2711 = vmatprep.mubr.f32.mxu0 0.0
      %2712 = vmatmul.mubr.f32.gmra.mrb[0].mxu0 %v2428
      %v2713 = vpop.f32.mrb[0].mxu0
      %v2714 = vadd.f32 %v2200, %v2713
      %v2715 = vpop.f32.mrb[0].mxu0
      %2716 = vmatprep.mubr.f32.mxu0 0.0
      %2717 = vmatmul.mubr.f32.gmra.mrb[0].mxu0 %v2430
      %v2718 = vpop.f32.mrb[0].mxu0
      %v2719 = vadd.f32 %v2200, %v2718
      %v2720 = vpop.f32.mrb[0].mxu0
      %2721 = vmatprep.mubr.f32.mxu0 0.0
      %2722 = vmatmul.mubr.f32.gmra.mrb[0].mxu0 %v2432
      %v2723 = vpop.f32.mrb[0].mxu0
      %v2724 = vadd.f32 %v2200, %v2723
      %v2725 = vpop.f32.mrb[0].mxu0
      %2726 = vmatprep.mubr.f32.mxu0 0.0
      %2727 = vmatmul.mubr.f32.gmra.mrb[0].mxu0 %v2434
      %v2728 = vpop.f32.mrb[0].mxu0
      %v2729 = vadd.f32 %v2200, %v2728
      %v2730 = vpop.f32.mrb[0].mxu0
      %2731 = vmatprep.mubr.f32.mxu0 0.0
      %2732 = vmatmul.mubr.f32.gmra.mrb[0].mxu0 %v2436
      %v2733 = vpop.f32.mrb[0].mxu0
      %v2734 = vadd.f32 %v2200, %v2733
      %v2735 = vpop.f32.mrb[0].mxu0
      %2736 = vmatprep.mubr.f32.mxu0 0.0
      %2737 = vmatmul.mubr.f32.gmra.mrb[0].mxu0 %v2438
      %v2738 = vpop.f32.mrb[0].mxu0
      %v2739 = vadd.f32 %v2200, %v2738
      %v2740 = vpop.f32.mrb[0].mxu0
      %2741 = vmatprep.mubr.f32.mxu0 0.0
      %2742 = vmatmul.mubr.f32.gmra.mrb[0].mxu0 %v2440
      %v2743 = vpop.f32.mrb[0].mxu0
      %v2744 = vadd.f32 %v2200, %v2743
      %v2745 = vpop.f32.mrb[0].mxu0
      %2746 = vdwg.mxu0
      %v2747 = vxor.u32 %v2509, 2147483648
      %v2748 = vxor.u32 %v2514, 2147483648
      %v2749 = vxor.u32 %v2519, 2147483648
      %v2750 = vxor.u32 %v2524, 2147483648
      %v2751 = vxor.u32 %v2529, 2147483648
      %v2752 = vxor.u32 %v2534, 2147483648
      %v2753 = vxor.u32 %v2539, 2147483648
      %v2754 = vxor.u32 %v2544, 2147483648
      %v2755 = vxor.u32 %v2549, 2147483648
      %v2756 = vxor.u32 %v2554, 2147483648
      %v2757 = vxor.u32 %v2559, 2147483648
      %v2758 = vxor.u32 %v2564, 2147483648
      %v2759 = vxor.u32 %v2569, 2147483648
      %v2760 = vxor.u32 %v2574, 2147483648
      %v2761 = vxor.u32 %v2579, 2147483648
      %v2762 = vxor.u32 %v2584, 2147483648
      %v2763 = vxor.u32 %v2589, 2147483648
      %v2764 = vxor.u32 %v2594, 2147483648
      %v2765 = vxor.u32 %v2599, 2147483648
      %v2766 = vxor.u32 %v2604, 2147483648
      %v2767 = vxor.u32 %v2609, 2147483648
      %v2768 = vxor.u32 %v2614, 2147483648
      %v2769 = vxor.u32 %v2619, 2147483648
      %v2770 = vxor.u32 %v2624, 2147483648
      %v2771 = vxor.u32 %v2629, 2147483648
      %v2772 = vxor.u32 %v2634, 2147483648
      %v2773 = vxor.u32 %v2639, 2147483648
      %v2774 = vxor.u32 %v2644, 2147483648
      %v2775 = vxor.u32 %v2649, 2147483648
      %v2776 = vxor.u32 %v2654, 2147483648
      %v2777 = vxor.u32 %v2659, 2147483648
      %v2778 = vxor.u32 %v2664, 2147483648
      %v2779 = vxor.u32 %v2669, 2147483648
      %v2780 = vxor.u32 %v2674, 2147483648
      %v2781 = vxor.u32 %v2679, 2147483648
      %v2782 = vxor.u32 %v2684, 2147483648
      %v2783 = vxor.u32 %v2689, 2147483648
      %v2784 = vxor.u32 %v2694, 2147483648
      %v2785 = vxor.u32 %v2699, 2147483648
      %v2786 = vxor.u32 %v2704, 2147483648
      %v2787 = vxor.u32 %v2709, 2147483648
      %v2788 = vxor.u32 %v2714, 2147483648
      %v2789 = vxor.u32 %v2719, 2147483648
      %v2790 = vxor.u32 %v2724, 2147483648
      %v2791 = vxor.u32 %v2729, 2147483648
      %v2792 = vxor.u32 %v2734, 2147483648
      %v2793 = vxor.u32 %v2739, 2147483648
      %v2794 = vxor.u32 %v2744, 2147483648
      %v2795 = vmul.f32 %v2747, 1.442695
      %v2796 = vpow.pop %v2795
      %v2797 = vmul.f32 %v2748, 1.442695
      %v2798 = vpow.pop %v2797
      %v2799 = vmul.f32 %v2749, 1.442695
      %v2800 = vpow.pop %v2799
      %v2801 = vmul.f32 %v2750, 1.442695
      %v2802 = vpow.pop %v2801
      %v2803 = vmul.f32 %v2751, 1.442695
      %v2804 = vpow.pop %v2803
      %v2805 = vmul.f32 %v2752, 1.442695
      %v2806 = vpow.pop %v2805
      %v2807 = vmul.f32 %v2753, 1.442695
      %v2808 = vpow.pop %v2807
      %v2809 = vmul.f32 %v2754, 1.442695
      %v2810 = vpow.pop %v2809
      %v2811 = vmul.f32 %v2755, 1.442695
      %v2812 = vpow.pop %v2811
      %v2813 = vmul.f32 %v2756, 1.442695
      %v2814 = vpow.pop %v2813
      %v2815 = vmul.f32 %v2757, 1.442695
      %v2816 = vpow.pop %v2815
      %v2817 = vmul.f32 %v2758, 1.442695
      %v2818 = vpow.pop %v2817
      %v2819 = vmul.f32 %v2759, 1.442695
      %v2820 = vpow.pop %v2819
      %v2821 = vmul.f32 %v2760, 1.442695
      %v2822 = vpow.pop %v2821
      %v2823 = vmul.f32 %v2761, 1.442695
      %v2824 = vpow.pop %v2823
      %v2825 = vmul.f32 %v2762, 1.442695
      %v2826 = vpow.pop %v2825
      %v2827 = vmul.f32 %v2763, 1.442695
      %v2828 = vpow.pop %v2827
      %v2829 = vmul.f32 %v2764, 1.442695
      %v2830 = vpow.pop %v2829
      %v2831 = vmul.f32 %v2765, 1.442695
      %v2832 = vpow.pop %v2831
      %v2833 = vmul.f32 %v2766, 1.442695
      %v2834 = vpow.pop %v2833
      %v2835 = vmul.f32 %v2767, 1.442695
      %v2836 = vpow.pop %v2835
      %v2837 = vmul.f32 %v2768, 1.442695
      %v2838 = vpow.pop %v2837
      %v2839 = vmul.f32 %v2769, 1.442695
      %v2840 = vpow.pop %v2839
      %v2841 = vmul.f32 %v2770, 1.442695
      %v2842 = vpow.pop %v2841
      %v2843 = vmul.f32 %v2771, 1.442695
      %v2844 = vpow.pop %v2843
      %v2845 = vmul.f32 %v2772, 1.442695
      %v2846 = vpow.pop %v2845
      %v2847 = vmul.f32 %v2773, 1.442695
      %v2848 = vpow.pop %v2847
      %v2849 = vmul.f32 %v2774, 1.442695
      %v2850 = vpow.pop %v2849
      %v2851 = vmul.f32 %v2775, 1.442695
      %v2852 = vpow.pop %v2851
      %v2853 = vmul.f32 %v2776, 1.442695
      %v2854 = vpow.pop %v2853
      %v2855 = vmul.f32 %v2777, 1.442695
      %v2856 = vpow.pop %v2855
      %v2857 = vmul.f32 %v2778, 1.442695
      %v2858 = vpow.pop %v2857
      %v2859 = vmul.f32 %v2779, 1.442695
      %v2860 = vpow.pop %v2859
      %v2861 = vmul.f32 %v2780, 1.442695
      %v2862 = vpow.pop %v2861
      %v2863 = vmul.f32 %v2781, 1.442695
      %v2864 = vpow.pop %v2863
      %v2865 = vmul.f32 %v2782, 1.442695
      %v2866 = vpow.pop %v2865
      %v2867 = vmul.f32 %v2783, 1.442695
      %v2868 = vpow.pop %v2867
      %v2869 = vmul.f32 %v2784, 1.442695
      %v2870 = vpow.pop %v2869
      %v2871 = vmul.f32 %v2785, 1.442695
      %v2872 = vpow.pop %v2871
      %v2873 = vmul.f32 %v2786, 1.442695
      %v2874 = vpow.pop %v2873
      %v2875 = vmul.f32 %v2787, 1.442695
      %v2876 = vpow.pop %v2875
      %v2877 = vmul.f32 %v2788, 1.442695
      %v2878 = vpow.pop %v2877
      %v2879 = vmul.f32 %v2789, 1.442695
      %v2880 = vpow.pop %v2879
      %v2881 = vmul.f32 %v2790, 1.442695
      %v2882 = vpow.pop %v2881
      %v2883 = vmul.f32 %v2791, 1.442695
      %v2884 = vpow.pop %v2883
      %v2885 = vmul.f32 %v2792, 1.442695
      %v2886 = vpow.pop %v2885
      %v2887 = vmul.f32 %v2793, 1.442695
      %v2888 = vpow.pop %v2887
      %v2889 = vmul.f32 %v2794, 1.442695
      %v2890 = vpow.pop %v2889
      %v2891 = vadd.f32 %v2796, 1.0
      %v2892 = vadd.f32 %v2798, 1.0
      %v2893 = vadd.f32 %v2800, 1.0
      %v2894 = vadd.f32 %v2802, 1.0
      %v2895 = vadd.f32 %v2804, 1.0
      %v2896 = vadd.f32 %v2806, 1.0
      %v2897 = vadd.f32 %v2808, 1.0
      %v2898 = vadd.f32 %v2810, 1.0
      %v2899 = vadd.f32 %v2812, 1.0
      %v2900 = vadd.f32 %v2814, 1.0
      %v2901 = vadd.f32 %v2816, 1.0
      %v2902 = vadd.f32 %v2818, 1.0
      %v2903 = vadd.f32 %v2820, 1.0
      %v2904 = vadd.f32 %v2822, 1.0
      %v2905 = vadd.f32 %v2824, 1.0
      %v2906 = vadd.f32 %v2826, 1.0
      %v2907 = vadd.f32 %v2828, 1.0
      %v2908 = vadd.f32 %v2830, 1.0
      %v2909 = vadd.f32 %v2832, 1.0
      %v2910 = vadd.f32 %v2834, 1.0
      %v2911 = vadd.f32 %v2836, 1.0
      %v2912 = vadd.f32 %v2838, 1.0
      %v2913 = vadd.f32 %v2840, 1.0
      %v2914 = vadd.f32 %v2842, 1.0
      %v2915 = vadd.f32 %v2844, 1.0
      %v2916 = vadd.f32 %v2846, 1.0
      %v2917 = vadd.f32 %v2848, 1.0
      %v2918 = vadd.f32 %v2850, 1.0
      %v2919 = vadd.f32 %v2852, 1.0
      %v2920 = vadd.f32 %v2854, 1.0
      %v2921 = vadd.f32 %v2856, 1.0
      %v2922 = vadd.f32 %v2858, 1.0
      %v2923 = vadd.f32 %v2860, 1.0
      %v2924 = vadd.f32 %v2862, 1.0
      %v2925 = vadd.f32 %v2864, 1.0
      %v2926 = vadd.f32 %v2866, 1.0
      %v2927 = vadd.f32 %v2868, 1.0
      %v2928 = vadd.f32 %v2870, 1.0
      %v2929 = vadd.f32 %v2872, 1.0
      %v2930 = vadd.f32 %v2874, 1.0
      %v2931 = vadd.f32 %v2876, 1.0
      %v2932 = vadd.f32 %v2878, 1.0
      %v2933 = vadd.f32 %v2880, 1.0
      %v2934 = vadd.f32 %v2882, 1.0
      %v2935 = vadd.f32 %v2884, 1.0
      %v2936 = vadd.f32 %v2886, 1.0
      %v2937 = vadd.f32 %v2888, 1.0
      %v2938 = vadd.f32 %v2890, 1.0
      %v2939 = vrcp.pop %v2891
      %v2940 = vmul.f32 1.0, %v2939
      %v2941 = vrcp.pop %v2892
      %v2942 = vmul.f32 1.0, %v2941
      %v2943 = vrcp.pop %v2893
      %v2944 = vmul.f32 1.0, %v2943
      %v2945 = vrcp.pop %v2894
      %v2946 = vmul.f32 1.0, %v2945
      %v2947 = vrcp.pop %v2895
      %v2948 = vmul.f32 1.0, %v2947
      %v2949 = vrcp.pop %v2896
      %v2950 = vmul.f32 1.0, %v2949
      %v2951 = vrcp.pop %v2897
      %v2952 = vmul.f32 1.0, %v2951
      %v2953 = vrcp.pop %v2898
      %v2954 = vmul.f32 1.0, %v2953
      %v2955 = vrcp.pop %v2899
      %v2956 = vmul.f32 1.0, %v2955
      %v2957 = vrcp.pop %v2900
      %v2958 = vmul.f32 1.0, %v2957
      %v2959 = vrcp.pop %v2901
      %v2960 = vmul.f32 1.0, %v2959
      %v2961 = vrcp.pop %v2902
      %v2962 = vmul.f32 1.0, %v2961
      %v2963 = vrcp.pop %v2903
      %v2964 = vmul.f32 1.0, %v2963
      %v2965 = vrcp.pop %v2904
      %v2966 = vmul.f32 1.0, %v2965
      %v2967 = vrcp.pop %v2905
      %v2968 = vmul.f32 1.0, %v2967
      %v2969 = vrcp.pop %v2906
      %v2970 = vmul.f32 1.0, %v2969
      %v2971 = vrcp.pop %v2907
      %v2972 = vmul.f32 1.0, %v2971
      %v2973 = vrcp.pop %v2908
      %v2974 = vmul.f32 1.0, %v2973
      %v2975 = vrcp.pop %v2909
      %v2976 = vmul.f32 1.0, %v2975
      %v2977 = vrcp.pop %v2910
      %v2978 = vmul.f32 1.0, %v2977
      %v2979 = vrcp.pop %v2911
      %v2980 = vmul.f32 1.0, %v2979
      %v2981 = vrcp.pop %v2912
      %v2982 = vmul.f32 1.0, %v2981
      %v2983 = vrcp.pop %v2913
      %v2984 = vmul.f32 1.0, %v2983
      %v2985 = vrcp.pop %v2914
      %v2986 = vmul.f32 1.0, %v2985
      %v2987 = vrcp.pop %v2915
      %v2988 = vmul.f32 1.0, %v2987
      %v2989 = vrcp.pop %v2916
      %v2990 = vmul.f32 1.0, %v2989
      %v2991 = vrcp.pop %v2917
      %v2992 = vmul.f32 1.0, %v2991
      %v2993 = vrcp.pop %v2918
      %v2994 = vmul.f32 1.0, %v2993
      %v2995 = vrcp.pop %v2919
      %v2996 = vmul.f32 1.0, %v2995
      %v2997 = vrcp.pop %v2920
      %v2998 = vmul.f32 1.0, %v2997
      %v2999 = vrcp.pop %v2921
      %v3000 = vmul.f32 1.0, %v2999
      %v3001 = vrcp.pop %v2922
      %v3002 = vmul.f32 1.0, %v3001
      %v3003 = vrcp.pop %v2923
      %v3004 = vmul.f32 1.0, %v3003
      %v3005 = vrcp.pop %v2924
      %v3006 = vmul.f32 1.0, %v3005
      %v3007 = vrcp.pop %v2925
      %v3008 = vmul.f32 1.0, %v3007
      %v3009 = vrcp.pop %v2926
      %v3010 = vmul.f32 1.0, %v3009
      %v3011 = vrcp.pop %v2927
      %v3012 = vmul.f32 1.0, %v3011
      %v3013 = vrcp.pop %v2928
      %v3014 = vmul.f32 1.0, %v3013
      %v3015 = vrcp.pop %v2929
      %v3016 = vmul.f32 1.0, %v3015
      %v3017 = vrcp.pop %v2930
      %v3018 = vmul.f32 1.0, %v3017
      %v3019 = vrcp.pop %v2931
      %v3020 = vmul.f32 1.0, %v3019
      %v3021 = vrcp.pop %v2932
      %v3022 = vmul.f32 1.0, %v3021
      %v3023 = vrcp.pop %v2933
      %v3024 = vmul.f32 1.0, %v3023
      %v3025 = vrcp.pop %v2934
      %v3026 = vmul.f32 1.0, %v3025
      %v3027 = vrcp.pop %v2935
      %v3028 = vmul.f32 1.0, %v3027
      %v3029 = vrcp.pop %v2936
      %v3030 = vmul.f32 1.0, %v3029
      %v3031 = vrcp.pop %v2937
      %v3032 = vmul.f32 1.0, %v3031
      %v3033 = vrcp.pop %v2938
      %v3034 = vmul.f32 1.0, %v3033
      %v3035 = vtanh.pop %v2509
      %v3036 = vtanh.pop %v2514
      %v3037 = vtanh.pop %v2519
      %v3038 = vtanh.pop %v2524
      %v3039 = vtanh.pop %v2529
      %v3040 = vtanh.pop %v2534
      %v3041 = vtanh.pop %v2539
      %v3042 = vtanh.pop %v2544
      %v3043 = vtanh.pop %v2549
      %v3044 = vtanh.pop %v2554
      %v3045 = vtanh.pop %v2559
      %v3046 = vtanh.pop %v2564
      %v3047 = vtanh.pop %v2569
      %v3048 = vtanh.pop %v2574
      %v3049 = vtanh.pop %v2579
      %v3050 = vtanh.pop %v2584
      %v3051 = vtanh.pop %v2589
      %v3052 = vtanh.pop %v2594
      %v3053 = vtanh.pop %v2599
      %v3054 = vtanh.pop %v2604
      %v3055 = vtanh.pop %v2609
      %v3056 = vtanh.pop %v2614
      %v3057 = vtanh.pop %v2619
      %v3058 = vtanh.pop %v2624
      %v3059 = vtanh.pop %v2629
      %v3060 = vtanh.pop %v2634
      %v3061 = vtanh.pop %v2639
      %v3062 = vtanh.pop %v2644
      %v3063 = vtanh.pop %v2649
      %v3064 = vtanh.pop %v2654
      %v3065 = vtanh.pop %v2659
      %v3066 = vtanh.pop %v2664
      %v3067 = vtanh.pop %v2669
      %v3068 = vtanh.pop %v2674
      %v3069 = vtanh.pop %v2679
      %v3070 = vtanh.pop %v2684
      %v3071 = vtanh.pop %v2689
      %v3072 = vtanh.pop %v2694
      %v3073 = vtanh.pop %v2699
      %v3074 = vtanh.pop %v2704
      %v3075 = vtanh.pop %v2709
      %v3076 = vtanh.pop %v2714
      %v3077 = vtanh.pop %v2719
      %v3078 = vtanh.pop %v2724
      %v3079 = vtanh.pop %v2729
      %v3080 = vtanh.pop %v2734
      %v3081 = vtanh.pop %v2739
      %v3082 = vtanh.pop %v2744
      %3131 = vrot.lane.b32.xlu0 %v3035, 96
      %v3132 = vpop.permute.xlu0 %3131
      %3133 = vrot.lane.b32.xlu0 %v3036, 96
      %v3134 = vpop.permute.xlu0 %3133
      %3135 = vrot.lane.b32.xlu0 %v3037, 96
      %v3136 = vpop.permute.xlu0 %3135
      %3137 = vrot.lane.b32.xlu0 %v3038, 96
      %v3138 = vpop.permute.xlu0 %3137
      %3139 = vrot.lane.b32.xlu0 %v3039, 96
      %v3140 = vpop.permute.xlu0 %3139
      %3141 = vrot.lane.b32.xlu0 %v3040, 96
      %v3142 = vpop.permute.xlu0 %3141
      %3143 = vrot.lane.b32.xlu0 %v3041, 96
      %v3144 = vpop.permute.xlu0 %3143
      %3145 = vrot.lane.b32.xlu0 %v3042, 96
      %v3146 = vpop.permute.xlu0 %3145
      %3147 = vrot.lane.b32.xlu0 %v3043, 96
      %v3148 = vpop.permute.xlu0 %3147
      %3149 = vrot.lane.b32.xlu0 %v3044, 96
      %v3150 = vpop.permute.xlu0 %3149
      %3151 = vrot.lane.b32.xlu0 %v3045, 96
      %v3152 = vpop.permute.xlu0 %3151
      %3153 = vrot.lane.b32.xlu0 %v3046, 96
      %v3154 = vpop.permute.xlu0 %3153
      %3155 = vrot.lane.b32.xlu0 %v3047, 96
      %v3156 = vpop.permute.xlu0 %3155
      %3157 = vrot.lane.b32.xlu0 %v3048, 96
      %v3158 = vpop.permute.xlu0 %3157
      %3159 = vrot.lane.b32.xlu0 %v3049, 96
      %v3160 = vpop.permute.xlu0 %3159
      %3161 = vrot.lane.b32.xlu0 %v3050, 96
      %v3162 = vpop.permute.xlu0 %3161
      %3163 = vrot.lane.b32.xlu0 %v3051, 96
      %v3164 = vpop.permute.xlu0 %3163
      %3165 = vrot.lane.b32.xlu0 %v3052, 96
      %v3166 = vpop.permute.xlu0 %3165
      %3167 = vrot.lane.b32.xlu0 %v3053, 96
      %v3168 = vpop.permute.xlu0 %3167
      %3169 = vrot.lane.b32.xlu0 %v3054, 96
      %v3170 = vpop.permute.xlu0 %3169
      %3171 = vrot.lane.b32.xlu0 %v3055, 96
      %v3172 = vpop.permute.xlu0 %3171
      %3173 = vrot.lane.b32.xlu0 %v3056, 96
      %v3174 = vpop.permute.xlu0 %3173
      %3175 = vrot.lane.b32.xlu0 %v3057, 96
      %v3176 = vpop.permute.xlu0 %3175
      %3177 = vrot.lane.b32.xlu0 %v3058, 96
      %v3178 = vpop.permute.xlu0 %3177
      %3179 = vrot.lane.b32.xlu0 %v3059, 96
      %v3180 = vpop.permute.xlu0 %3179
      %3181 = vrot.lane.b32.xlu0 %v3060, 96
      %v3182 = vpop.permute.xlu0 %3181
      %3183 = vrot.lane.b32.xlu0 %v3061, 96
      %v3184 = vpop.permute.xlu0 %3183
      %3185 = vrot.lane.b32.xlu0 %v3062, 96
      %v3186 = vpop.permute.xlu0 %3185
      %3187 = vrot.lane.b32.xlu0 %v3063, 96
      %v3188 = vpop.permute.xlu0 %3187
      %3189 = vrot.lane.b32.xlu0 %v3064, 96
      %v3190 = vpop.permute.xlu0 %3189
      %3191 = vrot.lane.b32.xlu0 %v3065, 96
      %v3192 = vpop.permute.xlu0 %3191
      %3193 = vrot.lane.b32.xlu0 %v3066, 96
      %v3194 = vpop.permute.xlu0 %3193
      %3195 = vrot.lane.b32.xlu0 %v3067, 96
      %v3196 = vpop.permute.xlu0 %3195
      %3197 = vrot.lane.b32.xlu0 %v3068, 96
      %v3198 = vpop.permute.xlu0 %3197
      %3199 = vrot.lane.b32.xlu0 %v3069, 96
      %v3200 = vpop.permute.xlu0 %3199
      %3201 = vrot.lane.b32.xlu0 %v3070, 96
      %v3202 = vpop.permute.xlu0 %3201
      %3203 = vrot.lane.b32.xlu0 %v3071, 96
      %v3204 = vpop.permute.xlu0 %3203
      %3205 = vrot.lane.b32.xlu0 %v3072, 96
      %v3206 = vpop.permute.xlu0 %3205
      %3207 = vrot.lane.b32.xlu0 %v3073, 96
      %v3208 = vpop.permute.xlu0 %3207
      %3209 = vrot.lane.b32.xlu0 %v3074, 96
      %v3210 = vpop.permute.xlu0 %3209
      %3211 = vrot.lane.b32.xlu0 %v3075, 96
      %v3212 = vpop.permute.xlu0 %3211
      %3213 = vrot.lane.b32.xlu0 %v3076, 96
      %v3214 = vpop.permute.xlu0 %3213
      %3215 = vrot.lane.b32.xlu0 %v3077, 96
      %v3216 = vpop.permute.xlu0 %3215
      %3217 = vrot.lane.b32.xlu0 %v3078, 96
      %v3218 = vpop.permute.xlu0 %3217
      %3219 = vrot.lane.b32.xlu0 %v3079, 96
      %v3220 = vpop.permute.xlu0 %3219
      %3221 = vrot.lane.b32.xlu0 %v3080, 96
      %v3222 = vpop.permute.xlu0 %3221
      %3223 = vrot.lane.b32.xlu0 %v3081, 96
      %v3224 = vpop.permute.xlu0 %3223
      %3225 = vrot.lane.b32.xlu0 %v3082, 96
      %v3226 = vpop.permute.xlu0 %3225
      %v3275 = vmul.f32 %v2940, %v3132
      %v3276 = vmul.f32 %v2942, %v3134
      %v3277 = vmul.f32 %v2944, %v3136
      %v3278 = vmul.f32 %v2946, %v3138
      %v3279 = vmul.f32 %v2948, %v3140
      %v3280 = vmul.f32 %v2950, %v3142
      %v3281 = vmul.f32 %v2952, %v3144
      %v3282 = vmul.f32 %v2954, %v3146
      %v3283 = vmul.f32 %v2956, %v3148
      %v3284 = vmul.f32 %v2958, %v3150
      %v3285 = vmul.f32 %v2960, %v3152
      %v3286 = vmul.f32 %v2962, %v3154
      %v3287 = vmul.f32 %v2964, %v3156
      %v3288 = vmul.f32 %v2966, %v3158
      %v3289 = vmul.f32 %v2968, %v3160
      %v3290 = vmul.f32 %v2970, %v3162
      %v3291 = vmul.f32 %v2972, %v3164
      %v3292 = vmul.f32 %v2974, %v3166
      %v3293 = vmul.f32 %v2976, %v3168
      %v3294 = vmul.f32 %v2978, %v3170
      %v3295 = vmul.f32 %v2980, %v3172
      %v3296 = vmul.f32 %v2982, %v3174
      %v3297 = vmul.f32 %v2984, %v3176
      %v3298 = vmul.f32 %v2986, %v3178
      %v3299 = vmul.f32 %v2988, %v3180
      %v3300 = vmul.f32 %v2990, %v3182
      %v3301 = vmul.f32 %v2992, %v3184
      %v3302 = vmul.f32 %v2994, %v3186
      %v3303 = vmul.f32 %v2996, %v3188
      %v3304 = vmul.f32 %v2998, %v3190
      %v3305 = vmul.f32 %v3000, %v3192
      %v3306 = vmul.f32 %v3002, %v3194
      %v3307 = vmul.f32 %v3004, %v3196
      %v3308 = vmul.f32 %v3006, %v3198
      %v3309 = vmul.f32 %v3008, %v3200
      %v3310 = vmul.f32 %v3010, %v3202
      %v3311 = vmul.f32 %v3012, %v3204
      %v3312 = vmul.f32 %v3014, %v3206
      %v3313 = vmul.f32 %v3016, %v3208
      %v3314 = vmul.f32 %v3018, %v3210
      %v3315 = vmul.f32 %v3020, %v3212
      %v3316 = vmul.f32 %v3022, %v3214
      %v3317 = vmul.f32 %v3024, %v3216
      %v3318 = vmul.f32 %v3026, %v3218
      %v3319 = vmul.f32 %v3028, %v3220
      %v3320 = vmul.f32 %v3030, %v3222
      %v3321 = vmul.f32 %v3032, %v3224
      %v3322 = vmul.f32 %v3034, %v3226
      %v3323 = vtanh.pop %v3275
      %v3324 = vtanh.pop %v3276
      %v3325 = vtanh.pop %v3277
      %v3326 = vtanh.pop %v3278
      %v3327 = vtanh.pop %v3279
      %v3328 = vtanh.pop %v3280
      %v3329 = vtanh.pop %v3281
      %v3330 = vtanh.pop %v3282
      %v3331 = vtanh.pop %v3283
      %v3332 = vtanh.pop %v3284
      %v3333 = vtanh.pop %v3285
      %v3334 = vtanh.pop %v3286
      %v3335 = vtanh.pop %v3287
      %v3336 = vtanh.pop %v3288
      %v3337 = vtanh.pop %v3289
      %v3338 = vtanh.pop %v3290
      %v3339 = vtanh.pop %v3291
      %v3340 = vtanh.pop %v3292
      %v3341 = vtanh.pop %v3293
      %v3342 = vtanh.pop %v3294
      %v3343 = vtanh.pop %v3295
      %v3344 = vtanh.pop %v3296
      %v3345 = vtanh.pop %v3297
      %v3346 = vtanh.pop %v3298
      %v3347 = vtanh.pop %v3299
      %v3348 = vtanh.pop %v3300
      %v3349 = vtanh.pop %v3301
      %v3350 = vtanh.pop %v3302
      %v3351 = vtanh.pop %v3303
      %v3352 = vtanh.pop %v3304
      %v3353 = vtanh.pop %v3305
      %v3354 = vtanh.pop %v3306
      %v3355 = vtanh.pop %v3307
      %v3356 = vtanh.pop %v3308
      %v3357 = vtanh.pop %v3309
      %v3358 = vtanh.pop %v3310
      %v3359 = vtanh.pop %v3311
      %v3360 = vtanh.pop %v3312
      %v3361 = vtanh.pop %v3313
      %v3362 = vtanh.pop %v3314
      %v3363 = vtanh.pop %v3315
      %v3364 = vtanh.pop %v3316
      %v3365 = vtanh.pop %v3317
      %v3366 = vtanh.pop %v3318
      %v3367 = vtanh.pop %v3319
      %v3368 = vtanh.pop %v3320
      %v3369 = vtanh.pop %v3321
      %v3370 = vtanh.pop %v3322
      %3419 = vrot.lane.b32.xlu0 %v3323, 64
      %v3420 = vpop.permute.xlu0 %3419
      %3421 = vrot.lane.b32.xlu0 %v3324, 64
      %v3422 = vpop.permute.xlu0 %3421
      %3423 = vrot.lane.b32.xlu0 %v3325, 64
      %v3424 = vpop.permute.xlu0 %3423
      %3425 = vrot.lane.b32.xlu0 %v3326, 64
      %v3426 = vpop.permute.xlu0 %3425
      %3427 = vrot.lane.b32.xlu0 %v3327, 64
      %v3428 = vpop.permute.xlu0 %3427
      %3429 = vrot.lane.b32.xlu0 %v3328, 64
      %v3430 = vpop.permute.xlu0 %3429
      %3431 = vrot.lane.b32.xlu0 %v3329, 64
      %v3432 = vpop.permute.xlu0 %3431
      %3433 = vrot.lane.b32.xlu0 %v3330, 64
      %v3434 = vpop.permute.xlu0 %3433
      %3435 = vrot.lane.b32.xlu0 %v3331, 64
      %v3436 = vpop.permute.xlu0 %3435
      %3437 = vrot.lane.b32.xlu0 %v3332, 64
      %v3438 = vpop.permute.xlu0 %3437
      %3439 = vrot.lane.b32.xlu0 %v3333, 64
      %v3440 = vpop.permute.xlu0 %3439
      %3441 = vrot.lane.b32.xlu0 %v3334, 64
      %v3442 = vpop.permute.xlu0 %3441
      %3443 = vrot.lane.b32.xlu0 %v3335, 64
      %v3444 = vpop.permute.xlu0 %3443
      %3445 = vrot.lane.b32.xlu0 %v3336, 64
      %v3446 = vpop.permute.xlu0 %3445
      %3447 = vrot.lane.b32.xlu0 %v3337, 64
      %v3448 = vpop.permute.xlu0 %3447
      %3449 = vrot.lane.b32.xlu0 %v3338, 64
      %v3450 = vpop.permute.xlu0 %3449
      %3451 = vrot.lane.b32.xlu0 %v3339, 64
      %v3452 = vpop.permute.xlu0 %3451
      %3453 = vrot.lane.b32.xlu0 %v3340, 64
      %v3454 = vpop.permute.xlu0 %3453
      %3455 = vrot.lane.b32.xlu0 %v3341, 64
      %v3456 = vpop.permute.xlu0 %3455
      %3457 = vrot.lane.b32.xlu0 %v3342, 64
      %v3458 = vpop.permute.xlu0 %3457
      %3459 = vrot.lane.b32.xlu0 %v3343, 64
      %v3460 = vpop.permute.xlu0 %3459
      %3461 = vrot.lane.b32.xlu0 %v3344, 64
      %v3462 = vpop.permute.xlu0 %3461
      %3463 = vrot.lane.b32.xlu0 %v3345, 64
      %v3464 = vpop.permute.xlu0 %3463
      %3465 = vrot.lane.b32.xlu0 %v3346, 64
      %v3466 = vpop.permute.xlu0 %3465
      %3467 = vrot.lane.b32.xlu0 %v3347, 64
      %v3468 = vpop.permute.xlu0 %3467
      %3469 = vrot.lane.b32.xlu0 %v3348, 64
      %v3470 = vpop.permute.xlu0 %3469
      %3471 = vrot.lane.b32.xlu0 %v3349, 64
      %v3472 = vpop.permute.xlu0 %3471
      %3473 = vrot.lane.b32.xlu0 %v3350, 64
      %v3474 = vpop.permute.xlu0 %3473
      %3475 = vrot.lane.b32.xlu0 %v3351, 64
      %v3476 = vpop.permute.xlu0 %3475
      %3477 = vrot.lane.b32.xlu0 %v3352, 64
      %v3478 = vpop.permute.xlu0 %3477
      %3479 = vrot.lane.b32.xlu0 %v3353, 64
      %v3480 = vpop.permute.xlu0 %3479
      %3481 = vrot.lane.b32.xlu0 %v3354, 64
      %v3482 = vpop.permute.xlu0 %3481
      %3483 = vrot.lane.b32.xlu0 %v3355, 64
      %v3484 = vpop.permute.xlu0 %3483
      %3485 = vrot.lane.b32.xlu0 %v3356, 64
      %v3486 = vpop.permute.xlu0 %3485
      %3487 = vrot.lane.b32.xlu0 %v3357, 64
      %v3488 = vpop.permute.xlu0 %3487
      %3489 = vrot.lane.b32.xlu0 %v3358, 64
      %v3490 = vpop.permute.xlu0 %3489
      %3491 = vrot.lane.b32.xlu0 %v3359, 64
      %v3492 = vpop.permute.xlu0 %3491
      %3493 = vrot.lane.b32.xlu0 %v3360, 64
      %v3494 = vpop.permute.xlu0 %3493
      %3495 = vrot.lane.b32.xlu0 %v3361, 64
      %v3496 = vpop.permute.xlu0 %3495
      %3497 = vrot.lane.b32.xlu0 %v3362, 64
      %v3498 = vpop.permute.xlu0 %3497
      %3499 = vrot.lane.b32.xlu0 %v3363, 64
      %v3500 = vpop.permute.xlu0 %3499
      %3501 = vrot.lane.b32.xlu0 %v3364, 64
      %v3502 = vpop.permute.xlu0 %3501
      %3503 = vrot.lane.b32.xlu0 %v3365, 64
      %v3504 = vpop.permute.xlu0 %3503
      %3505 = vrot.lane.b32.xlu0 %v3366, 64
      %v3506 = vpop.permute.xlu0 %3505
      %3507 = vrot.lane.b32.xlu0 %v3367, 64
      %v3508 = vpop.permute.xlu0 %3507
      %3509 = vrot.lane.b32.xlu0 %v3368, 64
      %v3510 = vpop.permute.xlu0 %3509
      %3511 = vrot.lane.b32.xlu0 %v3369, 64
      %v3512 = vpop.permute.xlu0 %3511
      %3513 = vrot.lane.b32.xlu0 %v3370, 64
      %v3514 = vpop.permute.xlu0 %3513
      %v3563 = vmul.f32 %v2940, %v3420
      %v3564 = vmul.f32 %v2942, %v3422
      %v3565 = vmul.f32 %v2944, %v3424
      %v3566 = vmul.f32 %v2946, %v3426
      %v3567 = vmul.f32 %v2948, %v3428
      %v3568 = vmul.f32 %v2950, %v3430
      %v3569 = vmul.f32 %v2952, %v3432
      %v3570 = vmul.f32 %v2954, %v3434
      %v3571 = vmul.f32 %v2956, %v3436
      %v3572 = vmul.f32 %v2958, %v3438
      %v3573 = vmul.f32 %v2960, %v3440
      %v3574 = vmul.f32 %v2962, %v3442
      %v3575 = vmul.f32 %v2964, %v3444
      %v3576 = vmul.f32 %v2966, %v3446
      %v3577 = vmul.f32 %v2968, %v3448
      %v3578 = vmul.f32 %v2970, %v3450
      %v3579 = vmul.f32 %v2972, %v3452
      %v3580 = vmul.f32 %v2974, %v3454
      %v3581 = vmul.f32 %v2976, %v3456
      %v3582 = vmul.f32 %v2978, %v3458
      %v3583 = vmul.f32 %v2980, %v3460
      %v3584 = vmul.f32 %v2982, %v3462
      %v3585 = vmul.f32 %v2984, %v3464
      %v3586 = vmul.f32 %v2986, %v3466
      %v3587 = vmul.f32 %v2988, %v3468
      %v3588 = vmul.f32 %v2990, %v3470
      %v3589 = vmul.f32 %v2992, %v3472
      %v3590 = vmul.f32 %v2994, %v3474
      %v3591 = vmul.f32 %v2996, %v3476
      %v3592 = vmul.f32 %v2998, %v3478
      %v3593 = vmul.f32 %v3000, %v3480
      %v3594 = vmul.f32 %v3002, %v3482
      %v3595 = vmul.f32 %v3004, %v3484
      %v3596 = vmul.f32 %v3006, %v3486
      %v3597 = vmul.f32 %v3008, %v3488
      %v3598 = vmul.f32 %v3010, %v3490
      %v3599 = vmul.f32 %v3012, %v3492
      %v3600 = vmul.f32 %v3014, %v3494
      %v3601 = vmul.f32 %v3016, %v3496
      %v3602 = vmul.f32 %v3018, %v3498
      %v3603 = vmul.f32 %v3020, %v3500
      %v3604 = vmul.f32 %v3022, %v3502
      %v3605 = vmul.f32 %v3024, %v3504
      %v3606 = vmul.f32 %v3026, %v3506
      %v3607 = vmul.f32 %v3028, %v3508
      %v3608 = vmul.f32 %v3030, %v3510
      %v3609 = vmul.f32 %v3032, %v3512
      %v3610 = vmul.f32 %v3034, %v3514
      %v3611 = vld [vmem:[%s7] sm:$0xff]
      %v3612 = vld [vmem:[%s7 + $0x8] sm:$0xff]
      %v3613 = vld [vmem:[%s7 + $0x10] sm:$0xff]
      %v3614 = vld [vmem:[%s7 + $0x18] sm:$0xff]
      %v3615 = vld [vmem:[%s8] sm:$0x1]
      %v3617 = vlaneseq
      %v3618 = vshrl.u32 %v3617, 7
      %v3619 = vsub.s32 0, %v3618
      %v3620 = vrot.slane %v3615, %v3619
      %3670 = vrot.lane.b32.xlu0 %v3563, 64
      %v3671 = vpop.permute.xlu0 %3670
      %3672 = vrot.lane.b32.xlu0 %v3564, 64
      %v3673 = vpop.permute.xlu0 %3672
      %3674 = vrot.lane.b32.xlu0 %v3565, 64
      %v3675 = vpop.permute.xlu0 %3674
      %3676 = vrot.lane.b32.xlu0 %v3566, 64
      %v3677 = vpop.permute.xlu0 %3676
      %3678 = vrot.lane.b32.xlu0 %v3567, 64
      %v3679 = vpop.permute.xlu0 %3678
      %3680 = vrot.lane.b32.xlu0 %v3568, 64
      %v3681 = vpop.permute.xlu0 %3680
      %3682 = vrot.lane.b32.xlu0 %v3569, 64
      %v3683 = vpop.permute.xlu0 %3682
      %3684 = vrot.lane.b32.xlu0 %v3570, 64
      %v3685 = vpop.permute.xlu0 %3684
      %3686 = vrot.lane.b32.xlu0 %v3571, 64
      %v3687 = vpop.permute.xlu0 %3686
      %3688 = vrot.lane.b32.xlu0 %v3572, 64
      %v3689 = vpop.permute.xlu0 %3688
      %3690 = vrot.lane.b32.xlu0 %v3573, 64
      %v3691 = vpop.permute.xlu0 %3690
      %3692 = vrot.lane.b32.xlu0 %v3574, 64
      %v3693 = vpop.permute.xlu0 %3692
      %3694 = vrot.lane.b32.xlu0 %v3575, 64
      %v3695 = vpop.permute.xlu0 %3694
      %3696 = vrot.lane.b32.xlu0 %v3576, 64
      %v3697 = vpop.permute.xlu0 %3696
      %3698 = vrot.lane.b32.xlu0 %v3577, 64
      %v3699 = vpop.permute.xlu0 %3698
      %3700 = vrot.lane.b32.xlu0 %v3578, 64
      %v3701 = vpop.permute.xlu0 %3700
      %3702 = vrot.lane.b32.xlu0 %v3579, 64
      %v3703 = vpop.permute.xlu0 %3702
      %3704 = vrot.lane.b32.xlu0 %v3580, 64
      %v3705 = vpop.permute.xlu0 %3704
      %3706 = vrot.lane.b32.xlu0 %v3581, 64
      %v3707 = vpop.permute.xlu0 %3706
      %3708 = vrot.lane.b32.xlu0 %v3582, 64
      %v3709 = vpop.permute.xlu0 %3708
      %3710 = vrot.lane.b32.xlu0 %v3583, 64
      %v3711 = vpop.permute.xlu0 %3710
      %3712 = vrot.lane.b32.xlu0 %v3584, 64
      %v3713 = vpop.permute.xlu0 %3712
      %3714 = vrot.lane.b32.xlu0 %v3585, 64
      %v3715 = vpop.permute.xlu0 %3714
      %3716 = vrot.lane.b32.xlu0 %v3586, 64
      %v3717 = vpop.permute.xlu0 %3716
      %3718 = vrot.lane.b32.xlu0 %v3587, 64
      %v3719 = vpop.permute.xlu0 %3718
      %3720 = vrot.lane.b32.xlu0 %v3588, 64
      %v3721 = vpop.permute.xlu0 %3720
      %3722 = vrot.lane.b32.xlu0 %v3589, 64
      %v3723 = vpop.permute.xlu0 %3722
      %3724 = vrot.lane.b32.xlu0 %v3590, 64
      %v3725 = vpop.permute.xlu0 %3724
      %3726 = vrot.lane.b32.xlu0 %v3591, 64
      %v3727 = vpop.permute.xlu0 %3726
      %3728 = vrot.lane.b32.xlu0 %v3592, 64
      %v3729 = vpop.permute.xlu0 %3728
      %3730 = vrot.lane.b32.xlu0 %v3593, 64
      %v3731 = vpop.permute.xlu0 %3730
      %3732 = vrot.lane.b32.xlu0 %v3594, 64
      %v3733 = vpop.permute.xlu0 %3732
      %3734 = vrot.lane.b32.xlu0 %v3595, 64
      %v3735 = vpop.permute.xlu0 %3734
      %3736 = vrot.lane.b32.xlu0 %v3596, 64
      %v3737 = vpop.permute.xlu0 %3736
      %3738 = vrot.lane.b32.xlu0 %v3597, 64
      %v3739 = vpop.permute.xlu0 %3738
      %3740 = vrot.lane.b32.xlu0 %v3598, 64
      %v3741 = vpop.permute.xlu0 %3740
      %3742 = vrot.lane.b32.xlu0 %v3599, 64
      %v3743 = vpop.permute.xlu0 %3742
      %3744 = vrot.lane.b32.xlu0 %v3600, 64
      %v3745 = vpop.permute.xlu0 %3744
      %3746 = vrot.lane.b32.xlu0 %v3601, 64
      %v3747 = vpop.permute.xlu0 %3746
      %3748 = vrot.lane.b32.xlu0 %v3602, 64
      %v3749 = vpop.permute.xlu0 %3748
      %3750 = vrot.lane.b32.xlu0 %v3603, 64
      %v3751 = vpop.permute.xlu0 %3750
      %3752 = vrot.lane.b32.xlu0 %v3604, 64
      %v3753 = vpop.permute.xlu0 %3752
      %3754 = vrot.lane.b32.xlu0 %v3605, 64
      %v3755 = vpop.permute.xlu0 %3754
      %3756 = vrot.lane.b32.xlu0 %v3606, 64
      %v3757 = vpop.permute.xlu0 %3756
      %3758 = vrot.lane.b32.xlu0 %v3607, 64
      %v3759 = vpop.permute.xlu0 %3758
      %3760 = vrot.lane.b32.xlu0 %v3608, 64
      %v3761 = vpop.permute.xlu0 %3760
      %3762 = vrot.lane.b32.xlu0 %v3609, 64
      %v3763 = vpop.permute.xlu0 %3762
      %3764 = vrot.lane.b32.xlu0 %v3610, 64
      %v3765 = vpop.permute.xlu0 %3764
      %v3766 = vsel %vm877, %v3671, 0
      %v3768 = vsel %vm877, %v3673, 0
      %v3770 = vsel %vm877, %v3675, 0
      %v3772 = vsel %vm877, %v3677, 0
      %v3774 = vsel %vm877, %v3679, 0
      %v3776 = vsel %vm877, %v3681, 0
      %v3778 = vsel %vm877, %v3683, 0
      %v3780 = vsel %vm877, %v3685, 0
      %v3782 = vsel %vm877, %v3687, 0
      %v3784 = vsel %vm877, %v3689, 0
      %v3786 = vsel %vm877, %v3691, 0
      %v3788 = vsel %vm877, %v3693, 0
      %v3790 = vsel %vm877, %v3695, 0
      %v3792 = vsel %vm877, %v3697, 0
      %v3794 = vsel %vm877, %v3699, 0
      %v3796 = vsel %vm877, %v3701, 0
      %v3798 = vsel %vm877, %v3703, 0
      %v3800 = vsel %vm877, %v3705, 0
      %v3802 = vsel %vm877, %v3707, 0
      %v3804 = vsel %vm877, %v3709, 0
      %v3806 = vsel %vm877, %v3711, 0
      %v3808 = vsel %vm877, %v3713, 0
      %v3810 = vsel %vm877, %v3715, 0
      %v3812 = vsel %vm877, %v3717, 0
      %v3814 = vsel %vm877, %v3719, 0
      %v3816 = vsel %vm877, %v3721, 0
      %v3818 = vsel %vm877, %v3723, 0
      %v3820 = vsel %vm877, %v3725, 0
      %v3822 = vsel %vm877, %v3727, 0
      %v3824 = vsel %vm877, %v3729, 0
      %v3826 = vsel %vm877, %v3731, 0
      %v3828 = vsel %vm877, %v3733, 0
      %v3830 = vsel %vm877, %v3735, 0
      %v3832 = vsel %vm877, %v3737, 0
      %v3834 = vsel %vm877, %v3739, 0
      %v3836 = vsel %vm877, %v3741, 0
      %v3838 = vsel %vm877, %v3743, 0
      %v3840 = vsel %vm877, %v3745, 0
      %v3842 = vsel %vm877, %v3747, 0
      %v3844 = vsel %vm877, %v3749, 0
      %v3846 = vsel %vm877, %v3751, 0
      %v3848 = vsel %vm877, %v3753, 0
      %v3850 = vsel %vm877, %v3755, 0
      %v3852 = vsel %vm877, %v3757, 0
      %v3854 = vsel %vm877, %v3759, 0
      %v3856 = vsel %vm877, %v3761, 0
      %v3858 = vsel %vm877, %v3763, 0
      %v3860 = vsel %vm877, %v3765, 0
      %3862 = vmatprep.subr.mxu0 0.0
      %3863 = vmatpush1.msra.mxu0 %v3611
      %3864 = vmatprep.subr.mxu0 0.0
      %3865 = vmatpush1.msra.mxu0 %v3612
      %3866 = vmatprep.subr.mxu0 0.0
      %3867 = vmatpush1.msra.mxu0 %v3613
      %3868 = vmatprep.subr.mxu0 0.0
      %3869 = vmatpush1.msra.mxu0 %v3614
      %3870 = vmatprep.subr.mxu0 0.0
      %3871 = vmatpush1.msra.mxu0 0.0
      %3872 = vmatprep.subr.mxu0 0.0
      %3873 = vmatpush1.msra.mxu0 0.0
      %3874 = vmatprep.subr.mxu0 0.0
      %3875 = vmatpush1.msra.mxu0 0.0
      %3876 = vmatprep.subr.mxu0 0.0
      %3877 = vmatpush1.msra.mxu0 0.0
      %3878 = vmatprep.subr.mxu0 0.0
      %3879 = vmatpush1.msra.mxu0 0.0
      %3880 = vmatprep.subr.mxu0 0.0
      %3881 = vmatpush1.msra.mxu0 0.0
      %3882 = vmatprep.subr.mxu0 0.0
      %3883 = vmatpush1.msra.mxu0 0.0
      %3884 = vmatprep.subr.mxu0 0.0
      %3885 = vmatpush1.msra.mxu0 0.0
      %3886 = vmatprep.subr.mxu0 0.0
      %3887 = vmatpush1.msra.mxu0 0.0
      %3888 = vmatprep.subr.mxu0 0.0
      %3889 = vmatpush1.msra.mxu0 0.0
      %3890 = vmatprep.subr.mxu0 0.0
      %3891 = vmatpush1.msra.mxu0 0.0
      %3892 = vmatprep.subr.mxu0 0.0
      %3893 = vmatpush1.msra.mxu0 0.0
      %3894 = vmatprep.subr.mxu0 0.0
      %3895 = vmatpush1.msra.mxu0 0.0
      %3896 = vmatprep.subr.mxu0 0.0
      %3897 = vmatpush1.msra.mxu0 0.0
      %3898 = vmatprep.subr.mxu0 0.0
      %3899 = vmatpush1.msra.mxu0 0.0
      %3900 = vmatprep.subr.mxu0 0.0
      %3901 = vmatpush1.msra.mxu0 0.0
      %3902 = vmatprep.subr.mxu0 0.0
      %3903 = vmatpush1.msra.mxu0 0.0
      %3904 = vmatprep.subr.mxu0 0.0
      %3905 = vmatpush1.msra.mxu0 0.0
      %3906 = vmatprep.subr.mxu0 0.0
      %3907 = vmatpush1.msra.mxu0 0.0
      %3908 = vmatprep.subr.mxu0 0.0
      %3909 = vmatpush1.msra.mxu0 0.0
      %3910 = vmatprep.subr.mxu0 0.0
      %3911 = vmatpush1.msra.mxu0 0.0
      %3912 = vmatprep.subr.mxu0 0.0
      %3913 = vmatpush1.msra.mxu0 0.0
      %3914 = vmatprep.subr.mxu0 0.0
      %3915 = vmatpush1.msra.mxu0 0.0
      %3916 = vmatprep.subr.mxu0 0.0
      %3917 = vmatpush1.msra.mxu0 0.0
      %3918 = vmatprep.subr.mxu0 0.0
      %3919 = vmatpush1.msra.mxu0 0.0
      %3920 = vmatprep.subr.mxu0 0.0
      %3921 = vmatpush1.msra.mxu0 0.0
      %3922 = vmatprep.subr.mxu0 0.0
      %3923 = vmatpush1.msra.mxu0 0.0
      %3924 = vmatprep.subr.mxu0 0.0
      %3925 = vmatpush1.msra.mxu0 0.0
      %3926 = vmatprep.mubr.f32.mxu0 0.0
      %3927 = vmatmul.mubr.f32.gmra.mrb[0].mxu0 %v3766
      %v3928 = vpop.f32.mrb[0].mxu0
      %v3929 = vadd.f32 %v3620, %v3928
      %v3930 = vpop.f32.mrb[0].mxu0
      %3931 = vmatprep.mubr.f32.mxu0 0.0
      %3932 = vmatmul.mubr.f32.gmra.mrb[0].mxu0 %v3768
      %v3933 = vpop.f32.mrb[0].mxu0
      %v3934 = vadd.f32 %v3620, %v3933
      %v3935 = vpop.f32.mrb[0].mxu0
      %3936 = vmatprep.mubr.f32.mxu0 0.0
      %3937 = vmatmul.mubr.f32.gmra.mrb[0].mxu0 %v3770
      %v3938 = vpop.f32.mrb[0].mxu0
      %v3939 = vadd.f32 %v3620, %v3938
      %v3940 = vpop.f32.mrb[0].mxu0
      %3941 = vmatprep.mubr.f32.mxu0 0.0
      %3942 = vmatmul.mubr.f32.gmra.mrb[0].mxu0 %v3772
      %v3943 = vpop.f32.mrb[0].mxu0
      %v3944 = vadd.f32 %v3620, %v3943
      %v3945 = vpop.f32.mrb[0].mxu0
      %3946 = vmatprep.mubr.f32.mxu0 0.0
      %3947 = vmatmul.mubr.f32.gmra.mrb[0].mxu0 %v3774
      %v3948 = vpop.f32.mrb[0].mxu0
      %v3949 = vadd.f32 %v3620, %v3948
      %v3950 = vpop.f32.mrb[0].mxu0
      %3951 = vmatprep.mubr.f32.mxu0 0.0
      %3952 = vmatmul.mubr.f32.gmra.mrb[0].mxu0 %v3776
      %v3953 = vpop.f32.mrb[0].mxu0
      %v3954 = vadd.f32 %v3620, %v3953
      %v3955 = vpop.f32.mrb[0].mxu0
      %3956 = vmatprep.mubr.f32.mxu0 0.0
      %3957 = vmatmul.mubr.f32.gmra.mrb[0].mxu0 %v3778
      %v3958 = vpop.f32.mrb[0].mxu0
      %v3959 = vadd.f32 %v3620, %v3958
      %v3960 = vpop.f32.mrb[0].mxu0
      %3961 = vmatprep.mubr.f32.mxu0 0.0
      %3962 = vmatmul.mubr.f32.gmra.mrb[0].mxu0 %v3780
      %v3963 = vpop.f32.mrb[0].mxu0
      %v3964 = vadd.f32 %v3620, %v3963
      %v3965 = vpop.f32.mrb[0].mxu0
      %3966 = vmatprep.mubr.f32.mxu0 0.0
      %3967 = vmatmul.mubr.f32.gmra.mrb[0].mxu0 %v3782
      %v3968 = vpop.f32.mrb[0].mxu0
      %v3969 = vadd.f32 %v3620, %v3968
      %v3970 = vpop.f32.mrb[0].mxu0
      %3971 = vmatprep.mubr.f32.mxu0 0.0
      %3972 = vmatmul.mubr.f32.gmra.mrb[0].mxu0 %v3784
      %v3973 = vpop.f32.mrb[0].mxu0
      %v3974 = vadd.f32 %v3620, %v3973
      %v3975 = vpop.f32.mrb[0].mxu0
      %3976 = vmatprep.mubr.f32.mxu0 0.0
      %3977 = vmatmul.mubr.f32.gmra.mrb[0].mxu0 %v3786
      %v3978 = vpop.f32.mrb[0].mxu0
      %v3979 = vadd.f32 %v3620, %v3978
      %v3980 = vpop.f32.mrb[0].mxu0
      %3981 = vmatprep.mubr.f32.mxu0 0.0
      %3982 = vmatmul.mubr.f32.gmra.mrb[0].mxu0 %v3788
      %v3983 = vpop.f32.mrb[0].mxu0
      %v3984 = vadd.f32 %v3620, %v3983
      %v3985 = vpop.f32.mrb[0].mxu0
      %3986 = vmatprep.mubr.f32.mxu0 0.0
      %3987 = vmatmul.mubr.f32.gmra.mrb[0].mxu0 %v3790
      %v3988 = vpop.f32.mrb[0].mxu0
      %v3989 = vadd.f32 %v3620, %v3988
      %v3990 = vpop.f32.mrb[0].mxu0
      %3991 = vmatprep.mubr.f32.mxu0 0.0
      %3992 = vmatmul.mubr.f32.gmra.mrb[0].mxu0 %v3792
      %v3993 = vpop.f32.mrb[0].mxu0
      %v3994 = vadd.f32 %v3620, %v3993
      %v3995 = vpop.f32.mrb[0].mxu0
      %3996 = vmatprep.mubr.f32.mxu0 0.0
      %3997 = vmatmul.mubr.f32.gmra.mrb[0].mxu0 %v3794
      %v3998 = vpop.f32.mrb[0].mxu0
      %v3999 = vadd.f32 %v3620, %v3998
      %v4000 = vpop.f32.mrb[0].mxu0
      %4001 = vmatprep.mubr.f32.mxu0 0.0
      %4002 = vmatmul.mubr.f32.gmra.mrb[0].mxu0 %v3796
      %v4003 = vpop.f32.mrb[0].mxu0
      %v4004 = vadd.f32 %v3620, %v4003
      %v4005 = vpop.f32.mrb[0].mxu0
      %4006 = vmatprep.mubr.f32.mxu0 0.0
      %4007 = vmatmul.mubr.f32.gmra.mrb[0].mxu0 %v3798
      %v4008 = vpop.f32.mrb[0].mxu0
      %v4009 = vadd.f32 %v3620, %v4008
      %v4010 = vpop.f32.mrb[0].mxu0
      %4011 = vmatprep.mubr.f32.mxu0 0.0
      %4012 = vmatmul.mubr.f32.gmra.mrb[0].mxu0 %v3800
      %v4013 = vpop.f32.mrb[0].mxu0
      %v4014 = vadd.f32 %v3620, %v4013
      %v4015 = vpop.f32.mrb[0].mxu0
      %4016 = vmatprep.mubr.f32.mxu0 0.0
      %4017 = vmatmul.mubr.f32.gmra.mrb[0].mxu0 %v3802
      %v4018 = vpop.f32.mrb[0].mxu0
      %v4019 = vadd.f32 %v3620, %v4018
      %v4020 = vpop.f32.mrb[0].mxu0
      %4021 = vmatprep.mubr.f32.mxu0 0.0
      %4022 = vmatmul.mubr.f32.gmra.mrb[0].mxu0 %v3804
      %v4023 = vpop.f32.mrb[0].mxu0
      %v4024 = vadd.f32 %v3620, %v4023
      %v4025 = vpop.f32.mrb[0].mxu0
      %4026 = vmatprep.mubr.f32.mxu0 0.0
      %4027 = vmatmul.mubr.f32.gmra.mrb[0].mxu0 %v3806
      %v4028 = vpop.f32.mrb[0].mxu0
      %v4029 = vadd.f32 %v3620, %v4028
      %v4030 = vpop.f32.mrb[0].mxu0
      %4031 = vmatprep.mubr.f32.mxu0 0.0
      %4032 = vmatmul.mubr.f32.gmra.mrb[0].mxu0 %v3808
      %v4033 = vpop.f32.mrb[0].mxu0
      %v4034 = vadd.f32 %v3620, %v4033
      %v4035 = vpop.f32.mrb[0].mxu0
      %4036 = vmatprep.mubr.f32.mxu0 0.0
      %4037 = vmatmul.mubr.f32.gmra.mrb[0].mxu0 %v3810
      %v4038 = vpop.f32.mrb[0].mxu0
      %v4039 = vadd.f32 %v3620, %v4038
      %v4040 = vpop.f32.mrb[0].mxu0
      %4041 = vmatprep.mubr.f32.mxu0 0.0
      %4042 = vmatmul.mubr.f32.gmra.mrb[0].mxu0 %v3812
      %v4043 = vpop.f32.mrb[0].mxu0
      %v4044 = vadd.f32 %v3620, %v4043
      %v4045 = vpop.f32.mrb[0].mxu0
      %4046 = vmatprep.mubr.f32.mxu0 0.0
      %4047 = vmatmul.mubr.f32.gmra.mrb[0].mxu0 %v3814
      %v4048 = vpop.f32.mrb[0].mxu0
      %v4049 = vadd.f32 %v3620, %v4048
      %v4050 = vpop.f32.mrb[0].mxu0
      %4051 = vmatprep.mubr.f32.mxu0 0.0
      %4052 = vmatmul.mubr.f32.gmra.mrb[0].mxu0 %v3816
      %v4053 = vpop.f32.mrb[0].mxu0
      %v4054 = vadd.f32 %v3620, %v4053
      %v4055 = vpop.f32.mrb[0].mxu0
      %4056 = vmatprep.mubr.f32.mxu0 0.0
      %4057 = vmatmul.mubr.f32.gmra.mrb[0].mxu0 %v3818
      %v4058 = vpop.f32.mrb[0].mxu0
      %v4059 = vadd.f32 %v3620, %v4058
      %v4060 = vpop.f32.mrb[0].mxu0
      %4061 = vmatprep.mubr.f32.mxu0 0.0
      %4062 = vmatmul.mubr.f32.gmra.mrb[0].mxu0 %v3820
      %v4063 = vpop.f32.mrb[0].mxu0
      %v4064 = vadd.f32 %v3620, %v4063
      %v4065 = vpop.f32.mrb[0].mxu0
      %4066 = vmatprep.mubr.f32.mxu0 0.0
      %4067 = vmatmul.mubr.f32.gmra.mrb[0].mxu0 %v3822
      %v4068 = vpop.f32.mrb[0].mxu0
      %v4069 = vadd.f32 %v3620, %v4068
      %v4070 = vpop.f32.mrb[0].mxu0
      %4071 = vmatprep.mubr.f32.mxu0 0.0
      %4072 = vmatmul.mubr.f32.gmra.mrb[0].mxu0 %v3824
      %v4073 = vpop.f32.mrb[0].mxu0
      %v4074 = vadd.f32 %v3620, %v4073
      %v4075 = vpop.f32.mrb[0].mxu0
      %4076 = vmatprep.mubr.f32.mxu0 0.0
      %4077 = vmatmul.mubr.f32.gmra.mrb[0].mxu0 %v3826
      %v4078 = vpop.f32.mrb[0].mxu0
      %v4079 = vadd.f32 %v3620, %v4078
      %v4080 = vpop.f32.mrb[0].mxu0
      %4081 = vmatprep.mubr.f32.mxu0 0.0
      %4082 = vmatmul.mubr.f32.gmra.mrb[0].mxu0 %v3828
      %v4083 = vpop.f32.mrb[0].mxu0
      %v4084 = vadd.f32 %v3620, %v4083
      %v4085 = vpop.f32.mrb[0].mxu0
      %4086 = vmatprep.mubr.f32.mxu0 0.0
      %4087 = vmatmul.mubr.f32.gmra.mrb[0].mxu0 %v3830
      %v4088 = vpop.f32.mrb[0].mxu0
      %v4089 = vadd.f32 %v3620, %v4088
      %v4090 = vpop.f32.mrb[0].mxu0
      %4091 = vmatprep.mubr.f32.mxu0 0.0
      %4092 = vmatmul.mubr.f32.gmra.mrb[0].mxu0 %v3832
      %v4093 = vpop.f32.mrb[0].mxu0
      %v4094 = vadd.f32 %v3620, %v4093
      %v4095 = vpop.f32.mrb[0].mxu0
      %4096 = vmatprep.mubr.f32.mxu0 0.0
      %4097 = vmatmul.mubr.f32.gmra.mrb[0].mxu0 %v3834
      %v4098 = vpop.f32.mrb[0].mxu0
      %v4099 = vadd.f32 %v3620, %v4098
      %v4100 = vpop.f32.mrb[0].mxu0
      %4101 = vmatprep.mubr.f32.mxu0 0.0
      %4102 = vmatmul.mubr.f32.gmra.mrb[0].mxu0 %v3836
      %v4103 = vpop.f32.mrb[0].mxu0
      %v4104 = vadd.f32 %v3620, %v4103
      %v4105 = vpop.f32.mrb[0].mxu0
      %4106 = vmatprep.mubr.f32.mxu0 0.0
      %4107 = vmatmul.mubr.f32.gmra.mrb[0].mxu0 %v3838
      %v4108 = vpop.f32.mrb[0].mxu0
      %v4109 = vadd.f32 %v3620, %v4108
      %v4110 = vpop.f32.mrb[0].mxu0
      %4111 = vmatprep.mubr.f32.mxu0 0.0
      %4112 = vmatmul.mubr.f32.gmra.mrb[0].mxu0 %v3840
      %v4113 = vpop.f32.mrb[0].mxu0
      %v4114 = vadd.f32 %v3620, %v4113
      %v4115 = vpop.f32.mrb[0].mxu0
      %4116 = vmatprep.mubr.f32.mxu0 0.0
      %4117 = vmatmul.mubr.f32.gmra.mrb[0].mxu0 %v3842
      %v4118 = vpop.f32.mrb[0].mxu0
      %v4119 = vadd.f32 %v3620, %v4118
      %v4120 = vpop.f32.mrb[0].mxu0
      %4121 = vmatprep.mubr.f32.mxu0 0.0
      %4122 = vmatmul.mubr.f32.gmra.mrb[0].mxu0 %v3844
      %v4123 = vpop.f32.mrb[0].mxu0
      %v4124 = vadd.f32 %v3620, %v4123
      %v4125 = vpop.f32.mrb[0].mxu0
      %4126 = vmatprep.mubr.f32.mxu0 0.0
      %4127 = vmatmul.mubr.f32.gmra.mrb[0].mxu0 %v3846
      %v4128 = vpop.f32.mrb[0].mxu0
      %v4129 = vadd.f32 %v3620, %v4128
      %v4130 = vpop.f32.mrb[0].mxu0
      %4131 = vmatprep.mubr.f32.mxu0 0.0
      %4132 = vmatmul.mubr.f32.gmra.mrb[0].mxu0 %v3848
      %v4133 = vpop.f32.mrb[0].mxu0
      %v4134 = vadd.f32 %v3620, %v4133
      %v4135 = vpop.f32.mrb[0].mxu0
      %4136 = vmatprep.mubr.f32.mxu0 0.0
      %4137 = vmatmul.mubr.f32.gmra.mrb[0].mxu0 %v3850
      %v4138 = vpop.f32.mrb[0].mxu0
      %v4139 = vadd.f32 %v3620, %v4138
      %v4140 = vpop.f32.mrb[0].mxu0
      %4141 = vmatprep.mubr.f32.mxu0 0.0
      %4142 = vmatmul.mubr.f32.gmra.mrb[0].mxu0 %v3852
      %v4143 = vpop.f32.mrb[0].mxu0
      %v4144 = vadd.f32 %v3620, %v4143
      %v4145 = vpop.f32.mrb[0].mxu0
      %4146 = vmatprep.mubr.f32.mxu0 0.0
      %4147 = vmatmul.mubr.f32.gmra.mrb[0].mxu0 %v3854
      %v4148 = vpop.f32.mrb[0].mxu0
      %v4149 = vadd.f32 %v3620, %v4148
      %v4150 = vpop.f32.mrb[0].mxu0
      %4151 = vmatprep.mubr.f32.mxu0 0.0
      %4152 = vmatmul.mubr.f32.gmra.mrb[0].mxu0 %v3856
      %v4153 = vpop.f32.mrb[0].mxu0
      %v4154 = vadd.f32 %v3620, %v4153
      %v4155 = vpop.f32.mrb[0].mxu0
      %4156 = vmatprep.mubr.f32.mxu0 0.0
      %4157 = vmatmul.mubr.f32.gmra.mrb[0].mxu0 %v3858
      %v4158 = vpop.f32.mrb[0].mxu0
      %v4159 = vadd.f32 %v3620, %v4158
      %v4160 = vpop.f32.mrb[0].mxu0
      %4161 = vmatprep.mubr.f32.mxu0 0.0
      %4162 = vmatmul.mubr.f32.gmra.mrb[0].mxu0 %v3860
      %v4163 = vpop.f32.mrb[0].mxu0
      %v4164 = vadd.f32 %v3620, %v4163
      %v4165 = vpop.f32.mrb[0].mxu0
      %4166 = vdwg.mxu0
      %v4167 = vmax.f32 %v3929, 0.0
      %v4168 = vmax.f32 %v3934, 0.0
      %v4169 = vmax.f32 %v3939, 0.0
      %v4170 = vmax.f32 %v3944, 0.0
      %v4171 = vmax.f32 %v3949, 0.0
      %v4172 = vmax.f32 %v3954, 0.0
      %v4173 = vmax.f32 %v3959, 0.0
      %v4174 = vmax.f32 %v3964, 0.0
      %v4175 = vmax.f32 %v3969, 0.0
      %v4176 = vmax.f32 %v3974, 0.0
      %v4177 = vmax.f32 %v3979, 0.0
      %v4178 = vmax.f32 %v3984, 0.0
      %v4179 = vmax.f32 %v3989, 0.0
      %v4180 = vmax.f32 %v3994, 0.0
      %v4181 = vmax.f32 %v3999, 0.0
      %v4182 = vmax.f32 %v4004, 0.0
      %v4183 = vmax.f32 %v4009, 0.0
      %v4184 = vmax.f32 %v4014, 0.0
      %v4185 = vmax.f32 %v4019, 0.0
      %v4186 = vmax.f32 %v4024, 0.0
      %v4187 = vmax.f32 %v4029, 0.0
      %v4188 = vmax.f32 %v4034, 0.0
      %v4189 = vmax.f32 %v4039, 0.0
      %v4190 = vmax.f32 %v4044, 0.0
      %v4191 = vmax.f32 %v4049, 0.0
      %v4192 = vmax.f32 %v4054, 0.0
      %v4193 = vmax.f32 %v4059, 0.0
      %v4194 = vmax.f32 %v4064, 0.0
      %v4195 = vmax.f32 %v4069, 0.0
      %v4196 = vmax.f32 %v4074, 0.0
      %v4197 = vmax.f32 %v4079, 0.0
      %v4198 = vmax.f32 %v4084, 0.0
      %v4199 = vmax.f32 %v4089, 0.0
      %v4200 = vmax.f32 %v4094, 0.0
      %v4201 = vmax.f32 %v4099, 0.0
      %v4202 = vmax.f32 %v4104, 0.0
      %v4203 = vmax.f32 %v4109, 0.0
      %v4204 = vmax.f32 %v4114, 0.0
      %v4205 = vmax.f32 %v4119, 0.0
      %v4206 = vmax.f32 %v4124, 0.0
      %v4207 = vmax.f32 %v4129, 0.0
      %v4208 = vmax.f32 %v4134, 0.0
      %v4209 = vmax.f32 %v4139, 0.0
      %v4210 = vmax.f32 %v4144, 0.0
      %v4211 = vmax.f32 %v4149, 0.0
      %v4212 = vmax.f32 %v4154, 0.0
      %v4213 = vmax.f32 %v4159, 0.0
      %v4214 = vmax.f32 %v4164, 0.0
      %v4215 = vld [vmem:[%s9] sm:$0x1]
      %v4217 = vlaneseq
      %v4218 = vshrl.u32 %v4217, 7
      %v4219 = vsub.s32 0, %v4218
      %v4220 = vrot.slane %v4215, %v4219
      %v4222 = vmul.f32 %v4167, %v4220
      %v4223 = vmul.f32 %v4168, %v4220
      %v4224 = vmul.f32 %v4169, %v4220
      %v4225 = vmul.f32 %v4170, %v4220
      %v4226 = vmul.f32 %v4171, %v4220
      %v4227 = vmul.f32 %v4172, %v4220
      %v4228 = vmul.f32 %v4173, %v4220
      %v4229 = vmul.f32 %v4174, %v4220
      %v4230 = vmul.f32 %v4175, %v4220
      %v4231 = vmul.f32 %v4176, %v4220
      %v4232 = vmul.f32 %v4177, %v4220
      %v4233 = vmul.f32 %v4178, %v4220
      %v4234 = vmul.f32 %v4179, %v4220
      %v4235 = vmul.f32 %v4180, %v4220
      %v4236 = vmul.f32 %v4181, %v4220
      %v4237 = vmul.f32 %v4182, %v4220
      %v4238 = vmul.f32 %v4183, %v4220
      %v4239 = vmul.f32 %v4184, %v4220
      %v4240 = vmul.f32 %v4185, %v4220
      %v4241 = vmul.f32 %v4186, %v4220
      %v4242 = vmul.f32 %v4187, %v4220
      %v4243 = vmul.f32 %v4188, %v4220
      %v4244 = vmul.f32 %v4189, %v4220
      %v4245 = vmul.f32 %v4190, %v4220
      %v4246 = vmul.f32 %v4191, %v4220
      %v4247 = vmul.f32 %v4192, %v4220
      %v4248 = vmul.f32 %v4193, %v4220
      %v4249 = vmul.f32 %v4194, %v4220
      %v4250 = vmul.f32 %v4195, %v4220
      %v4251 = vmul.f32 %v4196, %v4220
      %v4252 = vmul.f32 %v4197, %v4220
      %v4253 = vmul.f32 %v4198, %v4220
      %v4254 = vmul.f32 %v4199, %v4220
      %v4255 = vmul.f32 %v4200, %v4220
      %v4256 = vmul.f32 %v4201, %v4220
      %v4257 = vmul.f32 %v4202, %v4220
      %v4258 = vmul.f32 %v4203, %v4220
      %v4259 = vmul.f32 %v4204, %v4220
      %v4260 = vmul.f32 %v4205, %v4220
      %v4261 = vmul.f32 %v4206, %v4220
      %v4262 = vmul.f32 %v4207, %v4220
      %v4263 = vmul.f32 %v4208, %v4220
      %v4264 = vmul.f32 %v4209, %v4220
      %v4265 = vmul.f32 %v4210, %v4220
      %v4266 = vmul.f32 %v4211, %v4220
      %v4267 = vmul.f32 %v4212, %v4220
      %v4268 = vmul.f32 %v4213, %v4220
      %v4269 = vmul.f32 %v4214, %v4220
      %vm4270 = vcmask 523264
      %v4271 = vsel %vm4270, %v4222, 0.0
      %4272 = vadd.xlane.f32.xlu0 %v4271
      %v4273 = vpop.xlane.xlu0 %4272
      %v4274 = vsel %vm4270, %v4223, 0.0
      %4275 = vadd.xlane.f32.xlu0 %v4274
      %v4276 = vpop.xlane.xlu0 %4275
      %v4277 = vsel %vm4270, %v4224, 0.0
      %4278 = vadd.xlane.f32.xlu0 %v4277
      %v4279 = vpop.xlane.xlu0 %4278
      %v4280 = vsel %vm4270, %v4225, 0.0
      %4281 = vadd.xlane.f32.xlu0 %v4280
      %v4282 = vpop.xlane.xlu0 %4281
      %v4283 = vsel %vm4270, %v4226, 0.0
      %4284 = vadd.xlane.f32.xlu0 %v4283
      %v4285 = vpop.xlane.xlu0 %4284
      %v4286 = vsel %vm4270, %v4227, 0.0
      %4287 = vadd.xlane.f32.xlu0 %v4286
      %v4288 = vpop.xlane.xlu0 %4287
      %v4289 = vsel %vm4270, %v4228, 0.0
      %4290 = vadd.xlane.f32.xlu0 %v4289
      %v4291 = vpop.xlane.xlu0 %4290
      %v4292 = vsel %vm4270, %v4229, 0.0
      %4293 = vadd.xlane.f32.xlu0 %v4292
      %v4294 = vpop.xlane.xlu0 %4293
      %v4295 = vsel %vm4270, %v4230, 0.0
      %4296 = vadd.xlane.f32.xlu0 %v4295
      %v4297 = vpop.xlane.xlu0 %4296
      %v4298 = vsel %vm4270, %v4231, 0.0
      %4299 = vadd.xlane.f32.xlu0 %v4298
      %v4300 = vpop.xlane.xlu0 %4299
      %v4301 = vsel %vm4270, %v4232, 0.0
      %4302 = vadd.xlane.f32.xlu0 %v4301
      %v4303 = vpop.xlane.xlu0 %4302
      %v4304 = vsel %vm4270, %v4233, 0.0
      %4305 = vadd.xlane.f32.xlu0 %v4304
      %v4306 = vpop.xlane.xlu0 %4305
      %v4307 = vsel %vm4270, %v4234, 0.0
      %4308 = vadd.xlane.f32.xlu0 %v4307
      %v4309 = vpop.xlane.xlu0 %4308
      %v4310 = vsel %vm4270, %v4235, 0.0
      %4311 = vadd.xlane.f32.xlu0 %v4310
      %v4312 = vpop.xlane.xlu0 %4311
      %v4313 = vsel %vm4270, %v4236, 0.0
      %4314 = vadd.xlane.f32.xlu0 %v4313
      %v4315 = vpop.xlane.xlu0 %4314
      %v4316 = vsel %vm4270, %v4237, 0.0
      %4317 = vadd.xlane.f32.xlu0 %v4316
      %v4318 = vpop.xlane.xlu0 %4317
      %v4319 = vsel %vm4270, %v4238, 0.0
      %4320 = vadd.xlane.f32.xlu0 %v4319
      %v4321 = vpop.xlane.xlu0 %4320
      %v4322 = vsel %vm4270, %v4239, 0.0
      %4323 = vadd.xlane.f32.xlu0 %v4322
      %v4324 = vpop.xlane.xlu0 %4323
      %v4325 = vsel %vm4270, %v4240, 0.0
      %4326 = vadd.xlane.f32.xlu0 %v4325
      %v4327 = vpop.xlane.xlu0 %4326
      %v4328 = vsel %vm4270, %v4241, 0.0
      %4329 = vadd.xlane.f32.xlu0 %v4328
      %v4330 = vpop.xlane.xlu0 %4329
      %v4331 = vsel %vm4270, %v4242, 0.0
      %4332 = vadd.xlane.f32.xlu0 %v4331
      %v4333 = vpop.xlane.xlu0 %4332
      %v4334 = vsel %vm4270, %v4243, 0.0
      %4335 = vadd.xlane.f32.xlu0 %v4334
      %v4336 = vpop.xlane.xlu0 %4335
      %v4337 = vsel %vm4270, %v4244, 0.0
      %4338 = vadd.xlane.f32.xlu0 %v4337
      %v4339 = vpop.xlane.xlu0 %4338
      %v4340 = vsel %vm4270, %v4245, 0.0
      %4341 = vadd.xlane.f32.xlu0 %v4340
      %v4342 = vpop.xlane.xlu0 %4341
      %v4343 = vsel %vm4270, %v4246, 0.0
      %4344 = vadd.xlane.f32.xlu0 %v4343
      %v4345 = vpop.xlane.xlu0 %4344
      %v4346 = vsel %vm4270, %v4247, 0.0
      %4347 = vadd.xlane.f32.xlu0 %v4346
      %v4348 = vpop.xlane.xlu0 %4347
      %v4349 = vsel %vm4270, %v4248, 0.0
      %4350 = vadd.xlane.f32.xlu0 %v4349
      %v4351 = vpop.xlane.xlu0 %4350
      %v4352 = vsel %vm4270, %v4249, 0.0
      %4353 = vadd.xlane.f32.xlu0 %v4352
      %v4354 = vpop.xlane.xlu0 %4353
      %v4355 = vsel %vm4270, %v4250, 0.0
      %4356 = vadd.xlane.f32.xlu0 %v4355
      %v4357 = vpop.xlane.xlu0 %4356
      %v4358 = vsel %vm4270, %v4251, 0.0
      %4359 = vadd.xlane.f32.xlu0 %v4358
      %v4360 = vpop.xlane.xlu0 %4359
      %v4361 = vsel %vm4270, %v4252, 0.0
      %4362 = vadd.xlane.f32.xlu0 %v4361
      %v4363 = vpop.xlane.xlu0 %4362
      %v4364 = vsel %vm4270, %v4253, 0.0
      %4365 = vadd.xlane.f32.xlu0 %v4364
      %v4366 = vpop.xlane.xlu0 %4365
      %v4367 = vsel %vm4270, %v4254, 0.0
      %4368 = vadd.xlane.f32.xlu0 %v4367
      %v4369 = vpop.xlane.xlu0 %4368
      %v4370 = vsel %vm4270, %v4255, 0.0
      %4371 = vadd.xlane.f32.xlu0 %v4370
      %v4372 = vpop.xlane.xlu0 %4371
      %v4373 = vsel %vm4270, %v4256, 0.0
      %4374 = vadd.xlane.f32.xlu0 %v4373
      %v4375 = vpop.xlane.xlu0 %4374
      %v4376 = vsel %vm4270, %v4257, 0.0
      %4377 = vadd.xlane.f32.xlu0 %v4376
      %v4378 = vpop.xlane.xlu0 %4377
      %v4379 = vsel %vm4270, %v4258, 0.0
      %4380 = vadd.xlane.f32.xlu0 %v4379
      %v4381 = vpop.xlane.xlu0 %4380
      %v4382 = vsel %vm4270, %v4259, 0.0
      %4383 = vadd.xlane.f32.xlu0 %v4382
      %v4384 = vpop.xlane.xlu0 %4383
      %v4385 = vsel %vm4270, %v4260, 0.0
      %4386 = vadd.xlane.f32.xlu0 %v4385
      %v4387 = vpop.xlane.xlu0 %4386
      %v4388 = vsel %vm4270, %v4261, 0.0
      %4389 = vadd.xlane.f32.xlu0 %v4388
      %v4390 = vpop.xlane.xlu0 %4389
      %v4391 = vsel %vm4270, %v4262, 0.0
      %4392 = vadd.xlane.f32.xlu0 %v4391
      %v4393 = vpop.xlane.xlu0 %4392
      %v4394 = vsel %vm4270, %v4263, 0.0
      %4395 = vadd.xlane.f32.xlu0 %v4394
      %v4396 = vpop.xlane.xlu0 %4395
      %v4397 = vsel %vm4270, %v4264, 0.0
      %4398 = vadd.xlane.f32.xlu0 %v4397
      %v4399 = vpop.xlane.xlu0 %4398
      %v4400 = vsel %vm4270, %v4265, 0.0
      %4401 = vadd.xlane.f32.xlu0 %v4400
      %v4402 = vpop.xlane.xlu0 %4401
      %v4403 = vsel %vm4270, %v4266, 0.0
      %4404 = vadd.xlane.f32.xlu0 %v4403
      %v4405 = vpop.xlane.xlu0 %4404
      %v4406 = vsel %vm4270, %v4267, 0.0
      %4407 = vadd.xlane.f32.xlu0 %v4406
      %v4408 = vpop.xlane.xlu0 %4407
      %v4409 = vsel %vm4270, %v4268, 0.0
      %4410 = vadd.xlane.f32.xlu0 %v4409
      %v4411 = vpop.xlane.xlu0 %4410
      %v4412 = vsel %vm4270, %v4269, 0.0
      %4413 = vadd.xlane.f32.xlu0 %v4412
      %v4414 = vpop.xlane.xlu0 %4413
      %v4415 = vsub.f32 %v487, 1.0
      %v4416 = vsub.f32 %v488, 1.0
      %v4417 = vsub.f32 %v489, 1.0
      %v4418 = vsub.f32 %v490, 1.0
      %v4419 = vsub.f32 %v491, 1.0
      %v4420 = vsub.f32 %v492, 1.0
      %v4421 = vsub.f32 %v493, 1.0
      %v4422 = vsub.f32 %v494, 1.0
      %v4423 = vsub.f32 %v495, 1.0
      %v4424 = vsub.f32 %v496, 1.0
      %v4425 = vsub.f32 %v497, 1.0
      %v4426 = vsub.f32 %v498, 1.0
      %v4427 = vsub.f32 %v499, 1.0
      %v4428 = vsub.f32 %v500, 1.0
      %v4429 = vsub.f32 %v501, 1.0
      %v4430 = vsub.f32 %v502, 1.0
      %v4431 = vsub.f32 %v503, 1.0
      %v4432 = vsub.f32 %v504, 1.0
      %v4433 = vsub.f32 %v505, 1.0
      %v4434 = vsub.f32 %v506, 1.0
      %v4435 = vsub.f32 %v507, 1.0
      %v4436 = vsub.f32 %v508, 1.0
      %v4437 = vsub.f32 %v509, 1.0
      %v4438 = vsub.f32 %v510, 1.0
      %v4439 = vsub.f32 %v511, 1.0
      %v4440 = vsub.f32 %v512, 1.0
      %v4441 = vsub.f32 %v513, 1.0
      %v4442 = vsub.f32 %v514, 1.0
      %v4443 = vsub.f32 %v515, 1.0
      %v4444 = vsub.f32 %v516, 1.0
      %v4445 = vsub.f32 %v517, 1.0
      %v4446 = vsub.f32 %v518, 1.0
      %v4447 = vsub.f32 %v519, 1.0
      %v4448 = vsub.f32 %v520, 1.0
      %v4449 = vsub.f32 %v521, 1.0
      %v4450 = vsub.f32 %v522, 1.0
      %v4451 = vsub.f32 %v523, 1.0
      %v4452 = vsub.f32 %v524, 1.0
      %v4453 = vsub.f32 %v525, 1.0
      %v4454 = vsub.f32 %v526, 1.0
      %v4455 = vsub.f32 %v527, 1.0
      %v4456 = vsub.f32 %v528, 1.0
      %v4457 = vsub.f32 %v529, 1.0
      %v4458 = vsub.f32 %v530, 1.0
      %v4459 = vsub.f32 %v531, 1.0
      %v4460 = vsub.f32 %v532, 1.0
      %v4461 = vsub.f32 %v533, 1.0
      %v4462 = vsub.f32 %v534, 1.0
      %v4463 = vmul.f32 %v4415, 1e+30
      %v4464 = vmul.f32 %v4416, 1e+30
      %v4465 = vmul.f32 %v4417, 1e+30
      %v4466 = vmul.f32 %v4418, 1e+30
      %v4467 = vmul.f32 %v4419, 1e+30
      %v4468 = vmul.f32 %v4420, 1e+30
      %v4469 = vmul.f32 %v4421, 1e+30
      %v4470 = vmul.f32 %v4422, 1e+30
      %v4471 = vmul.f32 %v4423, 1e+30
      %v4472 = vmul.f32 %v4424, 1e+30
      %v4473 = vmul.f32 %v4425, 1e+30
      %v4474 = vmul.f32 %v4426, 1e+30
      %v4475 = vmul.f32 %v4427, 1e+30
      %v4476 = vmul.f32 %v4428, 1e+30
      %v4477 = vmul.f32 %v4429, 1e+30
      %v4478 = vmul.f32 %v4430, 1e+30
      %v4479 = vmul.f32 %v4431, 1e+30
      %v4480 = vmul.f32 %v4432, 1e+30
      %v4481 = vmul.f32 %v4433, 1e+30
      %v4482 = vmul.f32 %v4434, 1e+30
      %v4483 = vmul.f32 %v4435, 1e+30
      %v4484 = vmul.f32 %v4436, 1e+30
      %v4485 = vmul.f32 %v4437, 1e+30
      %v4486 = vmul.f32 %v4438, 1e+30
      %v4487 = vmul.f32 %v4439, 1e+30
      %v4488 = vmul.f32 %v4440, 1e+30
      %v4489 = vmul.f32 %v4441, 1e+30
      %v4490 = vmul.f32 %v4442, 1e+30
      %v4491 = vmul.f32 %v4443, 1e+30
      %v4492 = vmul.f32 %v4444, 1e+30
      %v4493 = vmul.f32 %v4445, 1e+30
      %v4494 = vmul.f32 %v4446, 1e+30
      %v4495 = vmul.f32 %v4447, 1e+30
      %v4496 = vmul.f32 %v4448, 1e+30
      %v4497 = vmul.f32 %v4449, 1e+30
      %v4498 = vmul.f32 %v4450, 1e+30
      %v4499 = vmul.f32 %v4451, 1e+30
      %v4500 = vmul.f32 %v4452, 1e+30
      %v4501 = vmul.f32 %v4453, 1e+30
      %v4502 = vmul.f32 %v4454, 1e+30
      %v4503 = vmul.f32 %v4455, 1e+30
      %v4504 = vmul.f32 %v4456, 1e+30
      %v4505 = vmul.f32 %v4457, 1e+30
      %v4506 = vmul.f32 %v4458, 1e+30
      %v4507 = vmul.f32 %v4459, 1e+30
      %v4508 = vmul.f32 %v4460, 1e+30
      %v4509 = vmul.f32 %v4461, 1e+30
      %v4510 = vmul.f32 %v4462, 1e+30
      %v4511 = vadd.f32 %v4273, %v4463
      %v4512 = vadd.f32 %v4276, %v4464
      %v4513 = vadd.f32 %v4279, %v4465
      %v4514 = vadd.f32 %v4282, %v4466
      %v4515 = vadd.f32 %v4285, %v4467
      %v4516 = vadd.f32 %v4288, %v4468
      %v4517 = vadd.f32 %v4291, %v4469
      %v4518 = vadd.f32 %v4294, %v4470
      %v4519 = vadd.f32 %v4297, %v4471
      %v4520 = vadd.f32 %v4300, %v4472
      %v4521 = vadd.f32 %v4303, %v4473
      %v4522 = vadd.f32 %v4306, %v4474
      %v4523 = vadd.f32 %v4309, %v4475
      %v4524 = vadd.f32 %v4312, %v4476
      %v4525 = vadd.f32 %v4315, %v4477
      %v4526 = vadd.f32 %v4318, %v4478
      %v4527 = vadd.f32 %v4321, %v4479
      %v4528 = vadd.f32 %v4324, %v4480
      %v4529 = vadd.f32 %v4327, %v4481
      %v4530 = vadd.f32 %v4330, %v4482
      %v4531 = vadd.f32 %v4333, %v4483
      %v4532 = vadd.f32 %v4336, %v4484
      %v4533 = vadd.f32 %v4339, %v4485
      %v4534 = vadd.f32 %v4342, %v4486
      %v4535 = vadd.f32 %v4345, %v4487
      %v4536 = vadd.f32 %v4348, %v4488
      %v4537 = vadd.f32 %v4351, %v4489
      %v4538 = vadd.f32 %v4354, %v4490
      %v4539 = vadd.f32 %v4357, %v4491
      %v4540 = vadd.f32 %v4360, %v4492
      %v4541 = vadd.f32 %v4363, %v4493
      %v4542 = vadd.f32 %v4366, %v4494
      %v4543 = vadd.f32 %v4369, %v4495
      %v4544 = vadd.f32 %v4372, %v4496
      %v4545 = vadd.f32 %v4375, %v4497
      %v4546 = vadd.f32 %v4378, %v4498
      %v4547 = vadd.f32 %v4381, %v4499
      %v4548 = vadd.f32 %v4384, %v4500
      %v4549 = vadd.f32 %v4387, %v4501
      %v4550 = vadd.f32 %v4390, %v4502
      %v4551 = vadd.f32 %v4393, %v4503
      %v4552 = vadd.f32 %v4396, %v4504
      %v4553 = vadd.f32 %v4399, %v4505
      %v4554 = vadd.f32 %v4402, %v4506
      %v4555 = vadd.f32 %v4405, %v4507
      %v4556 = vadd.f32 %v4408, %v4508
      %v4557 = vadd.f32 %v4411, %v4509
      %v4558 = vadd.f32 %v4414, %v4510
      %4560 = vset.pattern.permute.xlu0 0
      %4561 = vperm.xlu0 %4560, %v4511
      %v4562 = vpop.permute.xlu0 %4561
      %4565 = vset.pattern.permute.xlu0 0
      %4566 = vperm.xlu0 %4565, %v4512
      %v4567 = vpop.permute.xlu0 %4566
      %4570 = vset.pattern.permute.xlu0 0
      %4571 = vperm.xlu0 %4570, %v4513
      %v4572 = vpop.permute.xlu0 %4571
      %4575 = vset.pattern.permute.xlu0 0
      %4576 = vperm.xlu0 %4575, %v4514
      %v4577 = vpop.permute.xlu0 %4576
      %4580 = vset.pattern.permute.xlu0 0
      %4581 = vperm.xlu0 %4580, %v4515
      %v4582 = vpop.permute.xlu0 %4581
      %4585 = vset.pattern.permute.xlu0 0
      %4586 = vperm.xlu0 %4585, %v4516
      %v4587 = vpop.permute.xlu0 %4586
      %4590 = vset.pattern.permute.xlu0 0
      %4591 = vperm.xlu0 %4590, %v4517
      %v4592 = vpop.permute.xlu0 %4591
      %4595 = vset.pattern.permute.xlu0 0
      %4596 = vperm.xlu0 %4595, %v4518
      %v4597 = vpop.permute.xlu0 %4596
      %4600 = vset.pattern.permute.xlu0 0
      %4601 = vperm.xlu0 %4600, %v4519
      %v4602 = vpop.permute.xlu0 %4601
      %4605 = vset.pattern.permute.xlu0 0
      %4606 = vperm.xlu0 %4605, %v4520
      %v4607 = vpop.permute.xlu0 %4606
      %4610 = vset.pattern.permute.xlu0 0
      %4611 = vperm.xlu0 %4610, %v4521
      %v4612 = vpop.permute.xlu0 %4611
      %4615 = vset.pattern.permute.xlu0 0
      %4616 = vperm.xlu0 %4615, %v4522
      %v4617 = vpop.permute.xlu0 %4616
      %4620 = vset.pattern.permute.xlu0 0
      %4621 = vperm.xlu0 %4620, %v4523
      %v4622 = vpop.permute.xlu0 %4621
      %4625 = vset.pattern.permute.xlu0 0
      %4626 = vperm.xlu0 %4625, %v4524
      %v4627 = vpop.permute.xlu0 %4626
      %4630 = vset.pattern.permute.xlu0 0
      %4631 = vperm.xlu0 %4630, %v4525
      %v4632 = vpop.permute.xlu0 %4631
      %4635 = vset.pattern.permute.xlu0 0
      %4636 = vperm.xlu0 %4635, %v4526
      %v4637 = vpop.permute.xlu0 %4636
      %4640 = vset.pattern.permute.xlu0 0
      %4641 = vperm.xlu0 %4640, %v4527
      %v4642 = vpop.permute.xlu0 %4641
      %4645 = vset.pattern.permute.xlu0 0
      %4646 = vperm.xlu0 %4645, %v4528
      %v4647 = vpop.permute.xlu0 %4646
      %4650 = vset.pattern.permute.xlu0 0
      %4651 = vperm.xlu0 %4650, %v4529
      %v4652 = vpop.permute.xlu0 %4651
      %4655 = vset.pattern.permute.xlu0 0
      %4656 = vperm.xlu0 %4655, %v4530
      %v4657 = vpop.permute.xlu0 %4656
      %4660 = vset.pattern.permute.xlu0 0
      %4661 = vperm.xlu0 %4660, %v4531
      %v4662 = vpop.permute.xlu0 %4661
      %4665 = vset.pattern.permute.xlu0 0
      %4666 = vperm.xlu0 %4665, %v4532
      %v4667 = vpop.permute.xlu0 %4666
      %4670 = vset.pattern.permute.xlu0 0
      %4671 = vperm.xlu0 %4670, %v4533
      %v4672 = vpop.permute.xlu0 %4671
      %4675 = vset.pattern.permute.xlu0 0
      %4676 = vperm.xlu0 %4675, %v4534
      %v4677 = vpop.permute.xlu0 %4676
      %4680 = vset.pattern.permute.xlu0 0
      %4681 = vperm.xlu0 %4680, %v4535
      %v4682 = vpop.permute.xlu0 %4681
      %4685 = vset.pattern.permute.xlu0 0
      %4686 = vperm.xlu0 %4685, %v4536
      %v4687 = vpop.permute.xlu0 %4686
      %4690 = vset.pattern.permute.xlu0 0
      %4691 = vperm.xlu0 %4690, %v4537
      %v4692 = vpop.permute.xlu0 %4691
      %4695 = vset.pattern.permute.xlu0 0
      %4696 = vperm.xlu0 %4695, %v4538
      %v4697 = vpop.permute.xlu0 %4696
      %4700 = vset.pattern.permute.xlu0 0
      %4701 = vperm.xlu0 %4700, %v4539
      %v4702 = vpop.permute.xlu0 %4701
      %4705 = vset.pattern.permute.xlu0 0
      %4706 = vperm.xlu0 %4705, %v4540
      %v4707 = vpop.permute.xlu0 %4706
      %4710 = vset.pattern.permute.xlu0 0
      %4711 = vperm.xlu0 %4710, %v4541
      %v4712 = vpop.permute.xlu0 %4711
      %4715 = vset.pattern.permute.xlu0 0
      %4716 = vperm.xlu0 %4715, %v4542
      %v4717 = vpop.permute.xlu0 %4716
      %4720 = vset.pattern.permute.xlu0 0
      %4721 = vperm.xlu0 %4720, %v4543
      %v4722 = vpop.permute.xlu0 %4721
      %4725 = vset.pattern.permute.xlu0 0
      %4726 = vperm.xlu0 %4725, %v4544
      %v4727 = vpop.permute.xlu0 %4726
      %4730 = vset.pattern.permute.xlu0 0
      %4731 = vperm.xlu0 %4730, %v4545
      %v4732 = vpop.permute.xlu0 %4731
      %4735 = vset.pattern.permute.xlu0 0
      %4736 = vperm.xlu0 %4735, %v4546
      %v4737 = vpop.permute.xlu0 %4736
      %4740 = vset.pattern.permute.xlu0 0
      %4741 = vperm.xlu0 %4740, %v4547
      %v4742 = vpop.permute.xlu0 %4741
      %4745 = vset.pattern.permute.xlu0 0
      %4746 = vperm.xlu0 %4745, %v4548
      %v4747 = vpop.permute.xlu0 %4746
      %4750 = vset.pattern.permute.xlu0 0
      %4751 = vperm.xlu0 %4750, %v4549
      %v4752 = vpop.permute.xlu0 %4751
      %4755 = vset.pattern.permute.xlu0 0
      %4756 = vperm.xlu0 %4755, %v4550
      %v4757 = vpop.permute.xlu0 %4756
      %4760 = vset.pattern.permute.xlu0 0
      %4761 = vperm.xlu0 %4760, %v4551
      %v4762 = vpop.permute.xlu0 %4761
      %4765 = vset.pattern.permute.xlu0 0
      %4766 = vperm.xlu0 %4765, %v4552
      %v4767 = vpop.permute.xlu0 %4766
      %4770 = vset.pattern.permute.xlu0 0
      %4771 = vperm.xlu0 %4770, %v4553
      %v4772 = vpop.permute.xlu0 %4771
      %4775 = vset.pattern.permute.xlu0 0
      %4776 = vperm.xlu0 %4775, %v4554
      %v4777 = vpop.permute.xlu0 %4776
      %4780 = vset.pattern.permute.xlu0 0
      %4781 = vperm.xlu0 %4780, %v4555
      %v4782 = vpop.permute.xlu0 %4781
      %4785 = vset.pattern.permute.xlu0 0
      %4786 = vperm.xlu0 %4785, %v4556
      %v4787 = vpop.permute.xlu0 %4786
      %4790 = vset.pattern.permute.xlu0 0
      %4791 = vperm.xlu0 %4790, %v4557
      %v4792 = vpop.permute.xlu0 %4791
      %4795 = vset.pattern.permute.xlu0 0
      %4796 = vperm.xlu0 %4795, %v4558
      %v4797 = vpop.permute.xlu0 %4796
      %v4799 = vmul.f32 %v4562, %v535
      %v4800 = vmul.f32 %v4567, %v536
      %v4801 = vmul.f32 %v4572, %v537
      %v4802 = vmul.f32 %v4577, %v538
      %v4803 = vmul.f32 %v4582, %v539
      %v4804 = vmul.f32 %v4587, %v540
      %v4805 = vmul.f32 %v4592, %v541
      %v4806 = vmul.f32 %v4597, %v542
      %v4807 = vmul.f32 %v4602, %v543
      %v4808 = vmul.f32 %v4607, %v544
      %v4809 = vmul.f32 %v4612, %v545
      %v4810 = vmul.f32 %v4617, %v546
      %v4811 = vmul.f32 %v4622, %v547
      %v4812 = vmul.f32 %v4627, %v548
      %v4813 = vmul.f32 %v4632, %v549
      %v4814 = vmul.f32 %v4637, %v550
      %v4815 = vmul.f32 %v4642, %v551
      %v4816 = vmul.f32 %v4647, %v552
      %v4817 = vmul.f32 %v4652, %v553
      %v4818 = vmul.f32 %v4657, %v554
      %v4819 = vmul.f32 %v4662, %v555
      %v4820 = vmul.f32 %v4667, %v556
      %v4821 = vmul.f32 %v4672, %v557
      %v4822 = vmul.f32 %v4677, %v558
      %v4823 = vmul.f32 %v4682, %v559
      %v4824 = vmul.f32 %v4687, %v560
      %v4825 = vmul.f32 %v4692, %v561
      %v4826 = vmul.f32 %v4697, %v562
      %v4827 = vmul.f32 %v4702, %v563
      %v4828 = vmul.f32 %v4707, %v564
      %v4829 = vmul.f32 %v4712, %v565
      %v4830 = vmul.f32 %v4717, %v566
      %v4831 = vmul.f32 %v4722, %v567
      %v4832 = vmul.f32 %v4727, %v568
      %v4833 = vmul.f32 %v4732, %v569
      %v4834 = vmul.f32 %v4737, %v570
      %v4835 = vmul.f32 %v4742, %v571
      %v4836 = vmul.f32 %v4747, %v572
      %v4837 = vmul.f32 %v4752, %v573
      %v4838 = vmul.f32 %v4757, %v574
      %v4839 = vmul.f32 %v4762, %v575
      %v4840 = vmul.f32 %v4767, %v576
      %v4841 = vmul.f32 %v4772, %v577
      %v4842 = vmul.f32 %v4777, %v578
      %v4843 = vmul.f32 %v4782, %v579
      %v4844 = vmul.f32 %v4787, %v580
      %v4845 = vmul.f32 %v4792, %v581
      %v4846 = vmul.f32 %v4797, %v582
      %v4847 = vsub.f32 %v535, 1.0
      %v4848 = vsub.f32 %v536, 1.0
      %v4849 = vsub.f32 %v537, 1.0
      %v4850 = vsub.f32 %v538, 1.0
      %v4851 = vsub.f32 %v539, 1.0
      %v4852 = vsub.f32 %v540, 1.0
      %v4853 = vsub.f32 %v541, 1.0
      %v4854 = vsub.f32 %v542, 1.0
      %v4855 = vsub.f32 %v543, 1.0
      %v4856 = vsub.f32 %v544, 1.0
      %v4857 = vsub.f32 %v545, 1.0
      %v4858 = vsub.f32 %v546, 1.0
      %v4859 = vsub.f32 %v547, 1.0
      %v4860 = vsub.f32 %v548, 1.0
      %v4861 = vsub.f32 %v549, 1.0
      %v4862 = vsub.f32 %v550, 1.0
      %v4863 = vsub.f32 %v551, 1.0
      %v4864 = vsub.f32 %v552, 1.0
      %v4865 = vsub.f32 %v553, 1.0
      %v4866 = vsub.f32 %v554, 1.0
      %v4867 = vsub.f32 %v555, 1.0
      %v4868 = vsub.f32 %v556, 1.0
      %v4869 = vsub.f32 %v557, 1.0
      %v4870 = vsub.f32 %v558, 1.0
      %v4871 = vsub.f32 %v559, 1.0
      %v4872 = vsub.f32 %v560, 1.0
      %v4873 = vsub.f32 %v561, 1.0
      %v4874 = vsub.f32 %v562, 1.0
      %v4875 = vsub.f32 %v563, 1.0
      %v4876 = vsub.f32 %v564, 1.0
      %v4877 = vsub.f32 %v565, 1.0
      %v4878 = vsub.f32 %v566, 1.0
      %v4879 = vsub.f32 %v567, 1.0
      %v4880 = vsub.f32 %v568, 1.0
      %v4881 = vsub.f32 %v569, 1.0
      %v4882 = vsub.f32 %v570, 1.0
      %v4883 = vsub.f32 %v571, 1.0
      %v4884 = vsub.f32 %v572, 1.0
      %v4885 = vsub.f32 %v573, 1.0
      %v4886 = vsub.f32 %v574, 1.0
      %v4887 = vsub.f32 %v575, 1.0
      %v4888 = vsub.f32 %v576, 1.0
      %v4889 = vsub.f32 %v577, 1.0
      %v4890 = vsub.f32 %v578, 1.0
      %v4891 = vsub.f32 %v579, 1.0
      %v4892 = vsub.f32 %v580, 1.0
      %v4893 = vsub.f32 %v581, 1.0
      %v4894 = vsub.f32 %v582, 1.0
      %v4895 = vmul.f32 %v4847, 1e+30
      %v4896 = vmul.f32 %v4848, 1e+30
      %v4897 = vmul.f32 %v4849, 1e+30
      %v4898 = vmul.f32 %v4850, 1e+30
      %v4899 = vmul.f32 %v4851, 1e+30
      %v4900 = vmul.f32 %v4852, 1e+30
      %v4901 = vmul.f32 %v4853, 1e+30
      %v4902 = vmul.f32 %v4854, 1e+30
      %v4903 = vmul.f32 %v4855, 1e+30
      %v4904 = vmul.f32 %v4856, 1e+30
      %v4905 = vmul.f32 %v4857, 1e+30
      %v4906 = vmul.f32 %v4858, 1e+30
      %v4907 = vmul.f32 %v4859, 1e+30
      %v4908 = vmul.f32 %v4860, 1e+30
      %v4909 = vmul.f32 %v4861, 1e+30
      %v4910 = vmul.f32 %v4862, 1e+30
      %v4911 = vmul.f32 %v4863, 1e+30
      %v4912 = vmul.f32 %v4864, 1e+30
      %v4913 = vmul.f32 %v4865, 1e+30
      %v4914 = vmul.f32 %v4866, 1e+30
      %v4915 = vmul.f32 %v4867, 1e+30
      %v4916 = vmul.f32 %v4868, 1e+30
      %v4917 = vmul.f32 %v4869, 1e+30
      %v4918 = vmul.f32 %v4870, 1e+30
      %v4919 = vmul.f32 %v4871, 1e+30
      %v4920 = vmul.f32 %v4872, 1e+30
      %v4921 = vmul.f32 %v4873, 1e+30
      %v4922 = vmul.f32 %v4874, 1e+30
      %v4923 = vmul.f32 %v4875, 1e+30
      %v4924 = vmul.f32 %v4876, 1e+30
      %v4925 = vmul.f32 %v4877, 1e+30
      %v4926 = vmul.f32 %v4878, 1e+30
      %v4927 = vmul.f32 %v4879, 1e+30
      %v4928 = vmul.f32 %v4880, 1e+30
      %v4929 = vmul.f32 %v4881, 1e+30
      %v4930 = vmul.f32 %v4882, 1e+30
      %v4931 = vmul.f32 %v4883, 1e+30
      %v4932 = vmul.f32 %v4884, 1e+30
      %v4933 = vmul.f32 %v4885, 1e+30
      %v4934 = vmul.f32 %v4886, 1e+30
      %v4935 = vmul.f32 %v4887, 1e+30
      %v4936 = vmul.f32 %v4888, 1e+30
      %v4937 = vmul.f32 %v4889, 1e+30
      %v4938 = vmul.f32 %v4890, 1e+30
      %v4939 = vmul.f32 %v4891, 1e+30
      %v4940 = vmul.f32 %v4892, 1e+30
      %v4941 = vmul.f32 %v4893, 1e+30
      %v4942 = vmul.f32 %v4894, 1e+30
      %v4943 = vadd.f32 %v4799, %v4895
      %v4944 = vadd.f32 %v4800, %v4896
      %v4945 = vadd.f32 %v4801, %v4897
      %v4946 = vadd.f32 %v4802, %v4898
      %v4947 = vadd.f32 %v4803, %v4899
      %v4948 = vadd.f32 %v4804, %v4900
      %v4949 = vadd.f32 %v4805, %v4901
      %v4950 = vadd.f32 %v4806, %v4902
      %v4951 = vadd.f32 %v4807, %v4903
      %v4952 = vadd.f32 %v4808, %v4904
      %v4953 = vadd.f32 %v4809, %v4905
      %v4954 = vadd.f32 %v4810, %v4906
      %v4955 = vadd.f32 %v4811, %v4907
      %v4956 = vadd.f32 %v4812, %v4908
      %v4957 = vadd.f32 %v4813, %v4909
      %v4958 = vadd.f32 %v4814, %v4910
      %v4959 = vadd.f32 %v4815, %v4911
      %v4960 = vadd.f32 %v4816, %v4912
      %v4961 = vadd.f32 %v4817, %v4913
      %v4962 = vadd.f32 %v4818, %v4914
      %v4963 = vadd.f32 %v4819, %v4915
      %v4964 = vadd.f32 %v4820, %v4916
      %v4965 = vadd.f32 %v4821, %v4917
      %v4966 = vadd.f32 %v4822, %v4918
      %v4967 = vadd.f32 %v4823, %v4919
      %v4968 = vadd.f32 %v4824, %v4920
      %v4969 = vadd.f32 %v4825, %v4921
      %v4970 = vadd.f32 %v4826, %v4922
      %v4971 = vadd.f32 %v4827, %v4923
      %v4972 = vadd.f32 %v4828, %v4924
      %v4973 = vadd.f32 %v4829, %v4925
      %v4974 = vadd.f32 %v4830, %v4926
      %v4975 = vadd.f32 %v4831, %v4927
      %v4976 = vadd.f32 %v4832, %v4928
      %v4977 = vadd.f32 %v4833, %v4929
      %v4978 = vadd.f32 %v4834, %v4930
      %v4979 = vadd.f32 %v4835, %v4931
      %v4980 = vadd.f32 %v4836, %v4932
      %v4981 = vadd.f32 %v4837, %v4933
      %v4982 = vadd.f32 %v4838, %v4934
      %v4983 = vadd.f32 %v4839, %v4935
      %v4984 = vadd.f32 %v4840, %v4936
      %v4985 = vadd.f32 %v4841, %v4937
      %v4986 = vadd.f32 %v4842, %v4938
      %v4987 = vadd.f32 %v4843, %v4939
      %v4988 = vadd.f32 %v4844, %v4940
      %v4989 = vadd.f32 %v4845, %v4941
      %v4990 = vadd.f32 %v4846, %v4942
      %v4991 = vmax.f32 %v4943, %v4947
      %v4992 = vmax.f32 %v4944, %v4948
      %v4993 = vmax.f32 %v4945, %v4949
      %v4994 = vmax.f32 %v4946, %v4950
      %v4995 = vmax.f32 %v4991, %v4951
      %v4996 = vmax.f32 %v4992, %v4952
      %v4997 = vmax.f32 %v4993, %v4953
      %v4998 = vmax.f32 %v4994, %v4954
      %v4999 = vmax.f32 %v4995, %v4955
      %v5000 = vmax.f32 %v4996, %v4956
      %v5001 = vmax.f32 %v4997, %v4957
      %v5002 = vmax.f32 %v4998, %v4958
      %v5003 = vmax.f32 %v4999, %v4959
      %v5004 = vmax.f32 %v5000, %v4960
      %v5005 = vmax.f32 %v5001, %v4961
      %v5006 = vmax.f32 %v5002, %v4962
      %v5007 = vmax.f32 %v5003, %v4963
      %v5008 = vmax.f32 %v5004, %v4964
      %v5009 = vmax.f32 %v5005, %v4965
      %v5010 = vmax.f32 %v5006, %v4966
      %v5011 = vmax.f32 %v5007, %v4967
      %v5012 = vmax.f32 %v5008, %v4968
      %v5013 = vmax.f32 %v5009, %v4969
      %v5014 = vmax.f32 %v5010, %v4970
      %v5015 = vmax.f32 %v5011, %v4971
      %v5016 = vmax.f32 %v5012, %v4972
      %v5017 = vmax.f32 %v5013, %v4973
      %v5018 = vmax.f32 %v5014, %v4974
      %v5019 = vmax.f32 %v5015, %v4975
      %v5020 = vmax.f32 %v5016, %v4976
      %v5021 = vmax.f32 %v5017, %v4977
      %v5022 = vmax.f32 %v5018, %v4978
      %v5023 = vmax.f32 %v5019, %v4979
      %v5024 = vmax.f32 %v5020, %v4980
      %v5025 = vmax.f32 %v5021, %v4981
      %v5026 = vmax.f32 %v5022, %v4982
      %v5027 = vmax.f32 %v5023, %v4983
      %v5028 = vmax.f32 %v5024, %v4984
      %v5029 = vmax.f32 %v5025, %v4985
      %v5030 = vmax.f32 %v5026, %v4986
      %v5031 = vmax.f32 %v5027, %v4987
      %v5032 = vmax.f32 %v5028, %v4988
      %v5033 = vmax.f32 %v5029, %v4989
      %v5034 = vmax.f32 %v5030, %v4990
      %v5035 = vmax.f32 %v5031, %v5032
      %v5036 = vmax.f32 %v5033, %v5034
      %v5037 = vmax.f32 %v5035, %v5036
      %v5038 = vrot.slane %v5037, 4
      %v5039 = vmax.f32 %v5037, %v5038
      %v5040 = vrot.slane %v5039, 2
      %v5041 = vmax.f32 %v5039, %v5040
      %v5042 = vrot.slane %v5041, 1
      %v5043 = vmax.f32 %v5041, %v5042
      %v5044 = vmul.f32 %v535, %v5043
      %v5045 = vmul.f32 %v536, %v5043
      %v5046 = vmul.f32 %v537, %v5043
      %v5047 = vmul.f32 %v538, %v5043
      %v5048 = vmul.f32 %v539, %v5043
      %v5049 = vmul.f32 %v540, %v5043
      %v5050 = vmul.f32 %v541, %v5043
      %v5051 = vmul.f32 %v542, %v5043
      %v5052 = vmul.f32 %v543, %v5043
      %v5053 = vmul.f32 %v544, %v5043
      %v5054 = vmul.f32 %v545, %v5043
      %v5055 = vmul.f32 %v546, %v5043
      %v5056 = vmul.f32 %v547, %v5043
      %v5057 = vmul.f32 %v548, %v5043
      %v5058 = vmul.f32 %v549, %v5043
      %v5059 = vmul.f32 %v550, %v5043
      %v5060 = vmul.f32 %v551, %v5043
      %v5061 = vmul.f32 %v552, %v5043
      %v5062 = vmul.f32 %v553, %v5043
      %v5063 = vmul.f32 %v554, %v5043
      %v5064 = vmul.f32 %v555, %v5043
      %v5065 = vmul.f32 %v556, %v5043
      %v5066 = vmul.f32 %v557, %v5043
      %v5067 = vmul.f32 %v558, %v5043
      %v5068 = vmul.f32 %v559, %v5043
      %v5069 = vmul.f32 %v560, %v5043
      %v5070 = vmul.f32 %v561, %v5043
      %v5071 = vmul.f32 %v562, %v5043
      %v5072 = vmul.f32 %v563, %v5043
      %v5073 = vmul.f32 %v564, %v5043
      %v5074 = vmul.f32 %v565, %v5043
      %v5075 = vmul.f32 %v566, %v5043
      %v5076 = vmul.f32 %v567, %v5043
      %v5077 = vmul.f32 %v568, %v5043
      %v5078 = vmul.f32 %v569, %v5043
      %v5079 = vmul.f32 %v570, %v5043
      %v5080 = vmul.f32 %v571, %v5043
      %v5081 = vmul.f32 %v572, %v5043
      %v5082 = vmul.f32 %v573, %v5043
      %v5083 = vmul.f32 %v574, %v5043
      %v5084 = vmul.f32 %v575, %v5043
      %v5085 = vmul.f32 %v576, %v5043
      %v5086 = vmul.f32 %v577, %v5043
      %v5087 = vmul.f32 %v578, %v5043
      %v5088 = vmul.f32 %v579, %v5043
      %v5089 = vmul.f32 %v580, %v5043
      %v5090 = vmul.f32 %v581, %v5043
      %v5091 = vmul.f32 %v582, %v5043
      %5092 = vadd.xlane.f32.xlu0 %v5044
      %v5093 = vpop.xlane.xlu0 %5092
      %5094 = vadd.xlane.f32.xlu0 %v5045
      %v5095 = vpop.xlane.xlu0 %5094
      %5096 = vadd.xlane.f32.xlu0 %v5046
      %v5097 = vpop.xlane.xlu0 %5096
      %5098 = vadd.xlane.f32.xlu0 %v5047
      %v5099 = vpop.xlane.xlu0 %5098
      %5100 = vadd.xlane.f32.xlu0 %v5048
      %v5101 = vpop.xlane.xlu0 %5100
      %5102 = vadd.xlane.f32.xlu0 %v5049
      %v5103 = vpop.xlane.xlu0 %5102
      %5104 = vadd.xlane.f32.xlu0 %v5050
      %v5105 = vpop.xlane.xlu0 %5104
      %5106 = vadd.xlane.f32.xlu0 %v5051
      %v5107 = vpop.xlane.xlu0 %5106
      %5108 = vadd.xlane.f32.xlu0 %v5052
      %v5109 = vpop.xlane.xlu0 %5108
      %5110 = vadd.xlane.f32.xlu0 %v5053
      %v5111 = vpop.xlane.xlu0 %5110
      %5112 = vadd.xlane.f32.xlu0 %v5054
      %v5113 = vpop.xlane.xlu0 %5112
      %5114 = vadd.xlane.f32.xlu0 %v5055
      %v5115 = vpop.xlane.xlu0 %5114
      %5116 = vadd.xlane.f32.xlu0 %v5056
      %v5117 = vpop.xlane.xlu0 %5116
      %5118 = vadd.xlane.f32.xlu0 %v5057
      %v5119 = vpop.xlane.xlu0 %5118
      %5120 = vadd.xlane.f32.xlu0 %v5058
      %v5121 = vpop.xlane.xlu0 %5120
      %5122 = vadd.xlane.f32.xlu0 %v5059
      %v5123 = vpop.xlane.xlu0 %5122
      %5124 = vadd.xlane.f32.xlu0 %v5060
      %v5125 = vpop.xlane.xlu0 %5124
      %5126 = vadd.xlane.f32.xlu0 %v5061
      %v5127 = vpop.xlane.xlu0 %5126
      %5128 = vadd.xlane.f32.xlu0 %v5062
      %v5129 = vpop.xlane.xlu0 %5128
      %5130 = vadd.xlane.f32.xlu0 %v5063
      %v5131 = vpop.xlane.xlu0 %5130
      %5132 = vadd.xlane.f32.xlu0 %v5064
      %v5133 = vpop.xlane.xlu0 %5132
      %5134 = vadd.xlane.f32.xlu0 %v5065
      %v5135 = vpop.xlane.xlu0 %5134
      %5136 = vadd.xlane.f32.xlu0 %v5066
      %v5137 = vpop.xlane.xlu0 %5136
      %5138 = vadd.xlane.f32.xlu0 %v5067
      %v5139 = vpop.xlane.xlu0 %5138
      %5140 = vadd.xlane.f32.xlu0 %v5068
      %v5141 = vpop.xlane.xlu0 %5140
      %5142 = vadd.xlane.f32.xlu0 %v5069
      %v5143 = vpop.xlane.xlu0 %5142
      %5144 = vadd.xlane.f32.xlu0 %v5070
      %v5145 = vpop.xlane.xlu0 %5144
      %5146 = vadd.xlane.f32.xlu0 %v5071
      %v5147 = vpop.xlane.xlu0 %5146
      %5148 = vadd.xlane.f32.xlu0 %v5072
      %v5149 = vpop.xlane.xlu0 %5148
      %5150 = vadd.xlane.f32.xlu0 %v5073
      %v5151 = vpop.xlane.xlu0 %5150
      %5152 = vadd.xlane.f32.xlu0 %v5074
      %v5153 = vpop.xlane.xlu0 %5152
      %5154 = vadd.xlane.f32.xlu0 %v5075
      %v5155 = vpop.xlane.xlu0 %5154
      %5156 = vadd.xlane.f32.xlu0 %v5076
      %v5157 = vpop.xlane.xlu0 %5156
      %5158 = vadd.xlane.f32.xlu0 %v5077
      %v5159 = vpop.xlane.xlu0 %5158
      %5160 = vadd.xlane.f32.xlu0 %v5078
      %v5161 = vpop.xlane.xlu0 %5160
      %5162 = vadd.xlane.f32.xlu0 %v5079
      %v5163 = vpop.xlane.xlu0 %5162
      %5164 = vadd.xlane.f32.xlu0 %v5080
      %v5165 = vpop.xlane.xlu0 %5164
      %5166 = vadd.xlane.f32.xlu0 %v5081
      %v5167 = vpop.xlane.xlu0 %5166
      %5168 = vadd.xlane.f32.xlu0 %v5082
      %v5169 = vpop.xlane.xlu0 %5168
      %5170 = vadd.xlane.f32.xlu0 %v5083
      %v5171 = vpop.xlane.xlu0 %5170
      %5172 = vadd.xlane.f32.xlu0 %v5084
      %v5173 = vpop.xlane.xlu0 %5172
      %5174 = vadd.xlane.f32.xlu0 %v5085
      %v5175 = vpop.xlane.xlu0 %5174
      %5176 = vadd.xlane.f32.xlu0 %v5086
      %v5177 = vpop.xlane.xlu0 %5176
      %5178 = vadd.xlane.f32.xlu0 %v5087
      %v5179 = vpop.xlane.xlu0 %5178
      %5180 = vadd.xlane.f32.xlu0 %v5088
      %v5181 = vpop.xlane.xlu0 %5180
      %5182 = vadd.xlane.f32.xlu0 %v5089
      %v5183 = vpop.xlane.xlu0 %5182
      %5184 = vadd.xlane.f32.xlu0 %v5090
      %v5185 = vpop.xlane.xlu0 %5184
      %5186 = vadd.xlane.f32.xlu0 %v5091
      %v5187 = vpop.xlane.xlu0 %5186
      %v5188 = vsub.f32 %v4511, %v5093
      %v5189 = vsub.f32 %v4512, %v5095
      %v5190 = vsub.f32 %v4513, %v5097
      %v5191 = vsub.f32 %v4514, %v5099
      %v5192 = vsub.f32 %v4515, %v5101
      %v5193 = vsub.f32 %v4516, %v5103
      %v5194 = vsub.f32 %v4517, %v5105
      %v5195 = vsub.f32 %v4518, %v5107
      %v5196 = vsub.f32 %v4519, %v5109
      %v5197 = vsub.f32 %v4520, %v5111
      %v5198 = vsub.f32 %v4521, %v5113
      %v5199 = vsub.f32 %v4522, %v5115
      %v5200 = vsub.f32 %v4523, %v5117
      %v5201 = vsub.f32 %v4524, %v5119
      %v5202 = vsub.f32 %v4525, %v5121
      %v5203 = vsub.f32 %v4526, %v5123
      %v5204 = vsub.f32 %v4527, %v5125
      %v5205 = vsub.f32 %v4528, %v5127
      %v5206 = vsub.f32 %v4529, %v5129
      %v5207 = vsub.f32 %v4530, %v5131
      %v5208 = vsub.f32 %v4531, %v5133
      %v5209 = vsub.f32 %v4532, %v5135
      %v5210 = vsub.f32 %v4533, %v5137
      %v5211 = vsub.f32 %v4534, %v5139
      %v5212 = vsub.f32 %v4535, %v5141
      %v5213 = vsub.f32 %v4536, %v5143
      %v5214 = vsub.f32 %v4537, %v5145
      %v5215 = vsub.f32 %v4538, %v5147
      %v5216 = vsub.f32 %v4539, %v5149
      %v5217 = vsub.f32 %v4540, %v5151
      %v5218 = vsub.f32 %v4541, %v5153
      %v5219 = vsub.f32 %v4542, %v5155
      %v5220 = vsub.f32 %v4543, %v5157
      %v5221 = vsub.f32 %v4544, %v5159
      %v5222 = vsub.f32 %v4545, %v5161
      %v5223 = vsub.f32 %v4546, %v5163
      %v5224 = vsub.f32 %v4547, %v5165
      %v5225 = vsub.f32 %v4548, %v5167
      %v5226 = vsub.f32 %v4549, %v5169
      %v5227 = vsub.f32 %v4550, %v5171
      %v5228 = vsub.f32 %v4551, %v5173
      %v5229 = vsub.f32 %v4552, %v5175
      %v5230 = vsub.f32 %v4553, %v5177
      %v5231 = vsub.f32 %v4554, %v5179
      %v5232 = vsub.f32 %v4555, %v5181
      %v5233 = vsub.f32 %v4556, %v5183
      %v5234 = vsub.f32 %v4557, %v5185
      %v5235 = vsub.f32 %v4558, %v5187
      %v5236 = vmul.f32 %v5188, 1.442695
      %v5237 = vpow.pop %v5236
      %v5238 = vmul.f32 %v5189, 1.442695
      %v5239 = vpow.pop %v5238
      %v5240 = vmul.f32 %v5190, 1.442695
      %v5241 = vpow.pop %v5240
      %v5242 = vmul.f32 %v5191, 1.442695
      %v5243 = vpow.pop %v5242
      %v5244 = vmul.f32 %v5192, 1.442695
      %v5245 = vpow.pop %v5244
      %v5246 = vmul.f32 %v5193, 1.442695
      %v5247 = vpow.pop %v5246
      %v5248 = vmul.f32 %v5194, 1.442695
      %v5249 = vpow.pop %v5248
      %v5250 = vmul.f32 %v5195, 1.442695
      %v5251 = vpow.pop %v5250
      %v5252 = vmul.f32 %v5196, 1.442695
      %v5253 = vpow.pop %v5252
      %v5254 = vmul.f32 %v5197, 1.442695
      %v5255 = vpow.pop %v5254
      %v5256 = vmul.f32 %v5198, 1.442695
      %v5257 = vpow.pop %v5256
      %v5258 = vmul.f32 %v5199, 1.442695
      %v5259 = vpow.pop %v5258
      %v5260 = vmul.f32 %v5200, 1.442695
      %v5261 = vpow.pop %v5260
      %v5262 = vmul.f32 %v5201, 1.442695
      %v5263 = vpow.pop %v5262
      %v5264 = vmul.f32 %v5202, 1.442695
      %v5265 = vpow.pop %v5264
      %v5266 = vmul.f32 %v5203, 1.442695
      %v5267 = vpow.pop %v5266
      %v5268 = vmul.f32 %v5204, 1.442695
      %v5269 = vpow.pop %v5268
      %v5270 = vmul.f32 %v5205, 1.442695
      %v5271 = vpow.pop %v5270
      %v5272 = vmul.f32 %v5206, 1.442695
      %v5273 = vpow.pop %v5272
      %v5274 = vmul.f32 %v5207, 1.442695
      %v5275 = vpow.pop %v5274
      %v5276 = vmul.f32 %v5208, 1.442695
      %v5277 = vpow.pop %v5276
      %v5278 = vmul.f32 %v5209, 1.442695
      %v5279 = vpow.pop %v5278
      %v5280 = vmul.f32 %v5210, 1.442695
      %v5281 = vpow.pop %v5280
      %v5282 = vmul.f32 %v5211, 1.442695
      %v5283 = vpow.pop %v5282
      %v5284 = vmul.f32 %v5212, 1.442695
      %v5285 = vpow.pop %v5284
      %v5286 = vmul.f32 %v5213, 1.442695
      %v5287 = vpow.pop %v5286
      %v5288 = vmul.f32 %v5214, 1.442695
      %v5289 = vpow.pop %v5288
      %v5290 = vmul.f32 %v5215, 1.442695
      %v5291 = vpow.pop %v5290
      %v5292 = vmul.f32 %v5216, 1.442695
      %v5293 = vpow.pop %v5292
      %v5294 = vmul.f32 %v5217, 1.442695
      %v5295 = vpow.pop %v5294
      %v5296 = vmul.f32 %v5218, 1.442695
      %v5297 = vpow.pop %v5296
      %v5298 = vmul.f32 %v5219, 1.442695
      %v5299 = vpow.pop %v5298
      %v5300 = vmul.f32 %v5220, 1.442695
      %v5301 = vpow.pop %v5300
      %v5302 = vmul.f32 %v5221, 1.442695
      %v5303 = vpow.pop %v5302
      %v5304 = vmul.f32 %v5222, 1.442695
      %v5305 = vpow.pop %v5304
      %v5306 = vmul.f32 %v5223, 1.442695
      %v5307 = vpow.pop %v5306
      %v5308 = vmul.f32 %v5224, 1.442695
      %v5309 = vpow.pop %v5308
      %v5310 = vmul.f32 %v5225, 1.442695
      %v5311 = vpow.pop %v5310
      %v5312 = vmul.f32 %v5226, 1.442695
      %v5313 = vpow.pop %v5312
      %v5314 = vmul.f32 %v5227, 1.442695
      %v5315 = vpow.pop %v5314
      %v5316 = vmul.f32 %v5228, 1.442695
      %v5317 = vpow.pop %v5316
      %v5318 = vmul.f32 %v5229, 1.442695
      %v5319 = vpow.pop %v5318
      %v5320 = vmul.f32 %v5230, 1.442695
      %v5321 = vpow.pop %v5320
      %v5322 = vmul.f32 %v5231, 1.442695
      %v5323 = vpow.pop %v5322
      %v5324 = vmul.f32 %v5232, 1.442695
      %v5325 = vpow.pop %v5324
      %v5326 = vmul.f32 %v5233, 1.442695
      %v5327 = vpow.pop %v5326
      %v5328 = vmul.f32 %v5234, 1.442695
      %v5329 = vpow.pop %v5328
      %v5330 = vmul.f32 %v5235, 1.442695
      %v5331 = vpow.pop %v5330
      %v5332 = vmul.f32 %v5237, %v487
      %v5333 = vmul.f32 %v5239, %v488
      %v5334 = vmul.f32 %v5241, %v489
      %v5335 = vmul.f32 %v5243, %v490
      %v5336 = vmul.f32 %v5245, %v491
      %v5337 = vmul.f32 %v5247, %v492
      %v5338 = vmul.f32 %v5249, %v493
      %v5339 = vmul.f32 %v5251, %v494
      %v5340 = vmul.f32 %v5253, %v495
      %v5341 = vmul.f32 %v5255, %v496
      %v5342 = vmul.f32 %v5257, %v497
      %v5343 = vmul.f32 %v5259, %v498
      %v5344 = vmul.f32 %v5261, %v499
      %v5345 = vmul.f32 %v5263, %v500
      %v5346 = vmul.f32 %v5265, %v501
      %v5347 = vmul.f32 %v5267, %v502
      %v5348 = vmul.f32 %v5269, %v503
      %v5349 = vmul.f32 %v5271, %v504
      %v5350 = vmul.f32 %v5273, %v505
      %v5351 = vmul.f32 %v5275, %v506
      %v5352 = vmul.f32 %v5277, %v507
      %v5353 = vmul.f32 %v5279, %v508
      %v5354 = vmul.f32 %v5281, %v509
      %v5355 = vmul.f32 %v5283, %v510
      %v5356 = vmul.f32 %v5285, %v511
      %v5357 = vmul.f32 %v5287, %v512
      %v5358 = vmul.f32 %v5289, %v513
      %v5359 = vmul.f32 %v5291, %v514
      %v5360 = vmul.f32 %v5293, %v515
      %v5361 = vmul.f32 %v5295, %v516
      %v5362 = vmul.f32 %v5297, %v517
      %v5363 = vmul.f32 %v5299, %v518
      %v5364 = vmul.f32 %v5301, %v519
      %v5365 = vmul.f32 %v5303, %v520
      %v5366 = vmul.f32 %v5305, %v521
      %v5367 = vmul.f32 %v5307, %v522
      %v5368 = vmul.f32 %v5309, %v523
      %v5369 = vmul.f32 %v5311, %v524
      %v5370 = vmul.f32 %v5313, %v525
      %v5371 = vmul.f32 %v5315, %v526
      %v5372 = vmul.f32 %v5317, %v527
      %v5373 = vmul.f32 %v5319, %v528
      %v5374 = vmul.f32 %v5321, %v529
      %v5375 = vmul.f32 %v5323, %v530
      %v5376 = vmul.f32 %v5325, %v531
      %v5377 = vmul.f32 %v5327, %v532
      %v5378 = vmul.f32 %v5329, %v533
      %v5379 = vmul.f32 %v5331, %v534
      %5381 = vset.pattern.permute.xlu0 0
      %5382 = vperm.xlu0 %5381, %v5332
      %v5383 = vpop.permute.xlu0 %5382
      %5386 = vset.pattern.permute.xlu0 0
      %5387 = vperm.xlu0 %5386, %v5333
      %v5388 = vpop.permute.xlu0 %5387
      %5391 = vset.pattern.permute.xlu0 0
      %5392 = vperm.xlu0 %5391, %v5334
      %v5393 = vpop.permute.xlu0 %5392
      %5396 = vset.pattern.permute.xlu0 0
      %5397 = vperm.xlu0 %5396, %v5335
      %v5398 = vpop.permute.xlu0 %5397
      %5401 = vset.pattern.permute.xlu0 0
      %5402 = vperm.xlu0 %5401, %v5336
      %v5403 = vpop.permute.xlu0 %5402
      %5406 = vset.pattern.permute.xlu0 0
      %5407 = vperm.xlu0 %5406, %v5337
      %v5408 = vpop.permute.xlu0 %5407
      %5411 = vset.pattern.permute.xlu0 0
      %5412 = vperm.xlu0 %5411, %v5338
      %v5413 = vpop.permute.xlu0 %5412
      %5416 = vset.pattern.permute.xlu0 0
      %5417 = vperm.xlu0 %5416, %v5339
      %v5418 = vpop.permute.xlu0 %5417
      %5421 = vset.pattern.permute.xlu0 0
      %5422 = vperm.xlu0 %5421, %v5340
      %v5423 = vpop.permute.xlu0 %5422
      %5426 = vset.pattern.permute.xlu0 0
      %5427 = vperm.xlu0 %5426, %v5341
      %v5428 = vpop.permute.xlu0 %5427
      %5431 = vset.pattern.permute.xlu0 0
      %5432 = vperm.xlu0 %5431, %v5342
      %v5433 = vpop.permute.xlu0 %5432
      %5436 = vset.pattern.permute.xlu0 0
      %5437 = vperm.xlu0 %5436, %v5343
      %v5438 = vpop.permute.xlu0 %5437
      %5441 = vset.pattern.permute.xlu0 0
      %5442 = vperm.xlu0 %5441, %v5344
      %v5443 = vpop.permute.xlu0 %5442
      %5446 = vset.pattern.permute.xlu0 0
      %5447 = vperm.xlu0 %5446, %v5345
      %v5448 = vpop.permute.xlu0 %5447
      %5451 = vset.pattern.permute.xlu0 0
      %5452 = vperm.xlu0 %5451, %v5346
      %v5453 = vpop.permute.xlu0 %5452
      %5456 = vset.pattern.permute.xlu0 0
      %5457 = vperm.xlu0 %5456, %v5347
      %v5458 = vpop.permute.xlu0 %5457
      %5461 = vset.pattern.permute.xlu0 0
      %5462 = vperm.xlu0 %5461, %v5348
      %v5463 = vpop.permute.xlu0 %5462
      %5466 = vset.pattern.permute.xlu0 0
      %5467 = vperm.xlu0 %5466, %v5349
      %v5468 = vpop.permute.xlu0 %5467
      %5471 = vset.pattern.permute.xlu0 0
      %5472 = vperm.xlu0 %5471, %v5350
      %v5473 = vpop.permute.xlu0 %5472
      %5476 = vset.pattern.permute.xlu0 0
      %5477 = vperm.xlu0 %5476, %v5351
      %v5478 = vpop.permute.xlu0 %5477
      %5481 = vset.pattern.permute.xlu0 0
      %5482 = vperm.xlu0 %5481, %v5352
      %v5483 = vpop.permute.xlu0 %5482
      %5486 = vset.pattern.permute.xlu0 0
      %5487 = vperm.xlu0 %5486, %v5353
      %v5488 = vpop.permute.xlu0 %5487
      %5491 = vset.pattern.permute.xlu0 0
      %5492 = vperm.xlu0 %5491, %v5354
      %v5493 = vpop.permute.xlu0 %5492
      %5496 = vset.pattern.permute.xlu0 0
      %5497 = vperm.xlu0 %5496, %v5355
      %v5498 = vpop.permute.xlu0 %5497
      %5501 = vset.pattern.permute.xlu0 0
      %5502 = vperm.xlu0 %5501, %v5356
      %v5503 = vpop.permute.xlu0 %5502
      %5506 = vset.pattern.permute.xlu0 0
      %5507 = vperm.xlu0 %5506, %v5357
      %v5508 = vpop.permute.xlu0 %5507
      %5511 = vset.pattern.permute.xlu0 0
      %5512 = vperm.xlu0 %5511, %v5358
      %v5513 = vpop.permute.xlu0 %5512
      %5516 = vset.pattern.permute.xlu0 0
      %5517 = vperm.xlu0 %5516, %v5359
      %v5518 = vpop.permute.xlu0 %5517
      %5521 = vset.pattern.permute.xlu0 0
      %5522 = vperm.xlu0 %5521, %v5360
      %v5523 = vpop.permute.xlu0 %5522
      %5526 = vset.pattern.permute.xlu0 0
      %5527 = vperm.xlu0 %5526, %v5361
      %v5528 = vpop.permute.xlu0 %5527
      %5531 = vset.pattern.permute.xlu0 0
      %5532 = vperm.xlu0 %5531, %v5362
      %v5533 = vpop.permute.xlu0 %5532
      %5536 = vset.pattern.permute.xlu0 0
      %5537 = vperm.xlu0 %5536, %v5363
      %v5538 = vpop.permute.xlu0 %5537
      %5541 = vset.pattern.permute.xlu0 0
      %5542 = vperm.xlu0 %5541, %v5364
      %v5543 = vpop.permute.xlu0 %5542
      %5546 = vset.pattern.permute.xlu0 0
      %5547 = vperm.xlu0 %5546, %v5365
      %v5548 = vpop.permute.xlu0 %5547
      %5551 = vset.pattern.permute.xlu0 0
      %5552 = vperm.xlu0 %5551, %v5366
      %v5553 = vpop.permute.xlu0 %5552
      %5556 = vset.pattern.permute.xlu0 0
      %5557 = vperm.xlu0 %5556, %v5367
      %v5558 = vpop.permute.xlu0 %5557
      %5561 = vset.pattern.permute.xlu0 0
      %5562 = vperm.xlu0 %5561, %v5368
      %v5563 = vpop.permute.xlu0 %5562
      %5566 = vset.pattern.permute.xlu0 0
      %5567 = vperm.xlu0 %5566, %v5369
      %v5568 = vpop.permute.xlu0 %5567
      %5571 = vset.pattern.permute.xlu0 0
      %5572 = vperm.xlu0 %5571, %v5370
      %v5573 = vpop.permute.xlu0 %5572
      %5576 = vset.pattern.permute.xlu0 0
      %5577 = vperm.xlu0 %5576, %v5371
      %v5578 = vpop.permute.xlu0 %5577
      %5581 = vset.pattern.permute.xlu0 0
      %5582 = vperm.xlu0 %5581, %v5372
      %v5583 = vpop.permute.xlu0 %5582
      %5586 = vset.pattern.permute.xlu0 0
      %5587 = vperm.xlu0 %5586, %v5373
      %v5588 = vpop.permute.xlu0 %5587
      %5591 = vset.pattern.permute.xlu0 0
      %5592 = vperm.xlu0 %5591, %v5374
      %v5593 = vpop.permute.xlu0 %5592
      %5596 = vset.pattern.permute.xlu0 0
      %5597 = vperm.xlu0 %5596, %v5375
      %v5598 = vpop.permute.xlu0 %5597
      %5601 = vset.pattern.permute.xlu0 0
      %5602 = vperm.xlu0 %5601, %v5376
      %v5603 = vpop.permute.xlu0 %5602
      %5606 = vset.pattern.permute.xlu0 0
      %5607 = vperm.xlu0 %5606, %v5377
      %v5608 = vpop.permute.xlu0 %5607
      %5611 = vset.pattern.permute.xlu0 0
      %5612 = vperm.xlu0 %5611, %v5378
      %v5613 = vpop.permute.xlu0 %5612
      %5616 = vset.pattern.permute.xlu0 0
      %5617 = vperm.xlu0 %5616, %v5379
      %v5618 = vpop.permute.xlu0 %5617
      %v5620 = vmul.f32 %v535, %v5383
      %v5621 = vmul.f32 %v536, %v5388
      %v5622 = vmul.f32 %v537, %v5393
      %v5623 = vmul.f32 %v538, %v5398
      %v5624 = vmul.f32 %v539, %v5403
      %v5625 = vmul.f32 %v540, %v5408
      %v5626 = vmul.f32 %v541, %v5413
      %v5627 = vmul.f32 %v542, %v5418
      %v5628 = vmul.f32 %v543, %v5423
      %v5629 = vmul.f32 %v544, %v5428
      %v5630 = vmul.f32 %v545, %v5433
      %v5631 = vmul.f32 %v546, %v5438
      %v5632 = vmul.f32 %v547, %v5443
      %v5633 = vmul.f32 %v548, %v5448
      %v5634 = vmul.f32 %v549, %v5453
      %v5635 = vmul.f32 %v550, %v5458
      %v5636 = vmul.f32 %v551, %v5463
      %v5637 = vmul.f32 %v552, %v5468
      %v5638 = vmul.f32 %v553, %v5473
      %v5639 = vmul.f32 %v554, %v5478
      %v5640 = vmul.f32 %v555, %v5483
      %v5641 = vmul.f32 %v556, %v5488
      %v5642 = vmul.f32 %v557, %v5493
      %v5643 = vmul.f32 %v558, %v5498
      %v5644 = vmul.f32 %v559, %v5503
      %v5645 = vmul.f32 %v560, %v5508
      %v5646 = vmul.f32 %v561, %v5513
      %v5647 = vmul.f32 %v562, %v5518
      %v5648 = vmul.f32 %v563, %v5523
      %v5649 = vmul.f32 %v564, %v5528
      %v5650 = vmul.f32 %v565, %v5533
      %v5651 = vmul.f32 %v566, %v5538
      %v5652 = vmul.f32 %v567, %v5543
      %v5653 = vmul.f32 %v568, %v5548
      %v5654 = vmul.f32 %v569, %v5553
      %v5655 = vmul.f32 %v570, %v5558
      %v5656 = vmul.f32 %v571, %v5563
      %v5657 = vmul.f32 %v572, %v5568
      %v5658 = vmul.f32 %v573, %v5573
      %v5659 = vmul.f32 %v574, %v5578
      %v5660 = vmul.f32 %v575, %v5583
      %v5661 = vmul.f32 %v576, %v5588
      %v5662 = vmul.f32 %v577, %v5593
      %v5663 = vmul.f32 %v578, %v5598
      %v5664 = vmul.f32 %v579, %v5603
      %v5665 = vmul.f32 %v580, %v5608
      %v5666 = vmul.f32 %v581, %v5613
      %v5667 = vmul.f32 %v582, %v5618
      %v5668 = vadd.f32 %v5620, %v5621
      %v5669 = vadd.f32 %v5668, %v5622
      %v5670 = vadd.f32 %v5669, %v5623
      %v5671 = vadd.f32 %v5670, %v5624
      %v5672 = vadd.f32 %v5671, %v5625
      %v5673 = vadd.f32 %v5672, %v5626
      %v5674 = vadd.f32 %v5673, %v5627
      %v5675 = vadd.f32 %v5674, %v5628
      %v5676 = vadd.f32 %v5675, %v5629
      %v5677 = vadd.f32 %v5676, %v5630
      %v5678 = vadd.f32 %v5677, %v5631
      %v5679 = vadd.f32 %v5678, %v5632
      %v5680 = vadd.f32 %v5679, %v5633
      %v5681 = vadd.f32 %v5680, %v5634
      %v5682 = vadd.f32 %v5681, %v5635
      %v5683 = vadd.f32 %v5682, %v5636
      %v5684 = vadd.f32 %v5683, %v5637
      %v5685 = vadd.f32 %v5684, %v5638
      %v5686 = vadd.f32 %v5685, %v5639
      %v5687 = vadd.f32 %v5686, %v5640
      %v5688 = vadd.f32 %v5687, %v5641
      %v5689 = vadd.f32 %v5688, %v5642
      %v5690 = vadd.f32 %v5689, %v5643
      %v5691 = vadd.f32 %v5690, %v5644
      %v5692 = vadd.f32 %v5691, %v5645
      %v5693 = vadd.f32 %v5692, %v5646
      %v5694 = vadd.f32 %v5693, %v5647
      %v5695 = vadd.f32 %v5694, %v5648
      %v5696 = vadd.f32 %v5695, %v5649
      %v5697 = vadd.f32 %v5696, %v5650
      %v5698 = vadd.f32 %v5697, %v5651
      %v5699 = vadd.f32 %v5698, %v5652
      %v5700 = vadd.f32 %v5699, %v5653
      %v5701 = vadd.f32 %v5700, %v5654
      %v5702 = vadd.f32 %v5701, %v5655
      %v5703 = vadd.f32 %v5702, %v5656
      %v5704 = vadd.f32 %v5703, %v5657
      %v5705 = vadd.f32 %v5704, %v5658
      %v5706 = vadd.f32 %v5705, %v5659
      %v5707 = vadd.f32 %v5706, %v5660
      %v5708 = vadd.f32 %v5707, %v5661
      %v5709 = vadd.f32 %v5708, %v5662
      %v5710 = vadd.f32 %v5709, %v5663
      %v5711 = vadd.f32 %v5710, %v5664
      %v5712 = vadd.f32 %v5711, %v5665
      %v5713 = vadd.f32 %v5712, %v5666
      %v5714 = vadd.f32 %v5713, %v5667
      %v5715 = vrot.slane %v5714, 4
      %v5716 = vadd.f32 %v5714, %v5715
      %v5717 = vrot.slane %v5716, 2
      %v5718 = vadd.f32 %v5716, %v5717
      %v5719 = vrot.slane %v5718, 1
      %v5720 = vadd.f32 %v5718, %v5719
      %v5721 = vmul.f32 %v535, %v5720
      %v5722 = vmul.f32 %v536, %v5720
      %v5723 = vmul.f32 %v537, %v5720
      %v5724 = vmul.f32 %v538, %v5720
      %v5725 = vmul.f32 %v539, %v5720
      %v5726 = vmul.f32 %v540, %v5720
      %v5727 = vmul.f32 %v541, %v5720
      %v5728 = vmul.f32 %v542, %v5720
      %v5729 = vmul.f32 %v543, %v5720
      %v5730 = vmul.f32 %v544, %v5720
      %v5731 = vmul.f32 %v545, %v5720
      %v5732 = vmul.f32 %v546, %v5720
      %v5733 = vmul.f32 %v547, %v5720
      %v5734 = vmul.f32 %v548, %v5720
      %v5735 = vmul.f32 %v549, %v5720
      %v5736 = vmul.f32 %v550, %v5720
      %v5737 = vmul.f32 %v551, %v5720
      %v5738 = vmul.f32 %v552, %v5720
      %v5739 = vmul.f32 %v553, %v5720
      %v5740 = vmul.f32 %v554, %v5720
      %v5741 = vmul.f32 %v555, %v5720
      %v5742 = vmul.f32 %v556, %v5720
      %v5743 = vmul.f32 %v557, %v5720
      %v5744 = vmul.f32 %v558, %v5720
      %v5745 = vmul.f32 %v559, %v5720
      %v5746 = vmul.f32 %v560, %v5720
      %v5747 = vmul.f32 %v561, %v5720
      %v5748 = vmul.f32 %v562, %v5720
      %v5749 = vmul.f32 %v563, %v5720
      %v5750 = vmul.f32 %v564, %v5720
      %v5751 = vmul.f32 %v565, %v5720
      %v5752 = vmul.f32 %v566, %v5720
      %v5753 = vmul.f32 %v567, %v5720
      %v5754 = vmul.f32 %v568, %v5720
      %v5755 = vmul.f32 %v569, %v5720
      %v5756 = vmul.f32 %v570, %v5720
      %v5757 = vmul.f32 %v571, %v5720
      %v5758 = vmul.f32 %v572, %v5720
      %v5759 = vmul.f32 %v573, %v5720
      %v5760 = vmul.f32 %v574, %v5720
      %v5761 = vmul.f32 %v575, %v5720
      %v5762 = vmul.f32 %v576, %v5720
      %v5763 = vmul.f32 %v577, %v5720
      %v5764 = vmul.f32 %v578, %v5720
      %v5765 = vmul.f32 %v579, %v5720
      %v5766 = vmul.f32 %v580, %v5720
      %v5767 = vmul.f32 %v581, %v5720
      %v5768 = vmul.f32 %v582, %v5720
      %5769 = vadd.xlane.f32.xlu0 %v5721
      %v5770 = vpop.xlane.xlu0 %5769
      %5771 = vadd.xlane.f32.xlu0 %v5722
      %v5772 = vpop.xlane.xlu0 %5771
      %5773 = vadd.xlane.f32.xlu0 %v5723
      %v5774 = vpop.xlane.xlu0 %5773
      %5775 = vadd.xlane.f32.xlu0 %v5724
      %v5776 = vpop.xlane.xlu0 %5775
      %5777 = vadd.xlane.f32.xlu0 %v5725
      %v5778 = vpop.xlane.xlu0 %5777
      %5779 = vadd.xlane.f32.xlu0 %v5726
      %v5780 = vpop.xlane.xlu0 %5779
      %5781 = vadd.xlane.f32.xlu0 %v5727
      %v5782 = vpop.xlane.xlu0 %5781
      %5783 = vadd.xlane.f32.xlu0 %v5728
      %v5784 = vpop.xlane.xlu0 %5783
      %5785 = vadd.xlane.f32.xlu0 %v5729
      %v5786 = vpop.xlane.xlu0 %5785
      %5787 = vadd.xlane.f32.xlu0 %v5730
      %v5788 = vpop.xlane.xlu0 %5787
      %5789 = vadd.xlane.f32.xlu0 %v5731
      %v5790 = vpop.xlane.xlu0 %5789
      %5791 = vadd.xlane.f32.xlu0 %v5732
      %v5792 = vpop.xlane.xlu0 %5791
      %5793 = vadd.xlane.f32.xlu0 %v5733
      %v5794 = vpop.xlane.xlu0 %5793
      %5795 = vadd.xlane.f32.xlu0 %v5734
      %v5796 = vpop.xlane.xlu0 %5795
      %5797 = vadd.xlane.f32.xlu0 %v5735
      %v5798 = vpop.xlane.xlu0 %5797
      %5799 = vadd.xlane.f32.xlu0 %v5736
      %v5800 = vpop.xlane.xlu0 %5799
      %5801 = vadd.xlane.f32.xlu0 %v5737
      %v5802 = vpop.xlane.xlu0 %5801
      %5803 = vadd.xlane.f32.xlu0 %v5738
      %v5804 = vpop.xlane.xlu0 %5803
      %5805 = vadd.xlane.f32.xlu0 %v5739
      %v5806 = vpop.xlane.xlu0 %5805
      %5807 = vadd.xlane.f32.xlu0 %v5740
      %v5808 = vpop.xlane.xlu0 %5807
      %5809 = vadd.xlane.f32.xlu0 %v5741
      %v5810 = vpop.xlane.xlu0 %5809
      %5811 = vadd.xlane.f32.xlu0 %v5742
      %v5812 = vpop.xlane.xlu0 %5811
      %5813 = vadd.xlane.f32.xlu0 %v5743
      %v5814 = vpop.xlane.xlu0 %5813
      %5815 = vadd.xlane.f32.xlu0 %v5744
      %v5816 = vpop.xlane.xlu0 %5815
      %5817 = vadd.xlane.f32.xlu0 %v5745
      %v5818 = vpop.xlane.xlu0 %5817
      %5819 = vadd.xlane.f32.xlu0 %v5746
      %v5820 = vpop.xlane.xlu0 %5819
      %5821 = vadd.xlane.f32.xlu0 %v5747
      %v5822 = vpop.xlane.xlu0 %5821
      %5823 = vadd.xlane.f32.xlu0 %v5748
      %v5824 = vpop.xlane.xlu0 %5823
      %5825 = vadd.xlane.f32.xlu0 %v5749
      %v5826 = vpop.xlane.xlu0 %5825
      %5827 = vadd.xlane.f32.xlu0 %v5750
      %v5828 = vpop.xlane.xlu0 %5827
      %5829 = vadd.xlane.f32.xlu0 %v5751
      %v5830 = vpop.xlane.xlu0 %5829
      %5831 = vadd.xlane.f32.xlu0 %v5752
      %v5832 = vpop.xlane.xlu0 %5831
      %5833 = vadd.xlane.f32.xlu0 %v5753
      %v5834 = vpop.xlane.xlu0 %5833
      %5835 = vadd.xlane.f32.xlu0 %v5754
      %v5836 = vpop.xlane.xlu0 %5835
      %5837 = vadd.xlane.f32.xlu0 %v5755
      %v5838 = vpop.xlane.xlu0 %5837
      %5839 = vadd.xlane.f32.xlu0 %v5756
      %v5840 = vpop.xlane.xlu0 %5839
      %5841 = vadd.xlane.f32.xlu0 %v5757
      %v5842 = vpop.xlane.xlu0 %5841
      %5843 = vadd.xlane.f32.xlu0 %v5758
      %v5844 = vpop.xlane.xlu0 %5843
      %5845 = vadd.xlane.f32.xlu0 %v5759
      %v5846 = vpop.xlane.xlu0 %5845
      %5847 = vadd.xlane.f32.xlu0 %v5760
      %v5848 = vpop.xlane.xlu0 %5847
      %5849 = vadd.xlane.f32.xlu0 %v5761
      %v5850 = vpop.xlane.xlu0 %5849
      %5851 = vadd.xlane.f32.xlu0 %v5762
      %v5852 = vpop.xlane.xlu0 %5851
      %5853 = vadd.xlane.f32.xlu0 %v5763
      %v5854 = vpop.xlane.xlu0 %5853
      %5855 = vadd.xlane.f32.xlu0 %v5764
      %v5856 = vpop.xlane.xlu0 %5855
      %5857 = vadd.xlane.f32.xlu0 %v5765
      %v5858 = vpop.xlane.xlu0 %5857
      %5859 = vadd.xlane.f32.xlu0 %v5766
      %v5860 = vpop.xlane.xlu0 %5859
      %5861 = vadd.xlane.f32.xlu0 %v5767
      %v5862 = vpop.xlane.xlu0 %5861
      %5863 = vadd.xlane.f32.xlu0 %v5768
      %v5864 = vpop.xlane.xlu0 %5863
      %v5865 = vmax.f32 %v5770, 1e-06
      %v5866 = vmax.f32 %v5772, 1e-06
      %v5867 = vmax.f32 %v5774, 1e-06
      %v5868 = vmax.f32 %v5776, 1e-06
      %v5869 = vmax.f32 %v5778, 1e-06
      %v5870 = vmax.f32 %v5780, 1e-06
      %v5871 = vmax.f32 %v5782, 1e-06
      %v5872 = vmax.f32 %v5784, 1e-06
      %v5873 = vmax.f32 %v5786, 1e-06
      %v5874 = vmax.f32 %v5788, 1e-06
      %v5875 = vmax.f32 %v5790, 1e-06
      %v5876 = vmax.f32 %v5792, 1e-06
      %v5877 = vmax.f32 %v5794, 1e-06
      %v5878 = vmax.f32 %v5796, 1e-06
      %v5879 = vmax.f32 %v5798, 1e-06
      %v5880 = vmax.f32 %v5800, 1e-06
      %v5881 = vmax.f32 %v5802, 1e-06
      %v5882 = vmax.f32 %v5804, 1e-06
      %v5883 = vmax.f32 %v5806, 1e-06
      %v5884 = vmax.f32 %v5808, 1e-06
      %v5885 = vmax.f32 %v5810, 1e-06
      %v5886 = vmax.f32 %v5812, 1e-06
      %v5887 = vmax.f32 %v5814, 1e-06
      %v5888 = vmax.f32 %v5816, 1e-06
      %v5889 = vmax.f32 %v5818, 1e-06
      %v5890 = vmax.f32 %v5820, 1e-06
      %v5891 = vmax.f32 %v5822, 1e-06
      %v5892 = vmax.f32 %v5824, 1e-06
      %v5893 = vmax.f32 %v5826, 1e-06
      %v5894 = vmax.f32 %v5828, 1e-06
      %v5895 = vmax.f32 %v5830, 1e-06
      %v5896 = vmax.f32 %v5832, 1e-06
      %v5897 = vmax.f32 %v5834, 1e-06
      %v5898 = vmax.f32 %v5836, 1e-06
      %v5899 = vmax.f32 %v5838, 1e-06
      %v5900 = vmax.f32 %v5840, 1e-06
      %v5901 = vmax.f32 %v5842, 1e-06
      %v5902 = vmax.f32 %v5844, 1e-06
      %v5903 = vmax.f32 %v5846, 1e-06
      %v5904 = vmax.f32 %v5848, 1e-06
      %v5905 = vmax.f32 %v5850, 1e-06
      %v5906 = vmax.f32 %v5852, 1e-06
      %v5907 = vmax.f32 %v5854, 1e-06
      %v5908 = vmax.f32 %v5856, 1e-06
      %v5909 = vmax.f32 %v5858, 1e-06
      %v5910 = vmax.f32 %v5860, 1e-06
      %v5911 = vmax.f32 %v5862, 1e-06
      %v5912 = vmax.f32 %v5864, 1e-06
      %v5913 = vrcp.pop %v5865
      %v5914 = vrcp.pop %v5866
      %v5915 = vrcp.pop %v5867
      %v5916 = vrcp.pop %v5868
      %v5917 = vrcp.pop %v5869
      %v5918 = vrcp.pop %v5870
      %v5919 = vrcp.pop %v5871
      %v5920 = vrcp.pop %v5872
      %v5921 = vrcp.pop %v5873
      %v5922 = vrcp.pop %v5874
      %v5923 = vrcp.pop %v5875
      %v5924 = vrcp.pop %v5876
      %v5925 = vrcp.pop %v5877
      %v5926 = vrcp.pop %v5878
      %v5927 = vrcp.pop %v5879
      %v5928 = vrcp.pop %v5880
      %v5929 = vrcp.pop %v5881
      %v5930 = vrcp.pop %v5882
      %v5931 = vrcp.pop %v5883
      %v5932 = vrcp.pop %v5884
      %v5933 = vrcp.pop %v5885
      %v5934 = vrcp.pop %v5886
      %v5935 = vrcp.pop %v5887
      %v5936 = vrcp.pop %v5888
      %v5937 = vrcp.pop %v5889
      %v5938 = vrcp.pop %v5890
      %v5939 = vrcp.pop %v5891
      %v5940 = vrcp.pop %v5892
      %v5941 = vrcp.pop %v5893
      %v5942 = vrcp.pop %v5894
      %v5943 = vrcp.pop %v5895
      %v5944 = vrcp.pop %v5896
      %v5945 = vrcp.pop %v5897
      %v5946 = vrcp.pop %v5898
      %v5947 = vrcp.pop %v5899
      %v5948 = vrcp.pop %v5900
      %v5949 = vrcp.pop %v5901
      %v5950 = vrcp.pop %v5902
      %v5951 = vrcp.pop %v5903
      %v5952 = vrcp.pop %v5904
      %v5953 = vrcp.pop %v5905
      %v5954 = vrcp.pop %v5906
      %v5955 = vrcp.pop %v5907
      %v5956 = vrcp.pop %v5908
      %v5957 = vrcp.pop %v5909
      %v5958 = vrcp.pop %v5910
      %v5959 = vrcp.pop %v5911
      %v5960 = vrcp.pop %v5912
      %v5961 = vmul.f32 %v5332, %v5913
      %v5962 = vmul.f32 %v5333, %v5914
      %v5963 = vmul.f32 %v5334, %v5915
      %v5964 = vmul.f32 %v5335, %v5916
      %v5965 = vmul.f32 %v5336, %v5917
      %v5966 = vmul.f32 %v5337, %v5918
      %v5967 = vmul.f32 %v5338, %v5919
      %v5968 = vmul.f32 %v5339, %v5920
      %v5969 = vmul.f32 %v5340, %v5921
      %v5970 = vmul.f32 %v5341, %v5922
      %v5971 = vmul.f32 %v5342, %v5923
      %v5972 = vmul.f32 %v5343, %v5924
      %v5973 = vmul.f32 %v5344, %v5925
      %v5974 = vmul.f32 %v5345, %v5926
      %v5975 = vmul.f32 %v5346, %v5927
      %v5976 = vmul.f32 %v5347, %v5928
      %v5977 = vmul.f32 %v5348, %v5929
      %v5978 = vmul.f32 %v5349, %v5930
      %v5979 = vmul.f32 %v5350, %v5931
      %v5980 = vmul.f32 %v5351, %v5932
      %v5981 = vmul.f32 %v5352, %v5933
      %v5982 = vmul.f32 %v5353, %v5934
      %v5983 = vmul.f32 %v5354, %v5935
      %v5984 = vmul.f32 %v5355, %v5936
      %v5985 = vmul.f32 %v5356, %v5937
      %v5986 = vmul.f32 %v5357, %v5938
      %v5987 = vmul.f32 %v5358, %v5939
      %v5988 = vmul.f32 %v5359, %v5940
      %v5989 = vmul.f32 %v5360, %v5941
      %v5990 = vmul.f32 %v5361, %v5942
      %v5991 = vmul.f32 %v5362, %v5943
      %v5992 = vmul.f32 %v5363, %v5944
      %v5993 = vmul.f32 %v5364, %v5945
      %v5994 = vmul.f32 %v5365, %v5946
      %v5995 = vmul.f32 %v5366, %v5947
      %v5996 = vmul.f32 %v5367, %v5948
      %v5997 = vmul.f32 %v5368, %v5949
      %v5998 = vmul.f32 %v5369, %v5950
      %v5999 = vmul.f32 %v5370, %v5951
      %v6000 = vmul.f32 %v5371, %v5952
      %v6001 = vmul.f32 %v5372, %v5953
      %v6002 = vmul.f32 %v5373, %v5954
      %v6003 = vmul.f32 %v5374, %v5955
      %v6004 = vmul.f32 %v5375, %v5956
      %v6005 = vmul.f32 %v5376, %v5957
      %v6006 = vmul.f32 %v5377, %v5958
      %v6007 = vmul.f32 %v5378, %v5959
      %v6008 = vmul.f32 %v5379, %v5960
      %v6009 = vld [vmem:[%s3] sm:$0xff]
      %v6010 = vld [vmem:[%s3 + $0x8] sm:$0xff]
      %v6011 = vld [vmem:[%s3 + $0x10] sm:$0xff]
      %v6012 = vld [vmem:[%s3 + $0x18] sm:$0xff]
      %v6013 = vld [vmem:[%s3 + $0x20] sm:$0xff]
      %v6014 = vld [vmem:[%s3 + $0x28] sm:$0xff]
      %v6015 = vld [vmem:[%s3 + $0x30] sm:$0xff]
      %v6016 = vld [vmem:[%s3 + $0x38] sm:$0xff]
      %v6017 = vld [vmem:[%s3 + $0x40] sm:$0xff]
      %v6018 = vld [vmem:[%s3 + $0x48] sm:$0xff]
      %v6019 = vld [vmem:[%s3 + $0x50] sm:$0xff]
      %v6020 = vld [vmem:[%s3 + $0x58] sm:$0xff]
      %6022 = vset.pattern.permute.xlu0 0
      %6023 = vperm.xlu0 %6022, %v5961
      %v6024 = vpop.permute.xlu0 %6023
      %6027 = vset.pattern.permute.xlu0 0
      %6028 = vperm.xlu0 %6027, %v5962
      %v6029 = vpop.permute.xlu0 %6028
      %6032 = vset.pattern.permute.xlu0 0
      %6033 = vperm.xlu0 %6032, %v5963
      %v6034 = vpop.permute.xlu0 %6033
      %6037 = vset.pattern.permute.xlu0 0
      %6038 = vperm.xlu0 %6037, %v5964
      %v6039 = vpop.permute.xlu0 %6038
      %6042 = vset.pattern.permute.xlu0 0
      %6043 = vperm.xlu0 %6042, %v5965
      %v6044 = vpop.permute.xlu0 %6043
      %6047 = vset.pattern.permute.xlu0 0
      %6048 = vperm.xlu0 %6047, %v5966
      %v6049 = vpop.permute.xlu0 %6048
      %6052 = vset.pattern.permute.xlu0 0
      %6053 = vperm.xlu0 %6052, %v5967
      %v6054 = vpop.permute.xlu0 %6053
      %6057 = vset.pattern.permute.xlu0 0
      %6058 = vperm.xlu0 %6057, %v5968
      %v6059 = vpop.permute.xlu0 %6058
      %6062 = vset.pattern.permute.xlu0 0
      %6063 = vperm.xlu0 %6062, %v5969
      %v6064 = vpop.permute.xlu0 %6063
      %6067 = vset.pattern.permute.xlu0 0
      %6068 = vperm.xlu0 %6067, %v5970
      %v6069 = vpop.permute.xlu0 %6068
      %6072 = vset.pattern.permute.xlu0 0
      %6073 = vperm.xlu0 %6072, %v5971
      %v6074 = vpop.permute.xlu0 %6073
      %6077 = vset.pattern.permute.xlu0 0
      %6078 = vperm.xlu0 %6077, %v5972
      %v6079 = vpop.permute.xlu0 %6078
      %6082 = vset.pattern.permute.xlu0 0
      %6083 = vperm.xlu0 %6082, %v5973
      %v6084 = vpop.permute.xlu0 %6083
      %6087 = vset.pattern.permute.xlu0 0
      %6088 = vperm.xlu0 %6087, %v5974
      %v6089 = vpop.permute.xlu0 %6088
      %6092 = vset.pattern.permute.xlu0 0
      %6093 = vperm.xlu0 %6092, %v5975
      %v6094 = vpop.permute.xlu0 %6093
      %6097 = vset.pattern.permute.xlu0 0
      %6098 = vperm.xlu0 %6097, %v5976
      %v6099 = vpop.permute.xlu0 %6098
      %6102 = vset.pattern.permute.xlu0 0
      %6103 = vperm.xlu0 %6102, %v5977
      %v6104 = vpop.permute.xlu0 %6103
      %6107 = vset.pattern.permute.xlu0 0
      %6108 = vperm.xlu0 %6107, %v5978
      %v6109 = vpop.permute.xlu0 %6108
      %6112 = vset.pattern.permute.xlu0 0
      %6113 = vperm.xlu0 %6112, %v5979
      %v6114 = vpop.permute.xlu0 %6113
      %6117 = vset.pattern.permute.xlu0 0
      %6118 = vperm.xlu0 %6117, %v5980
      %v6119 = vpop.permute.xlu0 %6118
      %6122 = vset.pattern.permute.xlu0 0
      %6123 = vperm.xlu0 %6122, %v5981
      %v6124 = vpop.permute.xlu0 %6123
      %6127 = vset.pattern.permute.xlu0 0
      %6128 = vperm.xlu0 %6127, %v5982
      %v6129 = vpop.permute.xlu0 %6128
      %6132 = vset.pattern.permute.xlu0 0
      %6133 = vperm.xlu0 %6132, %v5983
      %v6134 = vpop.permute.xlu0 %6133
      %6137 = vset.pattern.permute.xlu0 0
      %6138 = vperm.xlu0 %6137, %v5984
      %v6139 = vpop.permute.xlu0 %6138
      %6142 = vset.pattern.permute.xlu0 0
      %6143 = vperm.xlu0 %6142, %v5985
      %v6144 = vpop.permute.xlu0 %6143
      %6147 = vset.pattern.permute.xlu0 0
      %6148 = vperm.xlu0 %6147, %v5986
      %v6149 = vpop.permute.xlu0 %6148
      %6152 = vset.pattern.permute.xlu0 0
      %6153 = vperm.xlu0 %6152, %v5987
      %v6154 = vpop.permute.xlu0 %6153
      %6157 = vset.pattern.permute.xlu0 0
      %6158 = vperm.xlu0 %6157, %v5988
      %v6159 = vpop.permute.xlu0 %6158
      %6162 = vset.pattern.permute.xlu0 0
      %6163 = vperm.xlu0 %6162, %v5989
      %v6164 = vpop.permute.xlu0 %6163
      %6167 = vset.pattern.permute.xlu0 0
      %6168 = vperm.xlu0 %6167, %v5990
      %v6169 = vpop.permute.xlu0 %6168
      %6172 = vset.pattern.permute.xlu0 0
      %6173 = vperm.xlu0 %6172, %v5991
      %v6174 = vpop.permute.xlu0 %6173
      %6177 = vset.pattern.permute.xlu0 0
      %6178 = vperm.xlu0 %6177, %v5992
      %v6179 = vpop.permute.xlu0 %6178
      %6182 = vset.pattern.permute.xlu0 0
      %6183 = vperm.xlu0 %6182, %v5993
      %v6184 = vpop.permute.xlu0 %6183
      %6187 = vset.pattern.permute.xlu0 0
      %6188 = vperm.xlu0 %6187, %v5994
      %v6189 = vpop.permute.xlu0 %6188
      %6192 = vset.pattern.permute.xlu0 0
      %6193 = vperm.xlu0 %6192, %v5995
      %v6194 = vpop.permute.xlu0 %6193
      %6197 = vset.pattern.permute.xlu0 0
      %6198 = vperm.xlu0 %6197, %v5996
      %v6199 = vpop.permute.xlu0 %6198
      %6202 = vset.pattern.permute.xlu0 0
      %6203 = vperm.xlu0 %6202, %v5997
      %v6204 = vpop.permute.xlu0 %6203
      %6207 = vset.pattern.permute.xlu0 0
      %6208 = vperm.xlu0 %6207, %v5998
      %v6209 = vpop.permute.xlu0 %6208
      %6212 = vset.pattern.permute.xlu0 0
      %6213 = vperm.xlu0 %6212, %v5999
      %v6214 = vpop.permute.xlu0 %6213
      %6217 = vset.pattern.permute.xlu0 0
      %6218 = vperm.xlu0 %6217, %v6000
      %v6219 = vpop.permute.xlu0 %6218
      %6222 = vset.pattern.permute.xlu0 0
      %6223 = vperm.xlu0 %6222, %v6001
      %v6224 = vpop.permute.xlu0 %6223
      %6227 = vset.pattern.permute.xlu0 0
      %6228 = vperm.xlu0 %6227, %v6002
      %v6229 = vpop.permute.xlu0 %6228
      %6232 = vset.pattern.permute.xlu0 0
      %6233 = vperm.xlu0 %6232, %v6003
      %v6234 = vpop.permute.xlu0 %6233
      %6237 = vset.pattern.permute.xlu0 0
      %6238 = vperm.xlu0 %6237, %v6004
      %v6239 = vpop.permute.xlu0 %6238
      %6242 = vset.pattern.permute.xlu0 0
      %6243 = vperm.xlu0 %6242, %v6005
      %v6244 = vpop.permute.xlu0 %6243
      %6247 = vset.pattern.permute.xlu0 0
      %6248 = vperm.xlu0 %6247, %v6006
      %v6249 = vpop.permute.xlu0 %6248
      %6252 = vset.pattern.permute.xlu0 0
      %6253 = vperm.xlu0 %6252, %v6007
      %v6254 = vpop.permute.xlu0 %6253
      %6257 = vset.pattern.permute.xlu0 0
      %6258 = vperm.xlu0 %6257, %v6008
      %v6259 = vpop.permute.xlu0 %6258
      %v6261 = vmul.f32 %v3563, %v6024
      %v6262 = vmul.f32 %v3564, %v6029
      %v6263 = vmul.f32 %v3565, %v6034
      %v6264 = vmul.f32 %v3566, %v6039
      %v6265 = vmul.f32 %v3567, %v6044
      %v6266 = vmul.f32 %v3568, %v6049
      %v6267 = vmul.f32 %v3569, %v6054
      %v6268 = vmul.f32 %v3570, %v6059
      %v6269 = vmul.f32 %v3571, %v6064
      %v6270 = vmul.f32 %v3572, %v6069
      %v6271 = vmul.f32 %v3573, %v6074
      %v6272 = vmul.f32 %v3574, %v6079
      %v6273 = vmul.f32 %v3575, %v6084
      %v6274 = vmul.f32 %v3576, %v6089
      %v6275 = vmul.f32 %v3577, %v6094
      %v6276 = vmul.f32 %v3578, %v6099
      %v6277 = vmul.f32 %v3579, %v6104
      %v6278 = vmul.f32 %v3580, %v6109
      %v6279 = vmul.f32 %v3581, %v6114
      %v6280 = vmul.f32 %v3582, %v6119
      %v6281 = vmul.f32 %v3583, %v6124
      %v6282 = vmul.f32 %v3584, %v6129
      %v6283 = vmul.f32 %v3585, %v6134
      %v6284 = vmul.f32 %v3586, %v6139
      %v6285 = vmul.f32 %v3587, %v6144
      %v6286 = vmul.f32 %v3588, %v6149
      %v6287 = vmul.f32 %v3589, %v6154
      %v6288 = vmul.f32 %v3590, %v6159
      %v6289 = vmul.f32 %v3591, %v6164
      %v6290 = vmul.f32 %v3592, %v6169
      %v6291 = vmul.f32 %v3593, %v6174
      %v6292 = vmul.f32 %v3594, %v6179
      %v6293 = vmul.f32 %v3595, %v6184
      %v6294 = vmul.f32 %v3596, %v6189
      %v6295 = vmul.f32 %v3597, %v6194
      %v6296 = vmul.f32 %v3598, %v6199
      %v6297 = vmul.f32 %v3599, %v6204
      %v6298 = vmul.f32 %v3600, %v6209
      %v6299 = vmul.f32 %v3601, %v6214
      %v6300 = vmul.f32 %v3602, %v6219
      %v6301 = vmul.f32 %v3603, %v6224
      %v6302 = vmul.f32 %v3604, %v6229
      %v6303 = vmul.f32 %v3605, %v6234
      %v6304 = vmul.f32 %v3606, %v6239
      %v6305 = vmul.f32 %v3607, %v6244
      %v6306 = vmul.f32 %v3608, %v6249
      %v6307 = vmul.f32 %v3609, %v6254
      %v6308 = vmul.f32 %v3610, %v6259
      %6357 = vrot.lane.b32.xlu0 %v6261, 64
      %v6358 = vpop.permute.xlu0 %6357
      %6359 = vrot.lane.b32.xlu0 %v6262, 64
      %v6360 = vpop.permute.xlu0 %6359
      %6361 = vrot.lane.b32.xlu0 %v6263, 64
      %v6362 = vpop.permute.xlu0 %6361
      %6363 = vrot.lane.b32.xlu0 %v6264, 64
      %v6364 = vpop.permute.xlu0 %6363
      %6365 = vrot.lane.b32.xlu0 %v6265, 64
      %v6366 = vpop.permute.xlu0 %6365
      %6367 = vrot.lane.b32.xlu0 %v6266, 64
      %v6368 = vpop.permute.xlu0 %6367
      %6369 = vrot.lane.b32.xlu0 %v6267, 64
      %v6370 = vpop.permute.xlu0 %6369
      %6371 = vrot.lane.b32.xlu0 %v6268, 64
      %v6372 = vpop.permute.xlu0 %6371
      %6373 = vrot.lane.b32.xlu0 %v6269, 64
      %v6374 = vpop.permute.xlu0 %6373
      %6375 = vrot.lane.b32.xlu0 %v6270, 64
      %v6376 = vpop.permute.xlu0 %6375
      %6377 = vrot.lane.b32.xlu0 %v6271, 64
      %v6378 = vpop.permute.xlu0 %6377
      %6379 = vrot.lane.b32.xlu0 %v6272, 64
      %v6380 = vpop.permute.xlu0 %6379
      %6381 = vrot.lane.b32.xlu0 %v6273, 64
      %v6382 = vpop.permute.xlu0 %6381
      %6383 = vrot.lane.b32.xlu0 %v6274, 64
      %v6384 = vpop.permute.xlu0 %6383
      %6385 = vrot.lane.b32.xlu0 %v6275, 64
      %v6386 = vpop.permute.xlu0 %6385
      %6387 = vrot.lane.b32.xlu0 %v6276, 64
      %v6388 = vpop.permute.xlu0 %6387
      %6389 = vrot.lane.b32.xlu0 %v6277, 64
      %v6390 = vpop.permute.xlu0 %6389
      %6391 = vrot.lane.b32.xlu0 %v6278, 64
      %v6392 = vpop.permute.xlu0 %6391
      %6393 = vrot.lane.b32.xlu0 %v6279, 64
      %v6394 = vpop.permute.xlu0 %6393
      %6395 = vrot.lane.b32.xlu0 %v6280, 64
      %v6396 = vpop.permute.xlu0 %6395
      %6397 = vrot.lane.b32.xlu0 %v6281, 64
      %v6398 = vpop.permute.xlu0 %6397
      %6399 = vrot.lane.b32.xlu0 %v6282, 64
      %v6400 = vpop.permute.xlu0 %6399
      %6401 = vrot.lane.b32.xlu0 %v6283, 64
      %v6402 = vpop.permute.xlu0 %6401
      %6403 = vrot.lane.b32.xlu0 %v6284, 64
      %v6404 = vpop.permute.xlu0 %6403
      %6405 = vrot.lane.b32.xlu0 %v6285, 64
      %v6406 = vpop.permute.xlu0 %6405
      %6407 = vrot.lane.b32.xlu0 %v6286, 64
      %v6408 = vpop.permute.xlu0 %6407
      %6409 = vrot.lane.b32.xlu0 %v6287, 64
      %v6410 = vpop.permute.xlu0 %6409
      %6411 = vrot.lane.b32.xlu0 %v6288, 64
      %v6412 = vpop.permute.xlu0 %6411
      %6413 = vrot.lane.b32.xlu0 %v6289, 64
      %v6414 = vpop.permute.xlu0 %6413
      %6415 = vrot.lane.b32.xlu0 %v6290, 64
      %v6416 = vpop.permute.xlu0 %6415
      %6417 = vrot.lane.b32.xlu0 %v6291, 64
      %v6418 = vpop.permute.xlu0 %6417
      %6419 = vrot.lane.b32.xlu0 %v6292, 64
      %v6420 = vpop.permute.xlu0 %6419
      %6421 = vrot.lane.b32.xlu0 %v6293, 64
      %v6422 = vpop.permute.xlu0 %6421
      %6423 = vrot.lane.b32.xlu0 %v6294, 64
      %v6424 = vpop.permute.xlu0 %6423
      %6425 = vrot.lane.b32.xlu0 %v6295, 64
      %v6426 = vpop.permute.xlu0 %6425
      %6427 = vrot.lane.b32.xlu0 %v6296, 64
      %v6428 = vpop.permute.xlu0 %6427
      %6429 = vrot.lane.b32.xlu0 %v6297, 64
      %v6430 = vpop.permute.xlu0 %6429
      %6431 = vrot.lane.b32.xlu0 %v6298, 64
      %v6432 = vpop.permute.xlu0 %6431
      %6433 = vrot.lane.b32.xlu0 %v6299, 64
      %v6434 = vpop.permute.xlu0 %6433
      %6435 = vrot.lane.b32.xlu0 %v6300, 64
      %v6436 = vpop.permute.xlu0 %6435
      %6437 = vrot.lane.b32.xlu0 %v6301, 64
      %v6438 = vpop.permute.xlu0 %6437
      %6439 = vrot.lane.b32.xlu0 %v6302, 64
      %v6440 = vpop.permute.xlu0 %6439
      %6441 = vrot.lane.b32.xlu0 %v6303, 64
      %v6442 = vpop.permute.xlu0 %6441
      %6443 = vrot.lane.b32.xlu0 %v6304, 64
      %v6444 = vpop.permute.xlu0 %6443
      %6445 = vrot.lane.b32.xlu0 %v6305, 64
      %v6446 = vpop.permute.xlu0 %6445
      %6447 = vrot.lane.b32.xlu0 %v6306, 64
      %v6448 = vpop.permute.xlu0 %6447
      %6449 = vrot.lane.b32.xlu0 %v6307, 64
      %v6450 = vpop.permute.xlu0 %6449
      %6451 = vrot.lane.b32.xlu0 %v6308, 64
      %v6452 = vpop.permute.xlu0 %6451
      %6501 = vmatprep.subr.mxu0 0.0
      %6502 = vmatpush1.msra.mxu0 %v6358
      %6503 = vmatprep.subr.mxu0 0.0
      %6504 = vmatpush1.msra.mxu0 %v6360
      %6505 = vmatprep.subr.mxu0 0.0
      %6506 = vmatpush1.msra.mxu0 %v6362
      %6507 = vmatprep.subr.mxu0 0.0
      %6508 = vmatpush1.msra.mxu0 %v6364
      %6509 = vmatprep.subr.mxu0 0.0
      %6510 = vmatpush1.msra.mxu0 %v6366
      %6511 = vmatprep.subr.mxu0 0.0
      %6512 = vmatpush1.msra.mxu0 %v6368
      %6513 = vmatprep.subr.mxu0 0.0
      %6514 = vmatpush1.msra.mxu0 %v6370
      %6515 = vmatprep.subr.mxu0 0.0
      %6516 = vmatpush1.msra.mxu0 %v6372
      %6517 = vmatprep.subr.mxu0 0.0
      %6518 = vmatpush1.msra.mxu0 %v6374
      %6519 = vmatprep.subr.mxu0 0.0
      %6520 = vmatpush1.msra.mxu0 %v6376
      %6521 = vmatprep.subr.mxu0 0.0
      %6522 = vmatpush1.msra.mxu0 %v6378
      %6523 = vmatprep.subr.mxu0 0.0
      %6524 = vmatpush1.msra.mxu0 %v6380
      %6525 = vmatprep.subr.mxu0 0.0
      %6526 = vmatpush1.msra.mxu0 %v6382
      %6527 = vmatprep.subr.mxu0 0.0
      %6528 = vmatpush1.msra.mxu0 %v6384
      %6529 = vmatprep.subr.mxu0 0.0
      %6530 = vmatpush1.msra.mxu0 %v6386
      %6531 = vmatprep.subr.mxu0 0.0
      %6532 = vmatpush1.msra.mxu0 %v6388
      %6533 = vmatprep.subr.mxu0 0.0
      %6534 = vmatpush1.msra.mxu0 %v6390
      %6535 = vmatprep.subr.mxu0 0.0
      %6536 = vmatpush1.msra.mxu0 %v6392
      %6537 = vmatprep.subr.mxu0 0.0
      %6538 = vmatpush1.msra.mxu0 %v6394
      %6539 = vmatprep.subr.mxu0 0.0
      %6540 = vmatpush1.msra.mxu0 %v6396
      %6541 = vmatprep.subr.mxu0 0.0
      %6542 = vmatpush1.msra.mxu0 %v6398
      %6543 = vmatprep.subr.mxu0 0.0
      %6544 = vmatpush1.msra.mxu0 %v6400
      %6545 = vmatprep.subr.mxu0 0.0
      %6546 = vmatpush1.msra.mxu0 %v6402
      %6547 = vmatprep.subr.mxu0 0.0
      %6548 = vmatpush1.msra.mxu0 %v6404
      %6549 = vmatprep.subr.mxu0 0.0
      %6550 = vmatpush1.msra.mxu0 %v6406
      %6551 = vmatprep.subr.mxu0 0.0
      %6552 = vmatpush1.msra.mxu0 %v6408
      %6553 = vmatprep.subr.mxu0 0.0
      %6554 = vmatpush1.msra.mxu0 %v6410
      %6555 = vmatprep.subr.mxu0 0.0
      %6556 = vmatpush1.msra.mxu0 %v6412
      %6557 = vmatprep.subr.mxu0 0.0
      %6558 = vmatpush1.msra.mxu0 %v6414
      %6559 = vmatprep.subr.mxu0 0.0
      %6560 = vmatpush1.msra.mxu0 %v6416
      %6561 = vmatprep.subr.mxu0 0.0
      %6562 = vmatpush1.msra.mxu0 %v6418
      %6563 = vmatprep.subr.mxu0 0.0
      %6564 = vmatpush1.msra.mxu0 %v6420
      %6565 = vmatprep.mubr.f32.mxu0 %v6010
      %6566 = vmatmul.mubr.f32.gmra.mrb[0].mxu0 %v6009
      %v6567 = vpop.f32.mrb[0].mxu0
      %v6568 = vadd.f32 0.0, %v6567
      %v6569 = vpop.f32.mrb[0].mxu0
      %6570 = vmatprep.mubr.f32.mxu0 %v6013
      %6571 = vmatmul.mubr.f32.gmra.mrb[0].mxu0 %v6012
      %v6572 = vpop.f32.mrb[0].mxu0
      %v6573 = vadd.f32 0.0, %v6572
      %v6574 = vpop.f32.mrb[0].mxu0
      %6575 = vmatprep.mubr.f32.mxu0 %v6016
      %6576 = vmatmul.mubr.f32.gmra.mrb[0].mxu0 %v6015
      %v6577 = vpop.f32.mrb[0].mxu0
      %v6578 = vadd.f32 0.0, %v6577
      %v6579 = vpop.f32.mrb[0].mxu0
      %6580 = vmatprep.mubr.f32.mxu0 %v6019
      %6581 = vmatmul.mubr.f32.gmra.mrb[0].mxu0 %v6018
      %v6582 = vpop.f32.mrb[0].mxu0
      %v6583 = vadd.f32 0.0, %v6582
      %v6584 = vpop.f32.mrb[0].mxu0
      %6585 = vdwg.mxu0
      %6586 = vmatprep.subr.mxu0 0.0
      %6587 = vmatpush1.msra.mxu0 %v6422
      %6588 = vmatprep.subr.mxu0 0.0
      %6589 = vmatpush1.msra.mxu0 %v6424
      %6590 = vmatprep.subr.mxu0 0.0
      %6591 = vmatpush1.msra.mxu0 %v6426
      %6592 = vmatprep.subr.mxu0 0.0
      %6593 = vmatpush1.msra.mxu0 %v6428
      %6594 = vmatprep.subr.mxu0 0.0
      %6595 = vmatpush1.msra.mxu0 %v6430
      %6596 = vmatprep.subr.mxu0 0.0
      %6597 = vmatpush1.msra.mxu0 %v6432
      %6598 = vmatprep.subr.mxu0 0.0
      %6599 = vmatpush1.msra.mxu0 %v6434
      %6600 = vmatprep.subr.mxu0 0.0
      %6601 = vmatpush1.msra.mxu0 %v6436
      %6602 = vmatprep.subr.mxu0 0.0
      %6603 = vmatpush1.msra.mxu0 %v6438
      %6604 = vmatprep.subr.mxu0 0.0
      %6605 = vmatpush1.msra.mxu0 %v6440
      %6606 = vmatprep.subr.mxu0 0.0
      %6607 = vmatpush1.msra.mxu0 %v6442
      %6608 = vmatprep.subr.mxu0 0.0
      %6609 = vmatpush1.msra.mxu0 %v6444
      %6610 = vmatprep.subr.mxu0 0.0
      %6611 = vmatpush1.msra.mxu0 %v6446
      %6612 = vmatprep.subr.mxu0 0.0
      %6613 = vmatpush1.msra.mxu0 %v6448
      %6614 = vmatprep.subr.mxu0 0.0
      %6615 = vmatpush1.msra.mxu0 %v6450
      %6616 = vmatprep.subr.mxu0 0.0
      %6617 = vmatpush1.msra.mxu0 %v6452
      %6618 = vmatprep.subr.mxu0 0.0
      %6619 = vmatpush1.msra.mxu0 0.0
      %6620 = vmatprep.subr.mxu0 0.0
      %6621 = vmatpush1.msra.mxu0 0.0
      %6622 = vmatprep.subr.mxu0 0.0
      %6623 = vmatpush1.msra.mxu0 0.0
      %6624 = vmatprep.subr.mxu0 0.0
      %6625 = vmatpush1.msra.mxu0 0.0
      %6626 = vmatprep.subr.mxu0 0.0
      %6627 = vmatpush1.msra.mxu0 0.0
      %6628 = vmatprep.subr.mxu0 0.0
      %6629 = vmatpush1.msra.mxu0 0.0
      %6630 = vmatprep.subr.mxu0 0.0
      %6631 = vmatpush1.msra.mxu0 0.0
      %6632 = vmatprep.subr.mxu0 0.0
      %6633 = vmatpush1.msra.mxu0 0.0
      %6634 = vmatprep.subr.mxu0 0.0
      %6635 = vmatpush1.msra.mxu0 0.0
      %6636 = vmatprep.subr.mxu0 0.0
      %6637 = vmatpush1.msra.mxu0 0.0
      %6638 = vmatprep.subr.mxu0 0.0
      %6639 = vmatpush1.msra.mxu0 0.0
      %6640 = vmatprep.subr.mxu0 0.0
      %6641 = vmatpush1.msra.mxu0 0.0
      %6642 = vmatprep.subr.mxu0 0.0
      %6643 = vmatpush1.msra.mxu0 0.0
      %6644 = vmatprep.subr.mxu0 0.0
      %6645 = vmatpush1.msra.mxu0 0.0
      %6646 = vmatprep.subr.mxu0 0.0
      %6647 = vmatpush1.msra.mxu0 0.0
      %6648 = vmatprep.subr.mxu0 0.0
      %6649 = vmatpush1.msra.mxu0 0.0
      %6650 = vmatprep.mubr.f32.mxu0 0.0
      %6651 = vmatmul.mubr.f32.gmra.mrb[0].mxu0 %v6011
      %v6652 = vpop.f32.mrb[0].mxu0
      %v6653 = vadd.f32 %v6568, %v6652
      %v6654 = vpop.f32.mrb[0].mxu0
      %6655 = vmatprep.mubr.f32.mxu0 0.0
      %6656 = vmatmul.mubr.f32.gmra.mrb[0].mxu0 %v6014
      %v6657 = vpop.f32.mrb[0].mxu0
      %v6658 = vadd.f32 %v6573, %v6657
      %v6659 = vpop.f32.mrb[0].mxu0
      %6660 = vmatprep.mubr.f32.mxu0 0.0
      %6661 = vmatmul.mubr.f32.gmra.mrb[0].mxu0 %v6017
      %v6662 = vpop.f32.mrb[0].mxu0
      %v6663 = vadd.f32 %v6578, %v6662
      %v6664 = vpop.f32.mrb[0].mxu0
      %6665 = vmatprep.mubr.f32.mxu0 0.0
      %6666 = vmatmul.mubr.f32.gmra.mrb[0].mxu0 %v6020
      %v6667 = vpop.f32.mrb[0].mxu0
      %v6668 = vadd.f32 %v6583, %v6667
      %v6669 = vpop.f32.mrb[0].mxu0
      %6670 = vdwg.mxu0
      %v6671 = vld [vmem:[%s10] sm:$0xff]
      %v6672 = vld [vmem:[%s10 + $0x8] sm:$0xff]
      %v6673 = vld [vmem:[%s10 + $0x10] sm:$0xff]
      %v6674 = vld [vmem:[%s10 + $0x18] sm:$0xff]
      %v6675 = vld [vmem:[%s11] sm:$0x1]
      %v6677 = vlaneseq
      %v6678 = vshrl.u32 %v6677, 7
      %v6679 = vsub.s32 0, %v6678
      %v6680 = vrot.slane %v6675, %v6679
      %v6683 = vsel %vm877, %v6653, 0
      %v6686 = vsel %vm877, %v6658, 0
      %v6689 = vsel %vm877, %v6663, 0
      %v6692 = vsel %vm877, %v6668, 0
      %6694 = vmatprep.subr.mxu0 0.0
      %6695 = vmatpush1.msra.mxu0 %v6671
      %6696 = vmatprep.subr.mxu0 0.0
      %6697 = vmatpush1.msra.mxu0 %v6672
      %6698 = vmatprep.subr.mxu0 0.0
      %6699 = vmatpush1.msra.mxu0 %v6673
      %6700 = vmatprep.subr.mxu0 0.0
      %6701 = vmatpush1.msra.mxu0 %v6674
      %6702 = vmatprep.subr.mxu0 0.0
      %6703 = vmatpush1.msra.mxu0 0.0
      %6704 = vmatprep.subr.mxu0 0.0
      %6705 = vmatpush1.msra.mxu0 0.0
      %6706 = vmatprep.subr.mxu0 0.0
      %6707 = vmatpush1.msra.mxu0 0.0
      %6708 = vmatprep.subr.mxu0 0.0
      %6709 = vmatpush1.msra.mxu0 0.0
      %6710 = vmatprep.subr.mxu0 0.0
      %6711 = vmatpush1.msra.mxu0 0.0
      %6712 = vmatprep.subr.mxu0 0.0
      %6713 = vmatpush1.msra.mxu0 0.0
      %6714 = vmatprep.subr.mxu0 0.0
      %6715 = vmatpush1.msra.mxu0 0.0
      %6716 = vmatprep.subr.mxu0 0.0
      %6717 = vmatpush1.msra.mxu0 0.0
      %6718 = vmatprep.subr.mxu0 0.0
      %6719 = vmatpush1.msra.mxu0 0.0
      %6720 = vmatprep.subr.mxu0 0.0
      %6721 = vmatpush1.msra.mxu0 0.0
      %6722 = vmatprep.subr.mxu0 0.0
      %6723 = vmatpush1.msra.mxu0 0.0
      %6724 = vmatprep.subr.mxu0 0.0
      %6725 = vmatpush1.msra.mxu0 0.0
      %6726 = vmatprep.subr.mxu0 0.0
      %6727 = vmatpush1.msra.mxu0 0.0
      %6728 = vmatprep.subr.mxu0 0.0
      %6729 = vmatpush1.msra.mxu0 0.0
      %6730 = vmatprep.subr.mxu0 0.0
      %6731 = vmatpush1.msra.mxu0 0.0
      %6732 = vmatprep.subr.mxu0 0.0
      %6733 = vmatpush1.msra.mxu0 0.0
      %6734 = vmatprep.subr.mxu0 0.0
      %6735 = vmatpush1.msra.mxu0 0.0
      %6736 = vmatprep.subr.mxu0 0.0
      %6737 = vmatpush1.msra.mxu0 0.0
      %6738 = vmatprep.subr.mxu0 0.0
      %6739 = vmatpush1.msra.mxu0 0.0
      %6740 = vmatprep.subr.mxu0 0.0
      %6741 = vmatpush1.msra.mxu0 0.0
      %6742 = vmatprep.subr.mxu0 0.0
      %6743 = vmatpush1.msra.mxu0 0.0
      %6744 = vmatprep.subr.mxu0 0.0
      %6745 = vmatpush1.msra.mxu0 0.0
      %6746 = vmatprep.subr.mxu0 0.0
      %6747 = vmatpush1.msra.mxu0 0.0
      %6748 = vmatprep.subr.mxu0 0.0
      %6749 = vmatpush1.msra.mxu0 0.0
      %6750 = vmatprep.subr.mxu0 0.0
      %6751 = vmatpush1.msra.mxu0 0.0
      %6752 = vmatprep.subr.mxu0 0.0
      %6753 = vmatpush1.msra.mxu0 0.0
      %6754 = vmatprep.subr.mxu0 0.0
      %6755 = vmatpush1.msra.mxu0 0.0
      %6756 = vmatprep.subr.mxu0 0.0
      %6757 = vmatpush1.msra.mxu0 0.0
      %6758 = vmatprep.mubr.f32.mxu0 0.0
      %6759 = vmatmul.mubr.f32.gmra.mrb[0].mxu0 %v6683
      %v6760 = vpop.f32.mrb[0].mxu0
      %v6761 = vadd.f32 %v6680, %v6760
      %v6762 = vpop.f32.mrb[0].mxu0
      %6763 = vmatprep.mubr.f32.mxu0 0.0
      %6764 = vmatmul.mubr.f32.gmra.mrb[0].mxu0 %v6686
      %v6765 = vpop.f32.mrb[0].mxu0
      %v6766 = vadd.f32 %v6680, %v6765
      %v6767 = vpop.f32.mrb[0].mxu0
      %6768 = vmatprep.mubr.f32.mxu0 0.0
      %6769 = vmatmul.mubr.f32.gmra.mrb[0].mxu0 %v6689
      %v6770 = vpop.f32.mrb[0].mxu0
      %v6771 = vadd.f32 %v6680, %v6770
      %v6772 = vpop.f32.mrb[0].mxu0
      %6773 = vmatprep.mubr.f32.mxu0 0.0
      %6774 = vmatmul.mubr.f32.gmra.mrb[0].mxu0 %v6692
      %v6775 = vpop.f32.mrb[0].mxu0
      %v6776 = vadd.f32 %v6680, %v6775
      %v6777 = vpop.f32.mrb[0].mxu0
      %6778 = vdwg.mxu0
      %vm6779 = vcmask 64512
      %6780 = vst.msk [vmem:[%s437] sm:$0xff] %vm6779, %v6761
      %6781 = vst.msk [vmem:[%s437 + $0x8] sm:$0xff] %vm6779, %v6766
      %6782 = vst.msk [vmem:[%s437 + $0x10] sm:$0xff] %vm6779, %v6771
      %6783 = vst.msk [vmem:[%s437 + $0x18] sm:$0xff] %vm6779, %v6776
      %s6784 = smul.u32 4, %s23
      %p6785 = scmp.lt.s32.totalorder %s6784, 15
      %s6786 = scalar_select %p6785, %s6784, 15
      %s6787 = smul.addr %s6786, 8
      %s6788 = scalar_lea.vmem %s12, %s6787
      // Predicated region
      $region69: #{forward_pallas.1} parent=67 // pred_check
        %p6789 = pneg %p303
      $region70: #{forward_pallas.1} parent=67 // pred_check_branch
        %6791 = sbr.rel (%p6789) target = $region72
      $region71: #{forward_pallas.1} parent=67 // pred_region
        %s6792 = smul.u32 4, %s23
      $region72: #{forward_pallas.1} parent=67 // pred_fallthru
        _
    $region68: #{forward_pallas.1} parent=5 // pred_fallthru
      _
    %p6793 = scmp.le.s32.totalorder 2, %s18
    // Predicated region
    $region73: #{forward_pallas.1} parent=5 // pred_check
      %p6794 = pneg %p6793
    $region74: #{forward_pallas.1} parent=5 // pred_check_branch
      %6796 = sbr.rel (%p6794) target = $region76
    $region75: #{forward_pallas.1} parent=5 // pred_region
      %s6797 = ssub.s32 %s18, 2
      // Predicated region
      $region77: #{forward_pallas.1} parent=75 // pred_check
        %p6798 = pneg %p309
      $region78: #{forward_pallas.1} parent=75 // pred_check_branch
        %6800 = sbr.rel (%p6798) target = $region80
      $region79: #{forward_pallas.1} parent=75 // pred_region
        %s6801 = smul.u32 4, %s24
        %p6802 = scmp.lt.s32.totalorder %s6801, 15
        %s6803 = scalar_select %p6802, %s6801, 15
        %s6804 = smul.addr %s6803, 8
        %s6805 = scalar_lea.vmem %s12, %s6804
      $region80: #{forward_pallas.1} parent=75 // pred_fallthru
        _
    $region76: #{forward_pallas.1} parent=5 // pred_fallthru
      _
  $region6: #{forward_pallas.1} parent=0 // loop_footer
    %s22 = sadd.s32 1, %s18
  $region7: #{forward_pallas.1} parent=0 // loop_footer_branch
    %17 = sbr.rel target = $region3
  $region8: #{forward_pallas.1} parent=0 // loop_exit
    _

</llo_original>
